<compile_context>
chip_gen: v7x
topology: tpu7x:2x2x1
jax: 0.10.0
libtpu: 0.0.40
codegen_flags: <defaults>
</compile_context>

<pallas_src>
import functools

import numpy as np
import jax
import jax.numpy as jnp
from jax.experimental import pallas as pl
from jax.experimental.pallas import tpu as pltpu


# (kernel, stride, padding) for the 5 ConvTranspose2d layers in Generator.main
_LAYER_CFG = [(4, 1, 0), (4, 2, 1), (4, 2, 1), (2, 2, 1), (1, 1, 1)]
_BN_EPS = 1e-5


def _channels(noise_size, feature_size):
    nf = feature_size
    return [noise_size, nf * 8, nf * 4, nf * 2, nf * 1, 1]


def _spatial_chain():
    sizes = [1]
    for (k, s, p) in _LAYER_CFG:
        h = sizes[-1]
        sizes.append((h - 1) * s - 2 * p + k)
    return sizes  # [1, 4, 8, 16, 30, 28]


_SIZES = _spatial_chain()
_HW = [s * s for s in _SIZES]                 # [1, 16, 64, 256, 900, 784]
_TAPS = [k * k for (k, _, _) in _LAYER_CFG]   # [16, 16, 16, 4, 1]
_HW3_PAD = 1024                               # layer-3 output cols padded 900 -> 1024


# ------------------------- static scatter tables ----------------------------

def _build_scatter(k, s, p, hin, hout, out_col_map, pad_cols):
    """Per-sample (batch-deduped) 0/1 table.

    Row index = t*HWin + (i*hin + j) for tap t=(ky,kx) row-major; column index =
    out_col_map[y, x] where (y, x) = (i*s - p + ky, j*s - p + kx).  `pad_cols`
    all-zero columns are appended so the result width hits a vreg-friendly size.
    """
    hwin = hin * hin
    ncols = int(out_col_map.max()) + 1 + pad_cols
    S = np.zeros((k * k * hwin, ncols), np.int8)
    for ky in range(k):
        for kx in range(k):
            t = ky * k + kx
            for i in range(hin):
                y = i * s - p + ky
                if not (0 <= y < hout):
                    continue
                for j in range(hin):
                    x = j * s - p + kx
                    if not (0 <= x < hout):
                        continue
                    S[t * hwin + i * hin + j, out_col_map[y, x]] = 1
    return S


def build_generator_tables():
    """Static scatter tables for layers 1..3 (layer 0's table is the identity and
    is elided).  Batch-independent (the N^2 block-diagonal was deduped out) and
    stored int8 in HBM (widened to bf16 inside the kernel)."""
    tables = []
    for li in range(1, 4):
        k, s, p = _LAYER_CFG[li]
        hin, hout = _SIZES[li], _SIZES[li + 1]
        if li < 3:
            col_map = np.arange(hout * hout).reshape(hout, hout)
            pad = 0
        else:
            # Layer-3 output (30x30): interior 28x28 columns FIRST so that the
            # layer-4 crop (k=1, p=1) is a per-sample prefix lane slice; pad the
            # column count 900 -> 1024 so the largest activation is full vregs.
            inner = _SIZES[5]
            col_map = np.full((hout, hout), -1, np.int64)
            col_map[1:1 + inner, 1:1 + inner] = np.arange(inner * inner).reshape(inner, inner)
            border = col_map < 0
            col_map[border] = inner * inner + np.arange(int(border.sum()))
            pad = _HW3_PAD - hout * hout
        tables.append(jnp.asarray(
            _build_scatter(k, s, p, hin, hout, col_map, pad), dtype=jnp.int8))
    return tables   # [S1 (256,64), S2 (1024,256), S3 (1024,1024)]


# ------------------------------ parameters ----------------------------------

def init_generator_params(noise_size, feature_size, key):
    chans = _channels(noise_size, feature_size)
    params = {}
    keys = jax.random.split(key, len(_LAYER_CFG))
    for li, (k, _, _) in enumerate(_LAYER_CFG):
        cin, cout = chans[li], chans[li + 1]
        params[f"w{li}"] = 0.02 * jax.random.normal(
            keys[li], (cin, cout, k, k), jnp.float32)   # ConvTranspose2d layout
        if li < 4:                                      # layers followed by BN
            params[f"g{li}"] = jnp.ones((cout,), jnp.float32)
            params[f"b{li}"] = jnp.zeros((cout,), jnp.float32)
    return params


def prepare_generator_operands(params):
    """Hoisted out of the per-forward path: build all kernel operand matrices."""
    ops = {}
    for li in range(4):
        w = params[f"w{li}"]                            # (Cin, Cout, K, K)
        cin, cout, k, _ = w.shape
        # Stacked channel-mix weights: row block t = W[:, :, ky, kx].T  ->
        # (taps*Cout, Cin), batch-independent (no block-diagonal replication).
        ops[f"wc{li}"] = (jnp.transpose(w, (2, 3, 1, 0))
                          .reshape(k * k * cout, cin)
                          .astype(jnp.bfloat16))
        ops[f"g{li}"] = params[f"g{li}"][:, None].astype(jnp.float32)
        ops[f"b{li}"] = params[f"b{li}"][:, None].astype(jnp.float32)
    # layer 4: 1x1 conv -> a (1, Cin) row vector
    ops["w4"] = params["w4"][:, 0, 0, 0][None, :].astype(jnp.bfloat16)
    return ops


# ------------------------------ Pallas kernel -------------------------------

def _bn_relu(y, g_ref, b_ref, count):
    """Single-pass train-mode BatchNorm2d + ReLU on (C, M) with channels on rows.

    `count` = number of REAL columns (zero pad columns contribute 0 to both sums,
    so they are excluded from the statistics exactly)."""
    inv = jnp.float32(1.0 / count)
    s1 = jnp.sum(y, axis=1, keepdims=True)
    s2 = jnp.sum(y * y, axis=1, keepdims=True)
    mu = s1 * inv
    var = jnp.maximum(s2 * inv - mu * mu, 0.0)          # guard tiny cancellation
    yhat = (y - mu) * jax.lax.rsqrt(var + _BN_EPS)
    return jnp.maximum(yhat * g_ref[...] + b_ref[...], 0.0)


def _convt(x, wc_ref, s_tab, *, taps, hwin, batch):
    """One ConvTranspose2d on activations x (Cin, N*hwin), columns n-major.

      1) stacked channel mix  : (taps*Cout, Cin) @ (Cin, N*hwin)       [1 MXU matmul]
      2) tap->lane rearrange  : (taps*Cout, N*hwin) -> (N*Cout, taps*hwin)
      3) batch-deduped scatter: (N*Cout, taps*hwin) @ (taps*hwin, HWout) [1 MXU matmul]
      4) back to (Cout, N*HWout) for the next layer / BN.
    `s_tab is None` means the scatter is the identity (layer 0)."""
    cout = wc_ref.shape[0] // taps
    z = jnp.dot(wc_ref[...], x.astype(jnp.bfloat16),
                preferred_element_type=jnp.float32)      # (taps*cout, N*hwin) f32
    rows = []
    for n in range(batch):
        blocks = [z[t * cout:(t + 1) * cout, n * hwin:(n + 1) * hwin]
                  for t in range(taps)]
        rows.append(blocks[0] if taps == 1 else jnp.concatenate(blocks, axis=1))
    zr = rows[0] if batch == 1 else jnp.concatenate(rows, axis=0)  # (N*cout, taps*hwin)
    if s_tab is None:
        yb = zr
    else:
        yb = jnp.dot(zr.astype(jnp.bfloat16), s_tab,
                     preferred_element_type=jnp.float32)  # (N*cout, HWout) f32
    cols = [yb[n * cout:(n + 1) * cout, :] for n in range(batch)]
    return cols[0] if batch == 1 else jnp.concatenate(cols, axis=1)  # (cout, N*HWout)


def _generator_kernel(z_ref, wc0_ref, wc1_ref, wc2_ref, wc3_ref, w4_ref,
                      g0_ref, b0_ref, g1_ref, b1_ref, g2_ref, b2_ref,
                      g3_ref, b3_ref, s1_ref, s2_hbm, s3_hbm,
                      o_ref, s2_vmem, s3_vmem, dma_sems, *, batch):
    n = batch

    # Kick off the DMAs of the two big int8 scatter tables right away so their
    # HBM->VMEM transfer overlaps the layer-0/1 compute (grid=() would otherwise
    # serialize them ahead of the whole body if they were auto-BlockSpec inputs).
    cp2 = pltpu.make_async_copy(s2_hbm, s2_vmem, dma_sems.at[0])
    cp3 = pltpu.make_async_copy(s3_hbm, s3_vmem, dma_sems.at[1])
    cp2.start()
    cp3.start()

    # Layer 0: ConvT(noise -> 8nf, k4 s1 p0); 1x1 input => the scatter is identity.
    x = _convt(z_ref[...], wc0_ref, None, taps=_TAPS[0], hwin=_HW[0], batch=n)
    x = _bn_relu(x, g0_ref, b0_ref, n * _HW[1])                       # (32, N*16)

    # Layer 1: ConvT(8nf -> 4nf, k4 s2 p1).
    s1t = s1_ref[...].astype(jnp.float32).astype(jnp.bfloat16)
    x = _convt(x, wc1_ref, s1t, taps=_TAPS[1], hwin=_HW[1], batch=n)
    x = _bn_relu(x, g1_ref, b1_ref, n * _HW[2])                       # (16, N*64)

    # Layer 2: ConvT(4nf -> 2nf, k4 s2 p1).
    cp2.wait()
    s2t = s2_vmem[...].astype(jnp.float32).astype(jnp.bfloat16)
    x = _convt(x, wc2_ref, s2t, taps=_TAPS[2], hwin=_HW[2], batch=n)
    x = _bn_relu(x, g2_ref, b2_ref, n * _HW[3])                       # (8, N*256)

    # Layer 3: ConvT(2nf -> nf, k2 s2 p1).  Output columns are interior-first and
    # zero-padded 900 -> 1024 per sample; pad columns never enter the BN stats
    # (explicit count) and are never read afterwards.
    cp3.wait()
    s3t = s3_vmem[...].astype(jnp.float32).astype(jnp.bfloat16)
    x = _convt(x, wc3_ref, s3t, taps=_TAPS[3], hwin=_HW[3], batch=n)
    x = _bn_relu(x, g3_ref, b3_ref, n * _HW[4])                       # (4, N*1024)

    # Layer 4: ConvT(nf -> 1, k1 s1 p1) == crop to the 28x28 interior (a 128-aligned
    # per-sample prefix slice by construction) + 1x1 channel mix, then Tanh.
    crop = _HW[5]
    pieces = [x[:, i * _HW3_PAD:i * _HW3_PAD + crop] for i in range(n)]
    xc = pieces[0] if n == 1 else jnp.concatenate(pieces, axis=1)     # (4, N*784)
    o_ref[...] = jnp.tanh(jnp.dot(w4_ref[...], xc.astype(jnp.bfloat16),
                                  preferred_element_type=jnp.float32))


def generator_forward(x_nchw, operands, tables):
    n = x_nchw.shape[0]
    final = _SIZES[-1]
    z2d = jnp.transpose(x_nchw[:, :, 0, 0]).astype(jnp.float32)       # (noise, N)
    m_out = n * final * final
    kernel = functools.partial(_generator_kernel, batch=n)
    out = pl.pallas_call(
        kernel,
        out_shape=jax.ShapeDtypeStruct((1, m_out), jnp.float32),
        in_specs=([pl.BlockSpec(memory_space=pltpu.MemorySpace.VMEM)] * 15
                  + [pl.BlockSpec(memory_space=pl.ANY)] * 2),          # s2, s3 in HBM
        out_specs=pl.BlockSpec(memory_space=pltpu.MemorySpace.VMEM),
        scratch_shapes=[pltpu.VMEM(tables[1].shape, jnp.int8),
                        pltpu.VMEM(tables[2].shape, jnp.int8),
                        pltpu.SemaphoreType.DMA((2,))],
        compiler_params=pltpu.CompilerParams(
            vmem_limit_bytes=32 * 1024 * 1024),
    )(z2d,
      operands["wc0"], operands["wc1"], operands["wc2"], operands["wc3"],
      operands["w4"],
      operands["g0"], operands["b0"], operands["g1"], operands["b1"],
      operands["g2"], operands["b2"], operands["g3"], operands["b3"],
      tables[0], tables[1], tables[2])
    return out.reshape(n, 1, final, final)


# --------------------- plain-JAX reference (validation) ---------------------

def _reference_forward(x_nchw, params):
    x = jnp.transpose(x_nchw, (0, 2, 3, 1)).astype(jnp.float32)       # NHWC
    for li, (k, s, p) in enumerate(_LAYER_CFG):
        w = params[f"w{li}"]                                          # (Cin,Cout,K,K)
        n, h, _, c = x.shape
        hd = (h - 1) * s + 1
        xd = jnp.zeros((n, hd, hd, c), x.dtype).at[:, ::s, ::s, :].set(x)
        pp = k - 1 - p
        if pp > 0:
            xd = jnp.pad(xd, ((0, 0), (pp, pp), (pp, pp), (0, 0)))
        elif pp < 0:
            xd = xd[:, -pp:pp, -pp:pp, :]
        ho = xd.shape[1] - k + 1
        wk = jnp.transpose(w[:, :, ::-1, ::-1], (2, 3, 0, 1))          # (K,K,Cin,Cout)
        y = jnp.zeros((n, ho, ho, w.shape[1]), jnp.float32)
        for i in range(k):
            for j in range(k):
                y = y + jnp.einsum('nhwc,co->nhwo',
                                   xd[:, i:i + ho, j:j + ho, :], wk[i, j])
        if li < 4:
            mu = jnp.mean(y, axis=(0, 1, 2), keepdims=True)
            var = jnp.mean((y - mu) ** 2, axis=(0, 1, 2), keepdims=True)
            yh = (y - mu) * jax.lax.rsqrt(var + _BN_EPS)
            g = params[f"g{li}"].reshape(1, 1, 1, -1)
            b = params[f"b{li}"].reshape(1, 1, 1, -1)
            x = jnp.maximum(yh * g + b, 0.0)
        else:
            x = jnp.tanh(y)
    return jnp.transpose(x, (0, 3, 1, 2))


# ---------------------------------- main -------------------------------------

if __name__ == "__main__":
    noise_size = 16
    feature_size = 4
    batch = 2

    key = jax.random.PRNGKey(0)
    kx, kp = jax.random.split(key)
    x = jax.random.normal(kx, (batch, noise_size, 1, 1), jnp.float32)

    params = init_generator_params(noise_size, feature_size, kp)
    operands = prepare_generator_operands(params)   # hoisted: built once per weight set
    tables = build_generator_tables()               # static, batch-independent, int8

    fwd = jax.jit(generator_forward)
    out = jax.block_until_ready(fwd(x, operands, tables))

    # spatial chain: 1 -> 4 -> 8 -> 16 -> 30 -> 28
    assert out.shape == (batch, 1, _SIZES[-1], _SIZES[-1]), out.shape
    assert bool(jnp.all(jnp.isfinite(out)))

    ref = _reference_forward(x, params)
    err = float(jnp.max(jnp.abs(out - ref)))
    # bf16 MXU operands / f32 accumulation; observed error is O(1e-3) on the
    # tanh-bounded output -- verified at the tighter 1e-2 bound from the review.
    assert err < 1e-2, err

    print("KERNEL_OK")
</pallas_src>

<mosaic_0001>
module attributes {stable_mosaic.version = 11 : i64} {
  func.func @_generator_kernel(%arg0: memref<16x2xf32, #tpu.memory_space<vmem>>, %arg1: memref<512x16xbf16, #tpu.memory_space<vmem>>, %arg2: memref<256x32xbf16, #tpu.memory_space<vmem>>, %arg3: memref<128x16xbf16, #tpu.memory_space<vmem>>, %arg4: memref<16x8xbf16, #tpu.memory_space<vmem>>, %arg5: memref<1x4xbf16, #tpu.memory_space<vmem>>, %arg6: memref<32x1xf32, #tpu.memory_space<vmem>>, %arg7: memref<32x1xf32, #tpu.memory_space<vmem>>, %arg8: memref<16x1xf32, #tpu.memory_space<vmem>>, %arg9: memref<16x1xf32, #tpu.memory_space<vmem>>, %arg10: memref<8x1xf32, #tpu.memory_space<vmem>>, %arg11: memref<8x1xf32, #tpu.memory_space<vmem>>, %arg12: memref<4x1xf32, #tpu.memory_space<vmem>>, %arg13: memref<4x1xf32, #tpu.memory_space<vmem>>, %arg14: memref<256x64xi8, #tpu.memory_space<vmem>>, %arg15: memref<1024x256xi8, #tpu.memory_space<any>>, %arg16: memref<1024x1024xi8, #tpu.memory_space<any>>, %arg17: memref<1x1568xf32, #tpu.memory_space<vmem>>, %arg18: memref<1024x256xi8, #tpu.memory_space<vmem>>, %arg19: memref<1024x1024xi8, #tpu.memory_space<vmem>>, %arg20: memref<2x!tpu.dma_semaphore, #tpu.memory_space<semaphore_mem>>) attributes {dimension_semantics = [], scalar_prefetch = 0 : i64, scratch_operands = 3 : i64, tpu.core_type = #tpu.core_type<tc>} {
    %c0_i32 = arith.constant 0 : i32
    %0 = tpu.memref_slice %arg20[%c0_i32] : memref<2x!tpu.dma_semaphore, #tpu.memory_space<semaphore_mem>> -> memref<1x!tpu.dma_semaphore, #tpu.memory_space<semaphore_mem>>
    %1 = tpu.memref_squeeze %0 : memref<1x!tpu.dma_semaphore, #tpu.memory_space<semaphore_mem>> -> memref<!tpu.dma_semaphore, #tpu.memory_space<semaphore_mem>>
    tpu.enqueue_dma source(%arg15 : memref<1024x256xi8, #tpu.memory_space<any>>) target(%arg18 : memref<1024x256xi8, #tpu.memory_space<vmem>>) target_semaphore(%1 : memref<!tpu.dma_semaphore, #tpu.memory_space<semaphore_mem>>)
    %c1_i32 = arith.constant 1 : i32
    %2 = tpu.memref_slice %arg20[%c1_i32] : memref<2x!tpu.dma_semaphore, #tpu.memory_space<semaphore_mem>> -> memref<1x!tpu.dma_semaphore, #tpu.memory_space<semaphore_mem>>
    %3 = tpu.memref_squeeze %2 : memref<1x!tpu.dma_semaphore, #tpu.memory_space<semaphore_mem>> -> memref<!tpu.dma_semaphore, #tpu.memory_space<semaphore_mem>>
    tpu.enqueue_dma source(%arg16 : memref<1024x1024xi8, #tpu.memory_space<any>>) target(%arg19 : memref<1024x1024xi8, #tpu.memory_space<vmem>>) target_semaphore(%3 : memref<!tpu.dma_semaphore, #tpu.memory_space<semaphore_mem>>)
    %c0 = arith.constant 0 : index
    %c0_0 = arith.constant 0 : index
    %4 = vector.load %arg0[%c0, %c0_0] : memref<16x2xf32, #tpu.memory_space<vmem>>, vector<16x2xf32>
    %c0_1 = arith.constant 0 : index
    %c0_2 = arith.constant 0 : index
    %5 = vector.load %arg1[%c0_1, %c0_2] : memref<512x16xbf16, #tpu.memory_space<vmem>>, vector<512x16xbf16>
    %6 = arith.truncf %4 : vector<16x2xf32> to vector<16x2xbf16>
    %cst = arith.constant dense<0.000000e+00> : vector<512x2xf32>
    %7 = tpu.matmul %5, %6, %cst {dimension_numbers = #tpu.dot_dimension_numbers<[1], [0], [0], [1], [0, 0, 1, 1], [], []>} : vector<512x16xbf16>, vector<16x2xbf16>, vector<512x2xf32> -> vector<512x2xf32>
    %8 = vector.extract_strided_slice %7 {offsets = [0, 0], sizes = [32, 1], strides = [1, 1]} : vector<512x2xf32> to vector<32x1xf32>
    %9 = vector.extract_strided_slice %7 {offsets = [32, 0], sizes = [32, 1], strides = [1, 1]} : vector<512x2xf32> to vector<32x1xf32>
    %10 = vector.extract_strided_slice %7 {offsets = [64, 0], sizes = [32, 1], strides = [1, 1]} : vector<512x2xf32> to vector<32x1xf32>
    %11 = vector.extract_strided_slice %7 {offsets = [96, 0], sizes = [32, 1], strides = [1, 1]} : vector<512x2xf32> to vector<32x1xf32>
    %12 = vector.extract_strided_slice %7 {offsets = [128, 0], sizes = [32, 1], strides = [1, 1]} : vector<512x2xf32> to vector<32x1xf32>
    %13 = vector.extract_strided_slice %7 {offsets = [160, 0], sizes = [32, 1], strides = [1, 1]} : vector<512x2xf32> to vector<32x1xf32>
    %14 = vector.extract_strided_slice %7 {offsets = [192, 0], sizes = [32, 1], strides = [1, 1]} : vector<512x2xf32> to vector<32x1xf32>
    %15 = vector.extract_strided_slice %7 {offsets = [224, 0], sizes = [32, 1], strides = [1, 1]} : vector<512x2xf32> to vector<32x1xf32>
    %16 = vector.extract_strided_slice %7 {offsets = [256, 0], sizes = [32, 1], strides = [1, 1]} : vector<512x2xf32> to vector<32x1xf32>
    %17 = vector.extract_strided_slice %7 {offsets = [288, 0], sizes = [32, 1], strides = [1, 1]} : vector<512x2xf32> to vector<32x1xf32>
    %18 = vector.extract_strided_slice %7 {offsets = [320, 0], sizes = [32, 1], strides = [1, 1]} : vector<512x2xf32> to vector<32x1xf32>
    %19 = vector.extract_strided_slice %7 {offsets = [352, 0], sizes = [32, 1], strides = [1, 1]} : vector<512x2xf32> to vector<32x1xf32>
    %20 = vector.extract_strided_slice %7 {offsets = [384, 0], sizes = [32, 1], strides = [1, 1]} : vector<512x2xf32> to vector<32x1xf32>
    %21 = vector.extract_strided_slice %7 {offsets = [416, 0], sizes = [32, 1], strides = [1, 1]} : vector<512x2xf32> to vector<32x1xf32>
    %22 = vector.extract_strided_slice %7 {offsets = [448, 0], sizes = [32, 1], strides = [1, 1]} : vector<512x2xf32> to vector<32x1xf32>
    %23 = vector.extract_strided_slice %7 {offsets = [480, 0], sizes = [32, 1], strides = [1, 1]} : vector<512x2xf32> to vector<32x1xf32>
    %24 = tpu.concatenate %8, %9, %10, %11, %12, %13, %14, %15, %16, %17, %18, %19, %20, %21, %22, %23 in 1 : vector<32x1xf32>, vector<32x1xf32>, vector<32x1xf32>, vector<32x1xf32>, vector<32x1xf32>, vector<32x1xf32>, vector<32x1xf32>, vector<32x1xf32>, vector<32x1xf32>, vector<32x1xf32>, vector<32x1xf32>, vector<32x1xf32>, vector<32x1xf32>, vector<32x1xf32>, vector<32x1xf32>, vector<32x1xf32> -> vector<32x16xf32>
    %25 = vector.extract_strided_slice %7 {offsets = [0, 1], sizes = [32, 1], strides = [1, 1]} : vector<512x2xf32> to vector<32x1xf32>
    %26 = vector.extract_strided_slice %7 {offsets = [32, 1], sizes = [32, 1], strides = [1, 1]} : vector<512x2xf32> to vector<32x1xf32>
    %27 = vector.extract_strided_slice %7 {offsets = [64, 1], sizes = [32, 1], strides = [1, 1]} : vector<512x2xf32> to vector<32x1xf32>
    %28 = vector.extract_strided_slice %7 {offsets = [96, 1], sizes = [32, 1], strides = [1, 1]} : vector<512x2xf32> to vector<32x1xf32>
    %29 = vector.extract_strided_slice %7 {offsets = [128, 1], sizes = [32, 1], strides = [1, 1]} : vector<512x2xf32> to vector<32x1xf32>
    %30 = vector.extract_strided_slice %7 {offsets = [160, 1], sizes = [32, 1], strides = [1, 1]} : vector<512x2xf32> to vector<32x1xf32>
    %31 = vector.extract_strided_slice %7 {offsets = [192, 1], sizes = [32, 1], strides = [1, 1]} : vector<512x2xf32> to vector<32x1xf32>
    %32 = vector.extract_strided_slice %7 {offsets = [224, 1], sizes = [32, 1], strides = [1, 1]} : vector<512x2xf32> to vector<32x1xf32>
    %33 = vector.extract_strided_slice %7 {offsets = [256, 1], sizes = [32, 1], strides = [1, 1]} : vector<512x2xf32> to vector<32x1xf32>
    %34 = vector.extract_strided_slice %7 {offsets = [288, 1], sizes = [32, 1], strides = [1, 1]} : vector<512x2xf32> to vector<32x1xf32>
    %35 = vector.extract_strided_slice %7 {offsets = [320, 1], sizes = [32, 1], strides = [1, 1]} : vector<512x2xf32> to vector<32x1xf32>
    %36 = vector.extract_strided_slice %7 {offsets = [352, 1], sizes = [32, 1], strides = [1, 1]} : vector<512x2xf32> to vector<32x1xf32>
    %37 = vector.extract_strided_slice %7 {offsets = [384, 1], sizes = [32, 1], strides = [1, 1]} : vector<512x2xf32> to vector<32x1xf32>
    %38 = vector.extract_strided_slice %7 {offsets = [416, 1], sizes = [32, 1], strides = [1, 1]} : vector<512x2xf32> to vector<32x1xf32>
    %39 = vector.extract_strided_slice %7 {offsets = [448, 1], sizes = [32, 1], strides = [1, 1]} : vector<512x2xf32> to vector<32x1xf32>
    %40 = vector.extract_strided_slice %7 {offsets = [480, 1], sizes = [32, 1], strides = [1, 1]} : vector<512x2xf32> to vector<32x1xf32>
    %41 = tpu.concatenate %25, %26, %27, %28, %29, %30, %31, %32, %33, %34, %35, %36, %37, %38, %39, %40 in 1 : vector<32x1xf32>, vector<32x1xf32>, vector<32x1xf32>, vector<32x1xf32>, vector<32x1xf32>, vector<32x1xf32>, vector<32x1xf32>, vector<32x1xf32>, vector<32x1xf32>, vector<32x1xf32>, vector<32x1xf32>, vector<32x1xf32>, vector<32x1xf32>, vector<32x1xf32>, vector<32x1xf32>, vector<32x1xf32> -> vector<32x16xf32>
    %42 = tpu.concatenate %24, %41 in 0 : vector<32x16xf32>, vector<32x16xf32> -> vector<64x16xf32>
    %43 = vector.extract_strided_slice %42 {offsets = [0, 0], sizes = [32, 16], strides = [1, 1]} : vector<64x16xf32> to vector<32x16xf32>
    %44 = vector.extract_strided_slice %42 {offsets = [32, 0], sizes = [32, 16], strides = [1, 1]} : vector<64x16xf32> to vector<32x16xf32>
    %45 = tpu.concatenate %43, %44 in 1 : vector<32x16xf32>, vector<32x16xf32> -> vector<32x32xf32>
    %cst_3 = arith.constant dense<0.000000e+00> : vector<32xf32>
    %46 = vector.multi_reduction <add>, %45, %cst_3 [1] : vector<32x32xf32> to vector<32xf32>
    %47 = vector.shape_cast %46 : vector<32xf32> to vector<32x1xf32>
    %48 = arith.mulf %45, %45 : vector<32x32xf32>
    %cst_4 = arith.constant dense<0.000000e+00> : vector<32xf32>
    %49 = vector.multi_reduction <add>, %48, %cst_4 [1] : vector<32x32xf32> to vector<32xf32>
    %50 = vector.shape_cast %49 : vector<32xf32> to vector<32x1xf32>
    %cst_5 = arith.constant 3.125000e-02 : f32
    %51 = vector.broadcast %cst_5 : f32 to vector<32x1xf32>
    %52 = arith.mulf %47, %51 : vector<32x1xf32>
    %cst_6 = arith.constant 3.125000e-02 : f32
    %53 = vector.broadcast %cst_6 : f32 to vector<32x1xf32>
    %54 = arith.mulf %50, %53 : vector<32x1xf32>
    %55 = arith.mulf %52, %52 : vector<32x1xf32>
    %56 = arith.subf %54, %55 : vector<32x1xf32>
    %cst_7 = arith.constant 0.000000e+00 : f32
    %57 = vector.broadcast %cst_7 : f32 to vector<32x1xf32>
    %58 = arith.maximumf %56, %57 : vector<32x1xf32>
    %59 = vector.broadcast %52 : vector<32x1xf32> to vector<32x32xf32>
    %60 = arith.subf %45, %59 : vector<32x32xf32>
    %cst_8 = arith.constant 9.99999974E-6 : f32
    %61 = vector.broadcast %cst_8 : f32 to vector<32x1xf32>
    %62 = arith.addf %58, %61 : vector<32x1xf32>
    %63 = math.rsqrt %62 : vector<32x1xf32>
    %64 = vector.broadcast %63 : vector<32x1xf32> to vector<32x32xf32>
    %65 = arith.mulf %60, %64 : vector<32x32xf32>
    %c0_9 = arith.constant 0 : index
    %c0_10 = arith.constant 0 : index
    %66 = vector.load %arg6[%c0_9, %c0_10] : memref<32x1xf32, #tpu.memory_space<vmem>>, vector<32x1xf32>
    %67 = vector.broadcast %66 : vector<32x1xf32> to vector<32x32xf32>
    %68 = arith.mulf %65, %67 : vector<32x32xf32>
    %c0_11 = arith.constant 0 : index
    %c0_12 = arith.constant 0 : index
    %69 = vector.load %arg7[%c0_11, %c0_12] : memref<32x1xf32, #tpu.memory_space<vmem>>, vector<32x1xf32>
    %70 = vector.broadcast %69 : vector<32x1xf32> to vector<32x32xf32>
    %71 = arith.addf %68, %70 : vector<32x32xf32>
    %cst_13 = arith.constant 0.000000e+00 : f32
    %72 = vector.broadcast %cst_13 : f32 to vector<32x32xf32>
    %73 = arith.maximumf %71, %72 : vector<32x32xf32>
    %c0_14 = arith.constant 0 : index
    %c0_15 = arith.constant 0 : index
    %74 = vector.load %arg14[%c0_14, %c0_15] : memref<256x64xi8, #tpu.memory_space<vmem>>, vector<256x64xi8>
    %75 = arith.sitofp %74 : vector<256x64xi8> to vector<256x64xf32>
    %76 = arith.truncf %75 : vector<256x64xf32> to vector<256x64xbf16>
    %c0_16 = arith.constant 0 : index
    %c0_17 = arith.constant 0 : index
    %77 = vector.load %arg2[%c0_16, %c0_17] : memref<256x32xbf16, #tpu.memory_space<vmem>>, vector<256x32xbf16>
    %78 = arith.truncf %73 : vector<32x32xf32> to vector<32x32xbf16>
    %cst_18 = arith.constant dense<0.000000e+00> : vector<256x32xf32>
    %79 = tpu.matmul %77, %78, %cst_18 {dimension_numbers = #tpu.dot_dimension_numbers<[1], [0], [0], [1], [0, 0, 1, 1], [], []>} : vector<256x32xbf16>, vector<32x32xbf16>, vector<256x32xf32> -> vector<256x32xf32>
    %80 = vector.extract_strided_slice %79 {offsets = [0, 0], sizes = [16, 16], strides = [1, 1]} : vector<256x32xf32> to vector<16x16xf32>
    %81 = vector.extract_strided_slice %79 {offsets = [16, 0], sizes = [16, 16], strides = [1, 1]} : vector<256x32xf32> to vector<16x16xf32>
    %82 = vector.extract_strided_slice %79 {offsets = [32, 0], sizes = [16, 16], strides = [1, 1]} : vector<256x32xf32> to vector<16x16xf32>
    %83 = vector.extract_strided_slice %79 {offsets = [48, 0], sizes = [16, 16], strides = [1, 1]} : vector<256x32xf32> to vector<16x16xf32>
    %84 = vector.extract_strided_slice %79 {offsets = [64, 0], sizes = [16, 16], strides = [1, 1]} : vector<256x32xf32> to vector<16x16xf32>
    %85 = vector.extract_strided_slice %79 {offsets = [80, 0], sizes = [16, 16], strides = [1, 1]} : vector<256x32xf32> to vector<16x16xf32>
    %86 = vector.extract_strided_slice %79 {offsets = [96, 0], sizes = [16, 16], strides = [1, 1]} : vector<256x32xf32> to vector<16x16xf32>
    %87 = vector.extract_strided_slice %79 {offsets = [112, 0], sizes = [16, 16], strides = [1, 1]} : vector<256x32xf32> to vector<16x16xf32>
    %88 = vector.extract_strided_slice %79 {offsets = [128, 0], sizes = [16, 16], strides = [1, 1]} : vector<256x32xf32> to vector<16x16xf32>
    %89 = vector.extract_strided_slice %79 {offsets = [144, 0], sizes = [16, 16], strides = [1, 1]} : vector<256x32xf32> to vector<16x16xf32>
    %90 = vector.extract_strided_slice %79 {offsets = [160, 0], sizes = [16, 16], strides = [1, 1]} : vector<256x32xf32> to vector<16x16xf32>
    %91 = vector.extract_strided_slice %79 {offsets = [176, 0], sizes = [16, 16], strides = [1, 1]} : vector<256x32xf32> to vector<16x16xf32>
    %92 = vector.extract_strided_slice %79 {offsets = [192, 0], sizes = [16, 16], strides = [1, 1]} : vector<256x32xf32> to vector<16x16xf32>
    %93 = vector.extract_strided_slice %79 {offsets = [208, 0], sizes = [16, 16], strides = [1, 1]} : vector<256x32xf32> to vector<16x16xf32>
    %94 = vector.extract_strided_slice %79 {offsets = [224, 0], sizes = [16, 16], strides = [1, 1]} : vector<256x32xf32> to vector<16x16xf32>
    %95 = vector.extract_strided_slice %79 {offsets = [240, 0], sizes = [16, 16], strides = [1, 1]} : vector<256x32xf32> to vector<16x16xf32>
    %96 = tpu.concatenate %80, %81, %82, %83, %84, %85, %86, %87, %88, %89, %90, %91, %92, %93, %94, %95 in 1 : vector<16x16xf32>, vector<16x16xf32>, vector<16x16xf32>, vector<16x16xf32>, vector<16x16xf32>, vector<16x16xf32>, vector<16x16xf32>, vector<16x16xf32>, vector<16x16xf32>, vector<16x16xf32>, vector<16x16xf32>, vector<16x16xf32>, vector<16x16xf32>, vector<16x16xf32>, vector<16x16xf32>, vector<16x16xf32> -> vector<16x256xf32>
    %97 = vector.extract_strided_slice %79 {offsets = [0, 16], sizes = [16, 16], strides = [1, 1]} : vector<256x32xf32> to vector<16x16xf32>
    %98 = vector.extract_strided_slice %79 {offsets = [16, 16], sizes = [16, 16], strides = [1, 1]} : vector<256x32xf32> to vector<16x16xf32>
    %99 = vector.extract_strided_slice %79 {offsets = [32, 16], sizes = [16, 16], strides = [1, 1]} : vector<256x32xf32> to vector<16x16xf32>
    %100 = vector.extract_strided_slice %79 {offsets = [48, 16], sizes = [16, 16], strides = [1, 1]} : vector<256x32xf32> to vector<16x16xf32>
    %101 = vector.extract_strided_slice %79 {offsets = [64, 16], sizes = [16, 16], strides = [1, 1]} : vector<256x32xf32> to vector<16x16xf32>
    %102 = vector.extract_strided_slice %79 {offsets = [80, 16], sizes = [16, 16], strides = [1, 1]} : vector<256x32xf32> to vector<16x16xf32>
    %103 = vector.extract_strided_slice %79 {offsets = [96, 16], sizes = [16, 16], strides = [1, 1]} : vector<256x32xf32> to vector<16x16xf32>
    %104 = vector.extract_strided_slice %79 {offsets = [112, 16], sizes = [16, 16], strides = [1, 1]} : vector<256x32xf32> to vector<16x16xf32>
    %105 = vector.extract_strided_slice %79 {offsets = [128, 16], sizes = [16, 16], strides = [1, 1]} : vector<256x32xf32> to vector<16x16xf32>
    %106 = vector.extract_strided_slice %79 {offsets = [144, 16], sizes = [16, 16], strides = [1, 1]} : vector<256x32xf32> to vector<16x16xf32>
    %107 = vector.extract_strided_slice %79 {offsets = [160, 16], sizes = [16, 16], strides = [1, 1]} : vector<256x32xf32> to vector<16x16xf32>
    %108 = vector.extract_strided_slice %79 {offsets = [176, 16], sizes = [16, 16], strides = [1, 1]} : vector<256x32xf32> to vector<16x16xf32>
    %109 = vector.extract_strided_slice %79 {offsets = [192, 16], sizes = [16, 16], strides = [1, 1]} : vector<256x32xf32> to vector<16x16xf32>
    %110 = vector.extract_strided_slice %79 {offsets = [208, 16], sizes = [16, 16], strides = [1, 1]} : vector<256x32xf32> to vector<16x16xf32>
    %111 = vector.extract_strided_slice %79 {offsets = [224, 16], sizes = [16, 16], strides = [1, 1]} : vector<256x32xf32> to vector<16x16xf32>
    %112 = vector.extract_strided_slice %79 {offsets = [240, 16], sizes = [16, 16], strides = [1, 1]} : vector<256x32xf32> to vector<16x16xf32>
    %113 = tpu.concatenate %97, %98, %99, %100, %101, %102, %103, %104, %105, %106, %107, %108, %109, %110, %111, %112 in 1 : vector<16x16xf32>, vector<16x16xf32>, vector<16x16xf32>, vector<16x16xf32>, vector<16x16xf32>, vector<16x16xf32>, vector<16x16xf32>, vector<16x16xf32>, vector<16x16xf32>, vector<16x16xf32>, vector<16x16xf32>, vector<16x16xf32>, vector<16x16xf32>, vector<16x16xf32>, vector<16x16xf32>, vector<16x16xf32> -> vector<16x256xf32>
    %114 = tpu.concatenate %96, %113 in 0 : vector<16x256xf32>, vector<16x256xf32> -> vector<32x256xf32>
    %115 = arith.truncf %114 : vector<32x256xf32> to vector<32x256xbf16>
    %cst_19 = arith.constant dense<0.000000e+00> : vector<32x64xf32>
    %116 = tpu.matmul %115, %76, %cst_19 {dimension_numbers = #tpu.dot_dimension_numbers<[1], [0], [0], [1], [0, 0, 1, 1], [], []>} : vector<32x256xbf16>, vector<256x64xbf16>, vector<32x64xf32> -> vector<32x64xf32>
    %117 = vector.extract_strided_slice %116 {offsets = [0, 0], sizes = [16, 64], strides = [1, 1]} : vector<32x64xf32> to vector<16x64xf32>
    %118 = vector.extract_strided_slice %116 {offsets = [16, 0], sizes = [16, 64], strides = [1, 1]} : vector<32x64xf32> to vector<16x64xf32>
    %119 = tpu.concatenate %117, %118 in 1 : vector<16x64xf32>, vector<16x64xf32> -> vector<16x128xf32>
    %cst_20 = arith.constant dense<0.000000e+00> : vector<16xf32>
    %120 = vector.multi_reduction <add>, %119, %cst_20 [1] : vector<16x128xf32> to vector<16xf32>
    %121 = vector.shape_cast %120 : vector<16xf32> to vector<16x1xf32>
    %122 = arith.mulf %119, %119 : vector<16x128xf32>
    %cst_21 = arith.constant dense<0.000000e+00> : vector<16xf32>
    %123 = vector.multi_reduction <add>, %122, %cst_21 [1] : vector<16x128xf32> to vector<16xf32>
    %124 = vector.shape_cast %123 : vector<16xf32> to vector<16x1xf32>
    %cst_22 = arith.constant 7.812500e-03 : f32
    %125 = vector.broadcast %cst_22 : f32 to vector<16x1xf32>
    %126 = arith.mulf %121, %125 : vector<16x1xf32>
    %cst_23 = arith.constant 7.812500e-03 : f32
    %127 = vector.broadcast %cst_23 : f32 to vector<16x1xf32>
    %128 = arith.mulf %124, %127 : vector<16x1xf32>
    %129 = arith.mulf %126, %126 : vector<16x1xf32>
    %130 = arith.subf %128, %129 : vector<16x1xf32>
    %cst_24 = arith.constant 0.000000e+00 : f32
    %131 = vector.broadcast %cst_24 : f32 to vector<16x1xf32>
    %132 = arith.maximumf %130, %131 : vector<16x1xf32>
    %133 = vector.broadcast %126 : vector<16x1xf32> to vector<16x128xf32>
    %134 = arith.subf %119, %133 : vector<16x128xf32>
    %cst_25 = arith.constant 9.99999974E-6 : f32
    %135 = vector.broadcast %cst_25 : f32 to vector<16x1xf32>
    %136 = arith.addf %132, %135 : vector<16x1xf32>
    %137 = math.rsqrt %136 : vector<16x1xf32>
    %138 = vector.broadcast %137 : vector<16x1xf32> to vector<16x128xf32>
    %139 = arith.mulf %134, %138 : vector<16x128xf32>
    %c0_26 = arith.constant 0 : index
    %c0_27 = arith.constant 0 : index
    %140 = vector.load %arg8[%c0_26, %c0_27] : memref<16x1xf32, #tpu.memory_space<vmem>>, vector<16x1xf32>
    %141 = vector.broadcast %140 : vector<16x1xf32> to vector<16x128xf32>
    %142 = arith.mulf %139, %141 : vector<16x128xf32>
    %c0_28 = arith.constant 0 : index
    %c0_29 = arith.constant 0 : index
    %143 = vector.load %arg9[%c0_28, %c0_29] : memref<16x1xf32, #tpu.memory_space<vmem>>, vector<16x1xf32>
    %144 = vector.broadcast %143 : vector<16x1xf32> to vector<16x128xf32>
    %145 = arith.addf %142, %144 : vector<16x128xf32>
    %cst_30 = arith.constant 0.000000e+00 : f32
    %146 = vector.broadcast %cst_30 : f32 to vector<16x128xf32>
    %147 = arith.maximumf %145, %146 : vector<16x128xf32>
    %c0_i32_31 = arith.constant 0 : i32
    %148 = tpu.memref_slice %arg20[%c0_i32_31] : memref<2x!tpu.dma_semaphore, #tpu.memory_space<semaphore_mem>> -> memref<1x!tpu.dma_semaphore, #tpu.memory_space<semaphore_mem>>
    %149 = tpu.memref_squeeze %148 : memref<1x!tpu.dma_semaphore, #tpu.memory_space<semaphore_mem>> -> memref<!tpu.dma_semaphore, #tpu.memory_space<semaphore_mem>>
    tpu.wait_dma2 semaphore(%149 : memref<!tpu.dma_semaphore, #tpu.memory_space<semaphore_mem>>) src(%arg15 : memref<1024x256xi8, #tpu.memory_space<any>>) dst(%arg18 : memref<1024x256xi8, #tpu.memory_space<vmem>>)
    %c0_32 = arith.constant 0 : index
    %c0_33 = arith.constant 0 : index
    %150 = vector.load %arg18[%c0_32, %c0_33] : memref<1024x256xi8, #tpu.memory_space<vmem>>, vector<1024x256xi8>
    %151 = arith.sitofp %150 : vector<1024x256xi8> to vector<1024x256xf32>
    %152 = arith.truncf %151 : vector<1024x256xf32> to vector<1024x256xbf16>
    %c0_34 = arith.constant 0 : index
    %c0_35 = arith.constant 0 : index
    %153 = vector.load %arg3[%c0_34, %c0_35] : memref<128x16xbf16, #tpu.memory_space<vmem>>, vector<128x16xbf16>
    %154 = arith.truncf %147 : vector<16x128xf32> to vector<16x128xbf16>
    %cst_36 = arith.constant dense<0.000000e+00> : vector<128x128xf32>
    %155 = tpu.matmul %153, %154, %cst_36 {dimension_numbers = #tpu.dot_dimension_numbers<[1], [0], [0], [1], [0, 0, 1, 1], [], []>} : vector<128x16xbf16>, vector<16x128xbf16>, vector<128x128xf32> -> vector<128x128xf32>
    %156 = vector.extract_strided_slice %155 {offsets = [0, 0], sizes = [8, 64], strides = [1, 1]} : vector<128x128xf32> to vector<8x64xf32>
    %157 = vector.extract_strided_slice %155 {offsets = [8, 0], sizes = [8, 64], strides = [1, 1]} : vector<128x128xf32> to vector<8x64xf32>
    %158 = vector.extract_strided_slice %155 {offsets = [16, 0], sizes = [8, 64], strides = [1, 1]} : vector<128x128xf32> to vector<8x64xf32>
    %159 = vector.extract_strided_slice %155 {offsets = [24, 0], sizes = [8, 64], strides = [1, 1]} : vector<128x128xf32> to vector<8x64xf32>
    %160 = vector.extract_strided_slice %155 {offsets = [32, 0], sizes = [8, 64], strides = [1, 1]} : vector<128x128xf32> to vector<8x64xf32>
    %161 = vector.extract_strided_slice %155 {offsets = [40, 0], sizes = [8, 64], strides = [1, 1]} : vector<128x128xf32> to vector<8x64xf32>
    %162 = vector.extract_strided_slice %155 {offsets = [48, 0], sizes = [8, 64], strides = [1, 1]} : vector<128x128xf32> to vector<8x64xf32>
    %163 = vector.extract_strided_slice %155 {offsets = [56, 0], sizes = [8, 64], strides = [1, 1]} : vector<128x128xf32> to vector<8x64xf32>
    %164 = vector.extract_strided_slice %155 {offsets = [64, 0], sizes = [8, 64], strides = [1, 1]} : vector<128x128xf32> to vector<8x64xf32>
    %165 = vector.extract_strided_slice %155 {offsets = [72, 0], sizes = [8, 64], strides = [1, 1]} : vector<128x128xf32> to vector<8x64xf32>
    %166 = vector.extract_strided_slice %155 {offsets = [80, 0], sizes = [8, 64], strides = [1, 1]} : vector<128x128xf32> to vector<8x64xf32>
    %167 = vector.extract_strided_slice %155 {offsets = [88, 0], sizes = [8, 64], strides = [1, 1]} : vector<128x128xf32> to vector<8x64xf32>
    %168 = vector.extract_strided_slice %155 {offsets = [96, 0], sizes = [8, 64], strides = [1, 1]} : vector<128x128xf32> to vector<8x64xf32>
    %169 = vector.extract_strided_slice %155 {offsets = [104, 0], sizes = [8, 64], strides = [1, 1]} : vector<128x128xf32> to vector<8x64xf32>
    %170 = vector.extract_strided_slice %155 {offsets = [112, 0], sizes = [8, 64], strides = [1, 1]} : vector<128x128xf32> to vector<8x64xf32>
    %171 = vector.extract_strided_slice %155 {offsets = [120, 0], sizes = [8, 64], strides = [1, 1]} : vector<128x128xf32> to vector<8x64xf32>
    %172 = tpu.concatenate %156, %157, %158, %159, %160, %161, %162, %163, %164, %165, %166, %167, %168, %169, %170, %171 in 1 : vector<8x64xf32>, vector<8x64xf32>, vector<8x64xf32>, vector<8x64xf32>, vector<8x64xf32>, vector<8x64xf32>, vector<8x64xf32>, vector<8x64xf32>, vector<8x64xf32>, vector<8x64xf32>, vector<8x64xf32>, vector<8x64xf32>, vector<8x64xf32>, vector<8x64xf32>, vector<8x64xf32>, vector<8x64xf32> -> vector<8x1024xf32>
    %173 = vector.extract_strided_slice %155 {offsets = [0, 64], sizes = [8, 64], strides = [1, 1]} : vector<128x128xf32> to vector<8x64xf32>
    %174 = vector.extract_strided_slice %155 {offsets = [8, 64], sizes = [8, 64], strides = [1, 1]} : vector<128x128xf32> to vector<8x64xf32>
    %175 = vector.extract_strided_slice %155 {offsets = [16, 64], sizes = [8, 64], strides = [1, 1]} : vector<128x128xf32> to vector<8x64xf32>
    %176 = vector.extract_strided_slice %155 {offsets = [24, 64], sizes = [8, 64], strides = [1, 1]} : vector<128x128xf32> to vector<8x64xf32>
    %177 = vector.extract_strided_slice %155 {offsets = [32, 64], sizes = [8, 64], strides = [1, 1]} : vector<128x128xf32> to vector<8x64xf32>
    %178 = vector.extract_strided_slice %155 {offsets = [40, 64], sizes = [8, 64], strides = [1, 1]} : vector<128x128xf32> to vector<8x64xf32>
    %179 = vector.extract_strided_slice %155 {offsets = [48, 64], sizes = [8, 64], strides = [1, 1]} : vector<128x128xf32> to vector<8x64xf32>
    %180 = vector.extract_strided_slice %155 {offsets = [56, 64], sizes = [8, 64], strides = [1, 1]} : vector<128x128xf32> to vector<8x64xf32>
    %181 = vector.extract_strided_slice %155 {offsets = [64, 64], sizes = [8, 64], strides = [1, 1]} : vector<128x128xf32> to vector<8x64xf32>
    %182 = vector.extract_strided_slice %155 {offsets = [72, 64], sizes = [8, 64], strides = [1, 1]} : vector<128x128xf32> to vector<8x64xf32>
    %183 = vector.extract_strided_slice %155 {offsets = [80, 64], sizes = [8, 64], strides = [1, 1]} : vector<128x128xf32> to vector<8x64xf32>
    %184 = vector.extract_strided_slice %155 {offsets = [88, 64], sizes = [8, 64], strides = [1, 1]} : vector<128x128xf32> to vector<8x64xf32>
    %185 = vector.extract_strided_slice %155 {offsets = [96, 64], sizes = [8, 64], strides = [1, 1]} : vector<128x128xf32> to vector<8x64xf32>
    %186 = vector.extract_strided_slice %155 {offsets = [104, 64], sizes = [8, 64], strides = [1, 1]} : vector<128x128xf32> to vector<8x64xf32>
    %187 = vector.extract_strided_slice %155 {offsets = [112, 64], sizes = [8, 64], strides = [1, 1]} : vector<128x128xf32> to vector<8x64xf32>
    %188 = vector.extract_strided_slice %155 {offsets = [120, 64], sizes = [8, 64], strides = [1, 1]} : vector<128x128xf32> to vector<8x64xf32>
    %189 = tpu.concatenate %173, %174, %175, %176, %177, %178, %179, %180, %181, %182, %183, %184, %185, %186, %187, %188 in 1 : vector<8x64xf32>, vector<8x64xf32>, vector<8x64xf32>, vector<8x64xf32>, vector<8x64xf32>, vector<8x64xf32>, vector<8x64xf32>, vector<8x64xf32>, vector<8x64xf32>, vector<8x64xf32>, vector<8x64xf32>, vector<8x64xf32>, vector<8x64xf32>, vector<8x64xf32>, vector<8x64xf32>, vector<8x64xf32> -> vector<8x1024xf32>
    %190 = tpu.concatenate %172, %189 in 0 : vector<8x1024xf32>, vector<8x1024xf32> -> vector<16x1024xf32>
    %191 = arith.truncf %190 : vector<16x1024xf32> to vector<16x1024xbf16>
    %cst_37 = arith.constant dense<0.000000e+00> : vector<16x256xf32>
    %192 = tpu.matmul %191, %152, %cst_37 {dimension_numbers = #tpu.dot_dimension_numbers<[1], [0], [0], [1], [0, 0, 1, 1], [], []>} : vector<16x1024xbf16>, vector<1024x256xbf16>, vector<16x256xf32> -> vector<16x256xf32>
    %193 = vector.extract_strided_slice %192 {offsets = [0, 0], sizes = [8, 256], strides = [1, 1]} : vector<16x256xf32> to vector<8x256xf32>
    %194 = vector.extract_strided_slice %192 {offsets = [8, 0], sizes = [8, 256], strides = [1, 1]} : vector<16x256xf32> to vector<8x256xf32>
    %195 = tpu.concatenate %193, %194 in 1 : vector<8x256xf32>, vector<8x256xf32> -> vector<8x512xf32>
    %cst_38 = arith.constant dense<0.000000e+00> : vector<8xf32>
    %196 = vector.multi_reduction <add>, %195, %cst_38 [1] : vector<8x512xf32> to vector<8xf32>
    %197 = vector.shape_cast %196 : vector<8xf32> to vector<8x1xf32>
    %198 = arith.mulf %195, %195 : vector<8x512xf32>
    %cst_39 = arith.constant dense<0.000000e+00> : vector<8xf32>
    %199 = vector.multi_reduction <add>, %198, %cst_39 [1] : vector<8x512xf32> to vector<8xf32>
    %200 = vector.shape_cast %199 : vector<8xf32> to vector<8x1xf32>
    %cst_40 = arith.constant 0.001953125 : f32
    %201 = vector.broadcast %cst_40 : f32 to vector<8x1xf32>
    %202 = arith.mulf %197, %201 : vector<8x1xf32>
    %cst_41 = arith.constant 0.001953125 : f32
    %203 = vector.broadcast %cst_41 : f32 to vector<8x1xf32>
    %204 = arith.mulf %200, %203 : vector<8x1xf32>
    %205 = arith.mulf %202, %202 : vector<8x1xf32>
    %206 = arith.subf %204, %205 : vector<8x1xf32>
    %cst_42 = arith.constant 0.000000e+00 : f32
    %207 = vector.broadcast %cst_42 : f32 to vector<8x1xf32>
    %208 = arith.maximumf %206, %207 : vector<8x1xf32>
    %209 = vector.broadcast %202 : vector<8x1xf32> to vector<8x512xf32>
    %210 = arith.subf %195, %209 : vector<8x512xf32>
    %cst_43 = arith.constant 9.99999974E-6 : f32
    %211 = vector.broadcast %cst_43 : f32 to vector<8x1xf32>
    %212 = arith.addf %208, %211 : vector<8x1xf32>
    %213 = math.rsqrt %212 : vector<8x1xf32>
    %214 = vector.broadcast %213 : vector<8x1xf32> to vector<8x512xf32>
    %215 = arith.mulf %210, %214 : vector<8x512xf32>
    %c0_44 = arith.constant 0 : index
    %c0_45 = arith.constant 0 : index
    %216 = vector.load %arg10[%c0_44, %c0_45] : memref<8x1xf32, #tpu.memory_space<vmem>>, vector<8x1xf32>
    %217 = vector.broadcast %216 : vector<8x1xf32> to vector<8x512xf32>
    %218 = arith.mulf %215, %217 : vector<8x512xf32>
    %c0_46 = arith.constant 0 : index
    %c0_47 = arith.constant 0 : index
    %219 = vector.load %arg11[%c0_46, %c0_47] : memref<8x1xf32, #tpu.memory_space<vmem>>, vector<8x1xf32>
    %220 = vector.broadcast %219 : vector<8x1xf32> to vector<8x512xf32>
    %221 = arith.addf %218, %220 : vector<8x512xf32>
    %cst_48 = arith.constant 0.000000e+00 : f32
    %222 = vector.broadcast %cst_48 : f32 to vector<8x512xf32>
    %223 = arith.maximumf %221, %222 : vector<8x512xf32>
    %c1_i32_49 = arith.constant 1 : i32
    %224 = tpu.memref_slice %arg20[%c1_i32_49] : memref<2x!tpu.dma_semaphore, #tpu.memory_space<semaphore_mem>> -> memref<1x!tpu.dma_semaphore, #tpu.memory_space<semaphore_mem>>
    %225 = tpu.memref_squeeze %224 : memref<1x!tpu.dma_semaphore, #tpu.memory_space<semaphore_mem>> -> memref<!tpu.dma_semaphore, #tpu.memory_space<semaphore_mem>>
    tpu.wait_dma2 semaphore(%225 : memref<!tpu.dma_semaphore, #tpu.memory_space<semaphore_mem>>) src(%arg16 : memref<1024x1024xi8, #tpu.memory_space<any>>) dst(%arg19 : memref<1024x1024xi8, #tpu.memory_space<vmem>>)
    %c0_50 = arith.constant 0 : index
    %c0_51 = arith.constant 0 : index
    %226 = vector.load %arg19[%c0_50, %c0_51] : memref<1024x1024xi8, #tpu.memory_space<vmem>>, vector<1024x1024xi8>
    %227 = arith.sitofp %226 : vector<1024x1024xi8> to vector<1024x1024xf32>
    %228 = arith.truncf %227 : vector<1024x1024xf32> to vector<1024x1024xbf16>
    %c0_52 = arith.constant 0 : index
    %c0_53 = arith.constant 0 : index
    %229 = vector.load %arg4[%c0_52, %c0_53] : memref<16x8xbf16, #tpu.memory_space<vmem>>, vector<16x8xbf16>
    %230 = arith.truncf %223 : vector<8x512xf32> to vector<8x512xbf16>
    %cst_54 = arith.constant dense<0.000000e+00> : vector<16x512xf32>
    %231 = tpu.matmul %229, %230, %cst_54 {dimension_numbers = #tpu.dot_dimension_numbers<[1], [0], [0], [1], [0, 0, 1, 1], [], []>} : vector<16x8xbf16>, vector<8x512xbf16>, vector<16x512xf32> -> vector<16x512xf32>
    %232 = vector.extract_strided_slice %231 {offsets = [0, 0], sizes = [4, 256], strides = [1, 1]} : vector<16x512xf32> to vector<4x256xf32>
    %233 = vector.extract_strided_slice %231 {offsets = [4, 0], sizes = [4, 256], strides = [1, 1]} : vector<16x512xf32> to vector<4x256xf32>
    %234 = vector.extract_strided_slice %231 {offsets = [8, 0], sizes = [4, 256], strides = [1, 1]} : vector<16x512xf32> to vector<4x256xf32>
    %235 = vector.extract_strided_slice %231 {offsets = [12, 0], sizes = [4, 256], strides = [1, 1]} : vector<16x512xf32> to vector<4x256xf32>
    %236 = tpu.concatenate %232, %233, %234, %235 in 1 : vector<4x256xf32>, vector<4x256xf32>, vector<4x256xf32>, vector<4x256xf32> -> vector<4x1024xf32>
    %237 = vector.extract_strided_slice %231 {offsets = [0, 256], sizes = [4, 256], strides = [1, 1]} : vector<16x512xf32> to vector<4x256xf32>
    %238 = vector.extract_strided_slice %231 {offsets = [4, 256], sizes = [4, 256], strides = [1, 1]} : vector<16x512xf32> to vector<4x256xf32>
    %239 = vector.extract_strided_slice %231 {offsets = [8, 256], sizes = [4, 256], strides = [1, 1]} : vector<16x512xf32> to vector<4x256xf32>
    %240 = vector.extract_strided_slice %231 {offsets = [12, 256], sizes = [4, 256], strides = [1, 1]} : vector<16x512xf32> to vector<4x256xf32>
    %241 = tpu.concatenate %237, %238, %239, %240 in 1 : vector<4x256xf32>, vector<4x256xf32>, vector<4x256xf32>, vector<4x256xf32> -> vector<4x1024xf32>
    %242 = tpu.concatenate %236, %241 in 0 : vector<4x1024xf32>, vector<4x1024xf32> -> vector<8x1024xf32>
    %243 = arith.truncf %242 : vector<8x1024xf32> to vector<8x1024xbf16>
    %cst_55 = arith.constant dense<0.000000e+00> : vector<8x1024xf32>
    %244 = tpu.matmul %243, %228, %cst_55 {dimension_numbers = #tpu.dot_dimension_numbers<[1], [0], [0], [1], [0, 0, 1, 1], [], []>} : vector<8x1024xbf16>, vector<1024x1024xbf16>, vector<8x1024xf32> -> vector<8x1024xf32>
    %245 = vector.extract_strided_slice %244 {offsets = [0, 0], sizes = [4, 1024], strides = [1, 1]} : vector<8x1024xf32> to vector<4x1024xf32>
    %246 = vector.extract_strided_slice %244 {offsets = [4, 0], sizes = [4, 1024], strides = [1, 1]} : vector<8x1024xf32> to vector<4x1024xf32>
    %247 = tpu.concatenate %245, %246 in 1 : vector<4x1024xf32>, vector<4x1024xf32> -> vector<4x2048xf32>
    %cst_56 = arith.constant dense<0.000000e+00> : vector<4xf32>
    %248 = vector.multi_reduction <add>, %247, %cst_56 [1] : vector<4x2048xf32> to vector<4xf32>
    %249 = vector.shape_cast %248 : vector<4xf32> to vector<4x1xf32>
    %250 = arith.mulf %247, %247 : vector<4x2048xf32>
    %cst_57 = arith.constant dense<0.000000e+00> : vector<4xf32>
    %251 = vector.multi_reduction <add>, %250, %cst_57 [1] : vector<4x2048xf32> to vector<4xf32>
    %252 = vector.shape_cast %251 : vector<4xf32> to vector<4x1xf32>
    %cst_58 = arith.constant 5.55555569E-4 : f32
    %253 = vector.broadcast %cst_58 : f32 to vector<4x1xf32>
    %254 = arith.mulf %249, %253 : vector<4x1xf32>
    %cst_59 = arith.constant 5.55555569E-4 : f32
    %255 = vector.broadcast %cst_59 : f32 to vector<4x1xf32>
    %256 = arith.mulf %252, %255 : vector<4x1xf32>
    %257 = arith.mulf %254, %254 : vector<4x1xf32>
    %258 = arith.subf %256, %257 : vector<4x1xf32>
    %cst_60 = arith.constant 0.000000e+00 : f32
    %259 = vector.broadcast %cst_60 : f32 to vector<4x1xf32>
    %260 = arith.maximumf %258, %259 : vector<4x1xf32>
    %261 = vector.broadcast %254 : vector<4x1xf32> to vector<4x2048xf32>
    %262 = arith.subf %247, %261 : vector<4x2048xf32>
    %cst_61 = arith.constant 9.99999974E-6 : f32
    %263 = vector.broadcast %cst_61 : f32 to vector<4x1xf32>
    %264 = arith.addf %260, %263 : vector<4x1xf32>
    %265 = math.rsqrt %264 : vector<4x1xf32>
    %266 = vector.broadcast %265 : vector<4x1xf32> to vector<4x2048xf32>
    %267 = arith.mulf %262, %266 : vector<4x2048xf32>
    %c0_62 = arith.constant 0 : index
    %c0_63 = arith.constant 0 : index
    %268 = vector.load %arg12[%c0_62, %c0_63] : memref<4x1xf32, #tpu.memory_space<vmem>>, vector<4x1xf32>
    %269 = vector.broadcast %268 : vector<4x1xf32> to vector<4x2048xf32>
    %270 = arith.mulf %267, %269 : vector<4x2048xf32>
    %c0_64 = arith.constant 0 : index
    %c0_65 = arith.constant 0 : index
    %271 = vector.load %arg13[%c0_64, %c0_65] : memref<4x1xf32, #tpu.memory_space<vmem>>, vector<4x1xf32>
    %272 = vector.broadcast %271 : vector<4x1xf32> to vector<4x2048xf32>
    %273 = arith.addf %270, %272 : vector<4x2048xf32>
    %cst_66 = arith.constant 0.000000e+00 : f32
    %274 = vector.broadcast %cst_66 : f32 to vector<4x2048xf32>
    %275 = arith.maximumf %273, %274 : vector<4x2048xf32>
    %276 = vector.extract_strided_slice %275 {offsets = [0, 0], sizes = [4, 784], strides = [1, 1]} : vector<4x2048xf32> to vector<4x784xf32>
    %277 = vector.extract_strided_slice %275 {offsets = [0, 1024], sizes = [4, 784], strides = [1, 1]} : vector<4x2048xf32> to vector<4x784xf32>
    %278 = tpu.concatenate %276, %277 in 1 : vector<4x784xf32>, vector<4x784xf32> -> vector<4x1568xf32>
    %c0_67 = arith.constant 0 : index
    %c0_68 = arith.constant 0 : index
    %279 = vector.load %arg5[%c0_67, %c0_68] : memref<1x4xbf16, #tpu.memory_space<vmem>>, vector<1x4xbf16>
    %280 = arith.truncf %278 : vector<4x1568xf32> to vector<4x1568xbf16>
    %cst_69 = arith.constant dense<0.000000e+00> : vector<1x1568xf32>
    %281 = tpu.matmul %279, %280, %cst_69 {dimension_numbers = #tpu.dot_dimension_numbers<[1], [0], [0], [1], [0, 0, 1, 1], [], []>} : vector<1x4xbf16>, vector<4x1568xbf16>, vector<1x1568xf32> -> vector<1x1568xf32>
    %282 = math.tanh %281 : vector<1x1568xf32>
    %c0_70 = arith.constant 0 : index
    %c0_71 = arith.constant 0 : index
    %283 = vector.load %arg17[%c0_70, %c0_71] : memref<1x1568xf32, #tpu.memory_space<vmem>>, vector<1x1568xf32>
    tpu.vector_store %arg17[%c0_70, %c0_71], %282 {strides = array<i32>} : memref<1x1568xf32, #tpu.memory_space<vmem>>, vector<1x1568xf32>,
    return
  }
}

</mosaic_0001>

<llo_original>
// kernel: generator_forward.1
$region0: #{generator_forward.1}
  #allocation0 [shape = 'u32[]', space=smem, size = 0x4, offset = 0x4, fixed_abs, tag = 'smem constant byte address 0x4 - core index']
  #allocation1 [shape = 'u32[144,128]{1,0:T(1,128)}', space=vmem, size = 0x12000, scoped, tag = 'internal scratch']
  #allocation2 [shape = 's8[1024,256]{1,0:T(32,128)(4,1)}', space=vmem, size = 0x40000, scoped, tag = 'scratch operand']
  #allocation3 [shape = 's8[1024,1024]{1,0:T(32,128)(4,1)}', space=vmem, size = 0x100000, scoped, tag = 'scratch operand']
  #allocation4 [shape = 's32[2]{0}', space=sflag, size = 0x8, scoped, tag = 'scratch operand']
  #allocation5 [shape = 's32[]', space=sflag, size = 0x4, offset = 0, fixed_abs, tag = 'sflag constant byte address 0x0 - dummy sync flag']
  #allocation6 [shape = 's32[]', space=sflag, size = 0x4, offset = 0, fixed_abs, tag = 'sflag constant byte address 0x0 - dummy sync flag']
  #allocation7 [shape = 's32[]', space=sflag, size = 0x4, offset = 0, fixed_abs, tag = 'sflag constant byte address 0x0 - dummy sync flag']
  #allocation8 [shape = 'u32[]', space=smem, size = 0x4, offset = 0x44, fixed_abs, tag = 'smem constant byte address 0x44 - assertion arg 0']
  #allocation9 [shape = 'u32[]', space=smem, size = 0x4, offset = 0x48, fixed_abs, tag = 'smem constant byte address 0x48 - assertion arg 1']
  %s0 = inlined_call_operand.vmem [shape: f32[16,2], index: 0, kind: input, shape index: {}]
  %s1 = inlined_call_operand.vmem [shape: bf16[512,16], index: 1, kind: input, shape index: {}]
  %s2 = inlined_call_operand.vmem [shape: bf16[256,32], index: 2, kind: input, shape index: {}]
  %s3 = inlined_call_operand.vmem [shape: bf16[128,16], index: 3, kind: input, shape index: {}]
  %s4 = inlined_call_operand.vmem [shape: bf16[16,8], index: 4, kind: input, shape index: {}]
  %s5 = inlined_call_operand.vmem [shape: bf16[1,4], index: 5, kind: input, shape index: {}]
  %s6 = inlined_call_operand.vmem [shape: f32[32,1], index: 6, kind: input, shape index: {}]
  %s7 = inlined_call_operand.vmem [shape: f32[32,1], index: 7, kind: input, shape index: {}]
  %s8 = inlined_call_operand.vmem [shape: f32[16,1], index: 8, kind: input, shape index: {}]
  %s9 = inlined_call_operand.vmem [shape: f32[16,1], index: 9, kind: input, shape index: {}]
  %s10 = inlined_call_operand.vmem [shape: f32[8,1], index: 10, kind: input, shape index: {}]
  %s11 = inlined_call_operand.vmem [shape: f32[8,1], index: 11, kind: input, shape index: {}]
  %s12 = inlined_call_operand.vmem [shape: f32[4,1], index: 12, kind: input, shape index: {}]
  %s13 = inlined_call_operand.vmem [shape: f32[4,1], index: 13, kind: input, shape index: {}]
  %s14 = inlined_call_operand.vmem [shape: s8[256,64], index: 14, kind: input, shape index: {}]
  %s15 = inlined_call_operand.vmem [shape: s8[1024,256], index: 15, kind: input, shape index: {}]
  %s16 = inlined_call_operand.hbm [shape: s8[1024,1024], index: 16, kind: input, shape index: {}]
  %s17 = inlined_call_operand.vmem [shape: f32[1,1568], index: 17, kind: output, shape index: {}]
  %s18 = sld [smem:[#allocation0]]
  $region108: #{generator_forward.1} parent=0
    _
  %s20 = ssub.s32 1, %s18
  %s21 = scalar_select 0, %s20, %s18
  // Predicated region
  $region2: #{generator_forward.1} parent=0 // pred_check
    _
  $region3: #{generator_forward.1} parent=0 // pred_check_branch
    %23 = sbr.rel (0) target = $region5
  $region4: #{generator_forward.1} parent=0 // pred_region
    _
  $region5: #{generator_forward.1} parent=0 // pred_fallthru
    _
  // Predicated region
  $region6: #{generator_forward.1} parent=0 // pred_check
    _
  $region7: #{generator_forward.1} parent=0 // pred_check_branch
    %25 = sbr.rel (0) target = $region9
  $region8: #{generator_forward.1} parent=0 // pred_region
    _
  $region9: #{generator_forward.1} parent=0 // pred_fallthru
    _
  // Predicated region
  $region10: #{generator_forward.1} parent=0 // pred_check
    _
  $region11: #{generator_forward.1} parent=0 // pred_check_branch
    %27 = sbr.rel (0) target = $region13
  $region12: #{generator_forward.1} parent=0 // pred_region
    _
  $region13: #{generator_forward.1} parent=0 // pred_fallthru
    _
  // Predicated region
  $region14: #{generator_forward.1} parent=0 // pred_check
    _
  $region15: #{generator_forward.1} parent=0 // pred_check_branch
    %29 = sbr.rel (0) target = $region17
  $region16: #{generator_forward.1} parent=0 // pred_region
    _
  $region17: #{generator_forward.1} parent=0 // pred_fallthru
    _
  // Predicated region
  $region18: #{generator_forward.1} parent=0 // pred_check
    _
  $region19: #{generator_forward.1} parent=0 // pred_check_branch
    %31 = sbr.rel (0) target = $region21
  $region20: #{generator_forward.1} parent=0 // pred_region
    _
  $region21: #{generator_forward.1} parent=0 // pred_fallthru
    _
  // Predicated region
  $region22: #{generator_forward.1} parent=0 // pred_check
    _
  $region23: #{generator_forward.1} parent=0 // pred_check_branch
    %33 = sbr.rel (0) target = $region25
  $region24: #{generator_forward.1} parent=0 // pred_region
    _
  $region25: #{generator_forward.1} parent=0 // pred_fallthru
    _
  // Predicated region
  $region26: #{generator_forward.1} parent=0 // pred_check
    _
  $region27: #{generator_forward.1} parent=0 // pred_check_branch
    %35 = sbr.rel (0) target = $region29
  $region28: #{generator_forward.1} parent=0 // pred_region
    _
  $region29: #{generator_forward.1} parent=0 // pred_fallthru
    _
  // Predicated region
  $region30: #{generator_forward.1} parent=0 // pred_check
    _
  $region31: #{generator_forward.1} parent=0 // pred_check_branch
    %37 = sbr.rel (0) target = $region33
  $region32: #{generator_forward.1} parent=0 // pred_region
    _
  $region33: #{generator_forward.1} parent=0 // pred_fallthru
    _
  // Predicated region
  $region34: #{generator_forward.1} parent=0 // pred_check
    _
  $region35: #{generator_forward.1} parent=0 // pred_check_branch
    %39 = sbr.rel (0) target = $region37
  $region36: #{generator_forward.1} parent=0 // pred_region
    _
  $region37: #{generator_forward.1} parent=0 // pred_fallthru
    _
  // Predicated region
  $region38: #{generator_forward.1} parent=0 // pred_check
    _
  $region39: #{generator_forward.1} parent=0 // pred_check_branch
    %41 = sbr.rel (0) target = $region41
  $region40: #{generator_forward.1} parent=0 // pred_region
    _
  $region41: #{generator_forward.1} parent=0 // pred_fallthru
    _
  // Predicated region
  $region42: #{generator_forward.1} parent=0 // pred_check
    _
  $region43: #{generator_forward.1} parent=0 // pred_check_branch
    %43 = sbr.rel (0) target = $region45
  $region44: #{generator_forward.1} parent=0 // pred_region
    _
  $region45: #{generator_forward.1} parent=0 // pred_fallthru
    _
  // Predicated region
  $region46: #{generator_forward.1} parent=0 // pred_check
    _
  $region47: #{generator_forward.1} parent=0 // pred_check_branch
    %45 = sbr.rel (0) target = $region49
  $region48: #{generator_forward.1} parent=0 // pred_region
    _
  $region49: #{generator_forward.1} parent=0 // pred_fallthru
    _
  // Predicated region
  $region50: #{generator_forward.1} parent=0 // pred_check
    _
  $region51: #{generator_forward.1} parent=0 // pred_check_branch
    %47 = sbr.rel (0) target = $region53
  $region52: #{generator_forward.1} parent=0 // pred_region
    _
  $region53: #{generator_forward.1} parent=0 // pred_fallthru
    _
  // Predicated region
  $region54: #{generator_forward.1} parent=0 // pred_check
    _
  $region55: #{generator_forward.1} parent=0 // pred_check_branch
    %49 = sbr.rel (0) target = $region57
  $region56: #{generator_forward.1} parent=0 // pred_region
    _
  $region57: #{generator_forward.1} parent=0 // pred_fallthru
    _
  // Predicated region
  $region58: #{generator_forward.1} parent=0 // pred_check
    _
  $region59: #{generator_forward.1} parent=0 // pred_check_branch
    %51 = sbr.rel (0) target = $region61
  $region60: #{generator_forward.1} parent=0 // pred_region
    _
  $region61: #{generator_forward.1} parent=0 // pred_fallthru
    _
  %p54 = scmp.lt.u32.totalorder 512, 8
  %p55 = pneg %p54
  // Predicated region
  $region62: #{generator_forward.1} parent=0 // pred_check
    _
  $region63: #{generator_forward.1} parent=0 // pred_check_branch
    %57 = sbr.rel (%p54) target = $region65
  $region64: #{generator_forward.1} parent=0 // pred_region
    %s72 = sand.u32 512, 7
    %p73 = scmp.eq.s32.totalorder %s72, 0
    // Predicated region
    $region77: #{generator_forward.1} parent=64 // pred_check
      %p74 = pneg %p73
    $region78: #{generator_forward.1} parent=64 // pred_check_branch
      %76 = sbr.rel (%p74) target = $region80
    $region79: #{generator_forward.1} parent=64 // pred_region
      loop: start=0, step=1, limit=1
      $region81: #{generator_forward.1} parent=79 // loop_pre_header
        _
      $region82: #{generator_forward.1} parent=79 // loop_header
        %s78 = sphi 0, %s82
        %p79 = scmp.ge.s32.totalorder %s78, 1
        %s83 = sphi %s15, %s15
        %s84 = sphi [#allocation2], [#allocation2]
      $region83: #{generator_forward.1} parent=79 // loop_header_branch
        %81 = sbr.rel (%p79) target = $region87
      $region84: #{generator_forward.1} parent=79 // loop_body
        %v85 = vld [vmem:[%s83] sm:$0xff]
        %86 = vst [vmem:[%s84] sm:$0xff] %v85
        %v87 = vld [vmem:[%s83 + $0x8] sm:$0xff]
        %88 = vst [vmem:[%s84 + $0x8] sm:$0xff] %v87
        %v89 = vld [vmem:[%s83 + $0x10] sm:$0xff]
        %90 = vst [vmem:[%s84 + $0x10] sm:$0xff] %v89
        %v91 = vld [vmem:[%s83 + $0x18] sm:$0xff]
        %92 = vst [vmem:[%s84 + $0x18] sm:$0xff] %v91
        %v93 = vld [vmem:[%s83 + $0x20] sm:$0xff]
        %94 = vst [vmem:[%s84 + $0x20] sm:$0xff] %v93
        %v95 = vld [vmem:[%s83 + $0x28] sm:$0xff]
        %96 = vst [vmem:[%s84 + $0x28] sm:$0xff] %v95
        %v97 = vld [vmem:[%s83 + $0x30] sm:$0xff]
        %98 = vst [vmem:[%s84 + $0x30] sm:$0xff] %v97
        %v99 = vld [vmem:[%s83 + $0x38] sm:$0xff]
        %100 = vst [vmem:[%s84 + $0x38] sm:$0xff] %v99
        %v101 = vld [vmem:[%s83 + $0x40] sm:$0xff]
        %102 = vst [vmem:[%s84 + $0x40] sm:$0xff] %v101
        %v103 = vld [vmem:[%s83 + $0x48] sm:$0xff]
        %104 = vst [vmem:[%s84 + $0x48] sm:$0xff] %v103
        %v105 = vld [vmem:[%s83 + $0x50] sm:$0xff]
        %106 = vst [vmem:[%s84 + $0x50] sm:$0xff] %v105
        %v107 = vld [vmem:[%s83 + $0x58] sm:$0xff]
        %108 = vst [vmem:[%s84 + $0x58] sm:$0xff] %v107
        %v109 = vld [vmem:[%s83 + $0x60] sm:$0xff]
        %110 = vst [vmem:[%s84 + $0x60] sm:$0xff] %v109
        %v111 = vld [vmem:[%s83 + $0x68] sm:$0xff]
        %112 = vst [vmem:[%s84 + $0x68] sm:$0xff] %v111
        %v113 = vld [vmem:[%s83 + $0x70] sm:$0xff]
        %114 = vst [vmem:[%s84 + $0x70] sm:$0xff] %v113
        %v115 = vld [vmem:[%s83 + $0x78] sm:$0xff]
        %116 = vst [vmem:[%s84 + $0x78] sm:$0xff] %v115
        %v117 = vld [vmem:[%s83 + $0x80] sm:$0xff]
        %118 = vst [vmem:[%s84 + $0x80] sm:$0xff] %v117
        %v119 = vld [vmem:[%s83 + $0x88] sm:$0xff]
        %120 = vst [vmem:[%s84 + $0x88] sm:$0xff] %v119
        %v121 = vld [vmem:[%s83 + $0x90] sm:$0xff]
        %122 = vst [vmem:[%s84 + $0x90] sm:$0xff] %v121
        %v123 = vld [vmem:[%s83 + $0x98] sm:$0xff]
        %124 = vst [vmem:[%s84 + $0x98] sm:$0xff] %v123
        %v125 = vld [vmem:[%s83 + $0xa0] sm:$0xff]
        %126 = vst [vmem:[%s84 + $0xa0] sm:$0xff] %v125
        %v127 = vld [vmem:[%s83 + $0xa8] sm:$0xff]
        %128 = vst [vmem:[%s84 + $0xa8] sm:$0xff] %v127
        %v129 = vld [vmem:[%s83 + $0xb0] sm:$0xff]
        %130 = vst [vmem:[%s84 + $0xb0] sm:$0xff] %v129
        %v131 = vld [vmem:[%s83 + $0xb8] sm:$0xff]
        %132 = vst [vmem:[%s84 + $0xb8] sm:$0xff] %v131
        %v133 = vld [vmem:[%s83 + $0xc0] sm:$0xff]
        %134 = vst [vmem:[%s84 + $0xc0] sm:$0xff] %v133
        %v135 = vld [vmem:[%s83 + $0xc8] sm:$0xff]
        %136 = vst [vmem:[%s84 + $0xc8] sm:$0xff] %v135
        %v137 = vld [vmem:[%s83 + $0xd0] sm:$0xff]
        %138 = vst [vmem:[%s84 + $0xd0] sm:$0xff] %v137
        %v139 = vld [vmem:[%s83 + $0xd8] sm:$0xff]
        %140 = vst [vmem:[%s84 + $0xd8] sm:$0xff] %v139
        %v141 = vld [vmem:[%s83 + $0xe0] sm:$0xff]
        %142 = vst [vmem:[%s84 + $0xe0] sm:$0xff] %v141
        %v143 = vld [vmem:[%s83 + $0xe8] sm:$0xff]
        %144 = vst [vmem:[%s84 + $0xe8] sm:$0xff] %v143
        %v145 = vld [vmem:[%s83 + $0xf0] sm:$0xff]
        %146 = vst [vmem:[%s84 + $0xf0] sm:$0xff] %v145
        %v147 = vld [vmem:[%s83 + $0xf8] sm:$0xff]
        %148 = vst [vmem:[%s84 + $0xf8] sm:$0xff] %v147
        %v149 = vld [vmem:[%s83 + $0x100] sm:$0xff]
        %150 = vst [vmem:[%s84 + $0x100] sm:$0xff] %v149
        %v151 = vld [vmem:[%s83 + $0x108] sm:$0xff]
        %152 = vst [vmem:[%s84 + $0x108] sm:$0xff] %v151
        %v153 = vld [vmem:[%s83 + $0x110] sm:$0xff]
        %154 = vst [vmem:[%s84 + $0x110] sm:$0xff] %v153
        %v155 = vld [vmem:[%s83 + $0x118] sm:$0xff]
        %156 = vst [vmem:[%s84 + $0x118] sm:$0xff] %v155
        %v157 = vld [vmem:[%s83 + $0x120] sm:$0xff]
        %158 = vst [vmem:[%s84 + $0x120] sm:$0xff] %v157
        %v159 = vld [vmem:[%s83 + $0x128] sm:$0xff]
        %160 = vst [vmem:[%s84 + $0x128] sm:$0xff] %v159
        %v161 = vld [vmem:[%s83 + $0x130] sm:$0xff]
        %162 = vst [vmem:[%s84 + $0x130] sm:$0xff] %v161
        %v163 = vld [vmem:[%s83 + $0x138] sm:$0xff]
        %164 = vst [vmem:[%s84 + $0x138] sm:$0xff] %v163
        %v165 = vld [vmem:[%s83 + $0x140] sm:$0xff]
        %166 = vst [vmem:[%s84 + $0x140] sm:$0xff] %v165
        %v167 = vld [vmem:[%s83 + $0x148] sm:$0xff]
        %168 = vst [vmem:[%s84 + $0x148] sm:$0xff] %v167
        %v169 = vld [vmem:[%s83 + $0x150] sm:$0xff]
        %170 = vst [vmem:[%s84 + $0x150] sm:$0xff] %v169
        %v171 = vld [vmem:[%s83 + $0x158] sm:$0xff]
        %172 = vst [vmem:[%s84 + $0x158] sm:$0xff] %v171
        %v173 = vld [vmem:[%s83 + $0x160] sm:$0xff]
        %174 = vst [vmem:[%s84 + $0x160] sm:$0xff] %v173
        %v175 = vld [vmem:[%s83 + $0x168] sm:$0xff]
        %176 = vst [vmem:[%s84 + $0x168] sm:$0xff] %v175
        %v177 = vld [vmem:[%s83 + $0x170] sm:$0xff]
        %178 = vst [vmem:[%s84 + $0x170] sm:$0xff] %v177
        %v179 = vld [vmem:[%s83 + $0x178] sm:$0xff]
        %180 = vst [vmem:[%s84 + $0x178] sm:$0xff] %v179
        %v181 = vld [vmem:[%s83 + $0x180] sm:$0xff]
        %182 = vst [vmem:[%s84 + $0x180] sm:$0xff] %v181
        %v183 = vld [vmem:[%s83 + $0x188] sm:$0xff]
        %184 = vst [vmem:[%s84 + $0x188] sm:$0xff] %v183
        %v185 = vld [vmem:[%s83 + $0x190] sm:$0xff]
        %186 = vst [vmem:[%s84 + $0x190] sm:$0xff] %v185
        %v187 = vld [vmem:[%s83 + $0x198] sm:$0xff]
        %188 = vst [vmem:[%s84 + $0x198] sm:$0xff] %v187
        %v189 = vld [vmem:[%s83 + $0x1a0] sm:$0xff]
        %190 = vst [vmem:[%s84 + $0x1a0] sm:$0xff] %v189
        %v191 = vld [vmem:[%s83 + $0x1a8] sm:$0xff]
        %192 = vst [vmem:[%s84 + $0x1a8] sm:$0xff] %v191
        %v193 = vld [vmem:[%s83 + $0x1b0] sm:$0xff]
        %194 = vst [vmem:[%s84 + $0x1b0] sm:$0xff] %v193
        %v195 = vld [vmem:[%s83 + $0x1b8] sm:$0xff]
        %196 = vst [vmem:[%s84 + $0x1b8] sm:$0xff] %v195
        %v197 = vld [vmem:[%s83 + $0x1c0] sm:$0xff]
        %198 = vst [vmem:[%s84 + $0x1c0] sm:$0xff] %v197
        %v199 = vld [vmem:[%s83 + $0x1c8] sm:$0xff]
        %200 = vst [vmem:[%s84 + $0x1c8] sm:$0xff] %v199
        %v201 = vld [vmem:[%s83 + $0x1d0] sm:$0xff]
        %202 = vst [vmem:[%s84 + $0x1d0] sm:$0xff] %v201
        %v203 = vld [vmem:[%s83 + $0x1d8] sm:$0xff]
        %204 = vst [vmem:[%s84 + $0x1d8] sm:$0xff] %v203
        %v205 = vld [vmem:[%s83 + $0x1e0] sm:$0xff]
        %206 = vst [vmem:[%s84 + $0x1e0] sm:$0xff] %v205
        %v207 = vld [vmem:[%s83 + $0x1e8] sm:$0xff]
        %208 = vst [vmem:[%s84 + $0x1e8] sm:$0xff] %v207
        %v209 = vld [vmem:[%s83 + $0x1f0] sm:$0xff]
        %210 = vst [vmem:[%s84 + $0x1f0] sm:$0xff] %v209
        %v211 = vld [vmem:[%s83 + $0x1f8] sm:$0xff]
        %212 = vst [vmem:[%s84 + $0x1f8] sm:$0xff] %v211
      $region85: #{generator_forward.1} parent=79 // loop_footer
        %s82 = sadd.s32 1, %s78
      $region86: #{generator_forward.1} parent=79 // loop_footer_branch
        %77 = sbr.rel target = $region82
      $region87: #{generator_forward.1} parent=79 // loop_exit
        _
    $region80: #{generator_forward.1} parent=64 // pred_fallthru
      _
    %p213 = pneg %p73
    // Predicated region
    $region88: #{generator_forward.1} parent=64 // pred_check
      _
    $region89: #{generator_forward.1} parent=64 // pred_check_branch
      %215 = sbr.rel (%p73) target = $region91
    $region90: #{generator_forward.1} parent=64 // pred_region
      %s216 = sand.u32 512, 7
    $region91: #{generator_forward.1} parent=64 // pred_fallthru
      _
  $region65: #{generator_forward.1} parent=0 // pred_fallthru
    _
  // Predicated region
  $region66: #{generator_forward.1} parent=0 // pred_check
    %p58 = pneg %p54
  $region67: #{generator_forward.1} parent=0 // pred_check_branch
    %60 = sbr.rel (%p58) target = $region69
  $region68: #{generator_forward.1} parent=0 // pred_region
    %s61 = sshllo.u32 0, 512
    loop: start=0, step=1, limit=1
    $region70: #{generator_forward.1} parent=68 // loop_pre_header
      _
    $region71: #{generator_forward.1} parent=68 // loop_header
      %s63 = sphi 0, %s67
      %p64 = scmp.ge.s32.totalorder %s63, 1
      %s68 = sphi %s15, %s15
      %s69 = sphi [#allocation2], [#allocation2]
    $region72: #{generator_forward.1} parent=68 // loop_header_branch
      %66 = sbr.rel (%p64) target = $region76
    $region73: #{generator_forward.1} parent=68 // loop_body
      %v70 = vld [vmem:[%s68] sm:%s61]
      %71 = vst [vmem:[%s69] sm:%s61] %v70
    $region74: #{generator_forward.1} parent=68 // loop_footer
      %s67 = sadd.s32 1, %s63
    $region75: #{generator_forward.1} parent=68 // loop_footer_branch
      %62 = sbr.rel target = $region71
    $region76: #{generator_forward.1} parent=68 // loop_exit
      _
  $region69: #{generator_forward.1} parent=0 // pred_fallthru
    _
  // Predicated region
  $region92: #{generator_forward.1} parent=0 // pred_check
    _
  $region93: #{generator_forward.1} parent=0 // pred_check_branch
    %219 = sbr.rel (0) target = $region95
  $region94: #{generator_forward.1} parent=0 // pred_region
    %220 = vsyncadd [#allocation4], 8192
  $region95: #{generator_forward.1} parent=0 // pred_fallthru
    _
  %s221 = scalar_lea.sflag [#allocation4], 1
  // Predicated region
  $region96: #{generator_forward.1} parent=0 // pred_check
    _
  $region97: #{generator_forward.1} parent=0 // pred_check_branch
    %223 = sbr.rel target = $region99
  $region98: #{generator_forward.1} parent=0 // pred_region
    %224 = sst [smem:[#allocation8]] [#allocation7]
    %225 = sst [smem:[#allocation9]] [#allocation6]
  $region99: #{generator_forward.1} parent=0 // pred_fallthru
    _
  %227 = shalt.err (0)
  %s229 = sshll.u32 [#allocation3], 4
  %s230 = int_to_ptr.vmem [resolvable:$true] %s229
  %232 = dma.hbm_to_vmem [thread:$0]  %s16, 32768, %s230, %s221
  %v233 = vld [vmem:[%s0] sm:$0xff]
  %v234 = vld [vmem:[%s0 + $0x8] sm:$0xff]
  %v235 = vld [vmem:[%s1] sm:$0xf]
  %v236 = vld [vmem:[%s1 + $0x4] sm:$0xf]
  %v237 = vld [vmem:[%s1 + $0x8] sm:$0xf]
  %v238 = vld [vmem:[%s1 + $0xc] sm:$0xf]
  %v239 = vld [vmem:[%s1 + $0x10] sm:$0xf]
  %v240 = vld [vmem:[%s1 + $0x14] sm:$0xf]
  %v241 = vld [vmem:[%s1 + $0x18] sm:$0xf]
  %v242 = vld [vmem:[%s1 + $0x1c] sm:$0xf]
  %v243 = vld [vmem:[%s1 + $0x20] sm:$0xf]
  %v244 = vld [vmem:[%s1 + $0x24] sm:$0xf]
  %v245 = vld [vmem:[%s1 + $0x28] sm:$0xf]
  %v246 = vld [vmem:[%s1 + $0x2c] sm:$0xf]
  %v247 = vld [vmem:[%s1 + $0x30] sm:$0xf]
  %v248 = vld [vmem:[%s1 + $0x34] sm:$0xf]
  %v249 = vld [vmem:[%s1 + $0x38] sm:$0xf]
  %v250 = vld [vmem:[%s1 + $0x3c] sm:$0xf]
  %v251 = vld [vmem:[%s1 + $0x40] sm:$0xf]
  %v252 = vld [vmem:[%s1 + $0x44] sm:$0xf]
  %v253 = vld [vmem:[%s1 + $0x48] sm:$0xf]
  %v254 = vld [vmem:[%s1 + $0x4c] sm:$0xf]
  %v255 = vld [vmem:[%s1 + $0x50] sm:$0xf]
  %v256 = vld [vmem:[%s1 + $0x54] sm:$0xf]
  %v257 = vld [vmem:[%s1 + $0x58] sm:$0xf]
  %v258 = vld [vmem:[%s1 + $0x5c] sm:$0xf]
  %v259 = vld [vmem:[%s1 + $0x60] sm:$0xf]
  %v260 = vld [vmem:[%s1 + $0x64] sm:$0xf]
  %v261 = vld [vmem:[%s1 + $0x68] sm:$0xf]
  %v262 = vld [vmem:[%s1 + $0x6c] sm:$0xf]
  %v263 = vld [vmem:[%s1 + $0x70] sm:$0xf]
  %v264 = vld [vmem:[%s1 + $0x74] sm:$0xf]
  %v265 = vld [vmem:[%s1 + $0x78] sm:$0xf]
  %v266 = vld [vmem:[%s1 + $0x7c] sm:$0xf]
  %v267 = vld [vmem:[%s1 + $0x80] sm:$0xf]
  %v268 = vld [vmem:[%s1 + $0x84] sm:$0xf]
  %v269 = vld [vmem:[%s1 + $0x88] sm:$0xf]
  %v270 = vld [vmem:[%s1 + $0x8c] sm:$0xf]
  %v271 = vld [vmem:[%s1 + $0x90] sm:$0xf]
  %v272 = vld [vmem:[%s1 + $0x94] sm:$0xf]
  %v273 = vld [vmem:[%s1 + $0x98] sm:$0xf]
  %v274 = vld [vmem:[%s1 + $0x9c] sm:$0xf]
  %v275 = vld [vmem:[%s1 + $0xa0] sm:$0xf]
  %v276 = vld [vmem:[%s1 + $0xa4] sm:$0xf]
  %v277 = vld [vmem:[%s1 + $0xa8] sm:$0xf]
  %v278 = vld [vmem:[%s1 + $0xac] sm:$0xf]
  %v279 = vld [vmem:[%s1 + $0xb0] sm:$0xf]
  %v280 = vld [vmem:[%s1 + $0xb4] sm:$0xf]
  %v281 = vld [vmem:[%s1 + $0xb8] sm:$0xf]
  %v282 = vld [vmem:[%s1 + $0xbc] sm:$0xf]
  %v283 = vld [vmem:[%s1 + $0xc0] sm:$0xf]
  %v284 = vld [vmem:[%s1 + $0xc4] sm:$0xf]
  %v285 = vld [vmem:[%s1 + $0xc8] sm:$0xf]
  %v286 = vld [vmem:[%s1 + $0xcc] sm:$0xf]
  %v287 = vld [vmem:[%s1 + $0xd0] sm:$0xf]
  %v288 = vld [vmem:[%s1 + $0xd4] sm:$0xf]
  %v289 = vld [vmem:[%s1 + $0xd8] sm:$0xf]
  %v290 = vld [vmem:[%s1 + $0xdc] sm:$0xf]
  %v291 = vld [vmem:[%s1 + $0xe0] sm:$0xf]
  %v292 = vld [vmem:[%s1 + $0xe4] sm:$0xf]
  %v293 = vld [vmem:[%s1 + $0xe8] sm:$0xf]
  %v294 = vld [vmem:[%s1 + $0xec] sm:$0xf]
  %v295 = vld [vmem:[%s1 + $0xf0] sm:$0xf]
  %v296 = vld [vmem:[%s1 + $0xf4] sm:$0xf]
  %v297 = vld [vmem:[%s1 + $0xf8] sm:$0xf]
  %v298 = vld [vmem:[%s1 + $0xfc] sm:$0xf]
  %v299 = vpack.c.bf16 %v234, %v233
  %v364 = vunpack.c.l.b16 %v235
  %v365 = vunpack.c.l.b16 %v236
  %v366 = vunpack.c.l.b16 %v237
  %v367 = vunpack.c.l.b16 %v238
  %v368 = vunpack.c.l.b16 %v239
  %v369 = vunpack.c.l.b16 %v240
  %v370 = vunpack.c.l.b16 %v241
  %v371 = vunpack.c.l.b16 %v242
  %v372 = vunpack.c.l.b16 %v243
  %v373 = vunpack.c.l.b16 %v244
  %v374 = vunpack.c.l.b16 %v245
  %v375 = vunpack.c.l.b16 %v246
  %v376 = vunpack.c.l.b16 %v247
  %v377 = vunpack.c.l.b16 %v248
  %v378 = vunpack.c.l.b16 %v249
  %v379 = vunpack.c.l.b16 %v250
  %v380 = vunpack.c.l.b16 %v251
  %v381 = vunpack.c.l.b16 %v252
  %v382 = vunpack.c.l.b16 %v253
  %v383 = vunpack.c.l.b16 %v254
  %v384 = vunpack.c.l.b16 %v255
  %v385 = vunpack.c.l.b16 %v256
  %v386 = vunpack.c.l.b16 %v257
  %v387 = vunpack.c.l.b16 %v258
  %v388 = vunpack.c.l.b16 %v259
  %v389 = vunpack.c.l.b16 %v260
  %v390 = vunpack.c.l.b16 %v261
  %v391 = vunpack.c.l.b16 %v262
  %v392 = vunpack.c.l.b16 %v263
  %v393 = vunpack.c.l.b16 %v264
  %v394 = vunpack.c.l.b16 %v265
  %v395 = vunpack.c.l.b16 %v266
  %v396 = vunpack.c.l.b16 %v267
  %v397 = vunpack.c.l.b16 %v268
  %v398 = vunpack.c.l.b16 %v269
  %v399 = vunpack.c.l.b16 %v270
  %v400 = vunpack.c.l.b16 %v271
  %v401 = vunpack.c.l.b16 %v272
  %v402 = vunpack.c.l.b16 %v273
  %v403 = vunpack.c.l.b16 %v274
  %v404 = vunpack.c.l.b16 %v275
  %v405 = vunpack.c.l.b16 %v276
  %v406 = vunpack.c.l.b16 %v277
  %v407 = vunpack.c.l.b16 %v278
  %v408 = vunpack.c.l.b16 %v279
  %v409 = vunpack.c.l.b16 %v280
  %v410 = vunpack.c.l.b16 %v281
  %v411 = vunpack.c.l.b16 %v282
  %v412 = vunpack.c.l.b16 %v283
  %v413 = vunpack.c.l.b16 %v284
  %v414 = vunpack.c.l.b16 %v285
  %v415 = vunpack.c.l.b16 %v286
  %v416 = vunpack.c.l.b16 %v287
  %v417 = vunpack.c.l.b16 %v288
  %v418 = vunpack.c.l.b16 %v289
  %v419 = vunpack.c.l.b16 %v290
  %v420 = vunpack.c.l.b16 %v291
  %v421 = vunpack.c.l.b16 %v292
  %v422 = vunpack.c.l.b16 %v293
  %v423 = vunpack.c.l.b16 %v294
  %v424 = vunpack.c.l.b16 %v295
  %v425 = vunpack.c.l.b16 %v296
  %v426 = vunpack.c.l.b16 %v297
  %v427 = vunpack.c.l.b16 %v298
  %v428 = vpack.c.b16 %v365, %v364
  %v429 = vpack.c.b16 %v367, %v366
  %v430 = vpack.c.b16 %v369, %v368
  %v431 = vpack.c.b16 %v371, %v370
  %v432 = vpack.c.b16 %v373, %v372
  %v433 = vpack.c.b16 %v375, %v374
  %v434 = vpack.c.b16 %v377, %v376
  %v435 = vpack.c.b16 %v379, %v378
  %v436 = vpack.c.b16 %v381, %v380
  %v437 = vpack.c.b16 %v383, %v382
  %v438 = vpack.c.b16 %v385, %v384
  %v439 = vpack.c.b16 %v387, %v386
  %v440 = vpack.c.b16 %v389, %v388
  %v441 = vpack.c.b16 %v391, %v390
  %v442 = vpack.c.b16 %v393, %v392
  %v443 = vpack.c.b16 %v395, %v394
  %v444 = vpack.c.b16 %v397, %v396
  %v445 = vpack.c.b16 %v399, %v398
  %v446 = vpack.c.b16 %v401, %v400
  %v447 = vpack.c.b16 %v403, %v402
  %v448 = vpack.c.b16 %v405, %v404
  %v449 = vpack.c.b16 %v407, %v406
  %v450 = vpack.c.b16 %v409, %v408
  %v451 = vpack.c.b16 %v411, %v410
  %v452 = vpack.c.b16 %v413, %v412
  %v453 = vpack.c.b16 %v415, %v414
  %v454 = vpack.c.b16 %v417, %v416
  %v455 = vpack.c.b16 %v419, %v418
  %v456 = vpack.c.b16 %v421, %v420
  %v457 = vpack.c.b16 %v423, %v422
  %v458 = vpack.c.b16 %v425, %v424
  %v459 = vpack.c.b16 %v427, %v426
  %vm460 = vcmask 130048
  %v462 = vsel %vm460, %v428, 0
  %v465 = vsel %vm460, %v429, 0
  %v468 = vsel %vm460, %v430, 0
  %v471 = vsel %vm460, %v431, 0
  %v474 = vsel %vm460, %v432, 0
  %v477 = vsel %vm460, %v433, 0
  %v480 = vsel %vm460, %v434, 0
  %v483 = vsel %vm460, %v435, 0
  %v486 = vsel %vm460, %v436, 0
  %v489 = vsel %vm460, %v437, 0
  %v492 = vsel %vm460, %v438, 0
  %v495 = vsel %vm460, %v439, 0
  %v498 = vsel %vm460, %v440, 0
  %v501 = vsel %vm460, %v441, 0
  %v504 = vsel %vm460, %v442, 0
  %v507 = vsel %vm460, %v443, 0
  %v510 = vsel %vm460, %v444, 0
  %v513 = vsel %vm460, %v445, 0
  %v516 = vsel %vm460, %v446, 0
  %v519 = vsel %vm460, %v447, 0
  %v522 = vsel %vm460, %v448, 0
  %v525 = vsel %vm460, %v449, 0
  %v528 = vsel %vm460, %v450, 0
  %v531 = vsel %vm460, %v451, 0
  %v534 = vsel %vm460, %v452, 0
  %v537 = vsel %vm460, %v453, 0
  %v540 = vsel %vm460, %v454, 0
  %v543 = vsel %vm460, %v455, 0
  %v546 = vsel %vm460, %v456, 0
  %v549 = vsel %vm460, %v457, 0
  %v552 = vsel %vm460, %v458, 0
  %v555 = vsel %vm460, %v459, 0
  %557 = vmatprep.subr.bf16.mxu0 0
  %558 = vmatpush1.bf16.msra.mxu0 %v299
  %559 = vmatprep.subr.bf16.mxu0 0
  %560 = vmatpush1.bf16.msra.mxu0 0
  %561 = vmatprep.subr.bf16.mxu0 0
  %562 = vmatpush1.bf16.msra.mxu0 0
  %563 = vmatprep.subr.bf16.mxu0 0
  %564 = vmatpush1.bf16.msra.mxu0 0
  %565 = vmatprep.subr.bf16.mxu0 0
  %566 = vmatpush1.bf16.msra.mxu0 0
  %567 = vmatprep.subr.bf16.mxu0 0
  %568 = vmatpush1.bf16.msra.mxu0 0
  %569 = vmatprep.subr.bf16.mxu0 0
  %570 = vmatpush1.bf16.msra.mxu0 0
  %571 = vmatprep.subr.bf16.mxu0 0
  %572 = vmatpush1.bf16.msra.mxu0 0
  %573 = vmatprep.subr.bf16.mxu0 0
  %574 = vmatpush1.bf16.msra.mxu0 0
  %575 = vmatprep.subr.bf16.mxu0 0
  %576 = vmatpush1.bf16.msra.mxu0 0
  %577 = vmatprep.subr.bf16.mxu0 0
  %578 = vmatpush1.bf16.msra.mxu0 0
  %579 = vmatprep.subr.bf16.mxu0 0
  %580 = vmatpush1.bf16.msra.mxu0 0
  %581 = vmatprep.subr.bf16.mxu0 0
  %582 = vmatpush1.bf16.msra.mxu0 0
  %583 = vmatprep.subr.bf16.mxu0 0
  %584 = vmatpush1.bf16.msra.mxu0 0
  %585 = vmatprep.subr.bf16.mxu0 0
  %586 = vmatpush1.bf16.msra.mxu0 0
  %587 = vmatprep.subr.bf16.mxu0 0
  %588 = vmatpush1.bf16.msra.mxu0 0
  %589 = vmatprep.mubr.bf16.mxu0 0
  %590 = vmatmul.mubr.bf16.gmra.mrb[0].mxu0 %v462
  %v591 = vpop.f32.mrb[0].mxu0
  %v592 = vadd.f32 0.0, %v591
  %v593 = vpop.f32.mrb[0].mxu0
  %v594 = vpop.f32.mrb[0].mxu0
  %v595 = vadd.f32 0.0, %v594
  %v596 = vpop.f32.mrb[0].mxu0
  %597 = vmatprep.mubr.bf16.mxu0 0
  %598 = vmatmul.mubr.bf16.gmra.mrb[0].mxu0 %v465
  %v599 = vpop.f32.mrb[0].mxu0
  %v600 = vadd.f32 0.0, %v599
  %v601 = vpop.f32.mrb[0].mxu0
  %v602 = vpop.f32.mrb[0].mxu0
  %v603 = vadd.f32 0.0, %v602
  %v604 = vpop.f32.mrb[0].mxu0
  %605 = vmatprep.mubr.bf16.mxu0 0
  %606 = vmatmul.mubr.bf16.gmra.mrb[0].mxu0 %v468
  %v607 = vpop.f32.mrb[0].mxu0
  %v608 = vadd.f32 0.0, %v607
  %v609 = vpop.f32.mrb[0].mxu0
  %v610 = vpop.f32.mrb[0].mxu0
  %v611 = vadd.f32 0.0, %v610
  %v612 = vpop.f32.mrb[0].mxu0
  %613 = vmatprep.mubr.bf16.mxu0 0
  %614 = vmatmul.mubr.bf16.gmra.mrb[0].mxu0 %v471
  %v615 = vpop.f32.mrb[0].mxu0
  %v616 = vadd.f32 0.0, %v615
  %v617 = vpop.f32.mrb[0].mxu0
  %v618 = vpop.f32.mrb[0].mxu0
  %v619 = vadd.f32 0.0, %v618
  %v620 = vpop.f32.mrb[0].mxu0
  %621 = vmatprep.mubr.bf16.mxu0 0
  %622 = vmatmul.mubr.bf16.gmra.mrb[0].mxu0 %v474
  %v623 = vpop.f32.mrb[0].mxu0
  %v624 = vadd.f32 0.0, %v623
  %v625 = vpop.f32.mrb[0].mxu0
  %v626 = vpop.f32.mrb[0].mxu0
  %v627 = vadd.f32 0.0, %v626
  %v628 = vpop.f32.mrb[0].mxu0
  %629 = vmatprep.mubr.bf16.mxu0 0
  %630 = vmatmul.mubr.bf16.gmra.mrb[0].mxu0 %v477
  %v631 = vpop.f32.mrb[0].mxu0
  %v632 = vadd.f32 0.0, %v631
  %v633 = vpop.f32.mrb[0].mxu0
  %v634 = vpop.f32.mrb[0].mxu0
  %v635 = vadd.f32 0.0, %v634
  %v636 = vpop.f32.mrb[0].mxu0
  %637 = vmatprep.mubr.bf16.mxu0 0
  %638 = vmatmul.mubr.bf16.gmra.mrb[0].mxu0 %v480
  %v639 = vpop.f32.mrb[0].mxu0
  %v640 = vadd.f32 0.0, %v639
  %v641 = vpop.f32.mrb[0].mxu0
  %v642 = vpop.f32.mrb[0].mxu0
  %v643 = vadd.f32 0.0, %v642
  %v644 = vpop.f32.mrb[0].mxu0
  %645 = vmatprep.mubr.bf16.mxu0 0
  %646 = vmatmul.mubr.bf16.gmra.mrb[0].mxu0 %v483
  %v647 = vpop.f32.mrb[0].mxu0
  %v648 = vadd.f32 0.0, %v647
  %v649 = vpop.f32.mrb[0].mxu0
  %v650 = vpop.f32.mrb[0].mxu0
  %v651 = vadd.f32 0.0, %v650
  %v652 = vpop.f32.mrb[0].mxu0
  %653 = vmatprep.mubr.bf16.mxu0 0
  %654 = vmatmul.mubr.bf16.gmra.mrb[0].mxu0 %v486
  %v655 = vpop.f32.mrb[0].mxu0
  %v656 = vadd.f32 0.0, %v655
  %v657 = vpop.f32.mrb[0].mxu0
  %v658 = vpop.f32.mrb[0].mxu0
  %v659 = vadd.f32 0.0, %v658
  %v660 = vpop.f32.mrb[0].mxu0
  %661 = vmatprep.mubr.bf16.mxu0 0
  %662 = vmatmul.mubr.bf16.gmra.mrb[0].mxu0 %v489
  %v663 = vpop.f32.mrb[0].mxu0
  %v664 = vadd.f32 0.0, %v663
  %v665 = vpop.f32.mrb[0].mxu0
  %v666 = vpop.f32.mrb[0].mxu0
  %v667 = vadd.f32 0.0, %v666
  %v668 = vpop.f32.mrb[0].mxu0
  %669 = vmatprep.mubr.bf16.mxu0 0
  %670 = vmatmul.mubr.bf16.gmra.mrb[0].mxu0 %v492
  %v671 = vpop.f32.mrb[0].mxu0
  %v672 = vadd.f32 0.0, %v671
  %v673 = vpop.f32.mrb[0].mxu0
  %v674 = vpop.f32.mrb[0].mxu0
  %v675 = vadd.f32 0.0, %v674
  %v676 = vpop.f32.mrb[0].mxu0
  %677 = vmatprep.mubr.bf16.mxu0 0
  %678 = vmatmul.mubr.bf16.gmra.mrb[0].mxu0 %v495
  %v679 = vpop.f32.mrb[0].mxu0
  %v680 = vadd.f32 0.0, %v679
  %v681 = vpop.f32.mrb[0].mxu0
  %v682 = vpop.f32.mrb[0].mxu0
  %v683 = vadd.f32 0.0, %v682
  %v684 = vpop.f32.mrb[0].mxu0
  %685 = vmatprep.mubr.bf16.mxu0 0
  %686 = vmatmul.mubr.bf16.gmra.mrb[0].mxu0 %v498
  %v687 = vpop.f32.mrb[0].mxu0
  %v688 = vadd.f32 0.0, %v687
  %v689 = vpop.f32.mrb[0].mxu0
  %v690 = vpop.f32.mrb[0].mxu0
  %v691 = vadd.f32 0.0, %v690
  %v692 = vpop.f32.mrb[0].mxu0
  %693 = vmatprep.mubr.bf16.mxu0 0
  %694 = vmatmul.mubr.bf16.gmra.mrb[0].mxu0 %v501
  %v695 = vpop.f32.mrb[0].mxu0
  %v696 = vadd.f32 0.0, %v695
  %v697 = vpop.f32.mrb[0].mxu0
  %v698 = vpop.f32.mrb[0].mxu0
  %v699 = vadd.f32 0.0, %v698
  %v700 = vpop.f32.mrb[0].mxu0
  %701 = vmatprep.mubr.bf16.mxu0 0
  %702 = vmatmul.mubr.bf16.gmra.mrb[0].mxu0 %v504
  %v703 = vpop.f32.mrb[0].mxu0
  %v704 = vadd.f32 0.0, %v703
  %v705 = vpop.f32.mrb[0].mxu0
  %v706 = vpop.f32.mrb[0].mxu0
  %v707 = vadd.f32 0.0, %v706
  %v708 = vpop.f32.mrb[0].mxu0
  %709 = vmatprep.mubr.bf16.mxu0 0
  %710 = vmatmul.mubr.bf16.gmra.mrb[0].mxu0 %v507
  %v711 = vpop.f32.mrb[0].mxu0
  %v712 = vadd.f32 0.0, %v711
  %v713 = vpop.f32.mrb[0].mxu0
  %v714 = vpop.f32.mrb[0].mxu0
  %v715 = vadd.f32 0.0, %v714
  %v716 = vpop.f32.mrb[0].mxu0
  %717 = vmatprep.mubr.bf16.mxu0 0
  %718 = vmatmul.mubr.bf16.gmra.mrb[0].mxu0 %v510
  %v719 = vpop.f32.mrb[0].mxu0
  %v720 = vadd.f32 0.0, %v719
  %v721 = vpop.f32.mrb[0].mxu0
  %v722 = vpop.f32.mrb[0].mxu0
  %v723 = vadd.f32 0.0, %v722
  %v724 = vpop.f32.mrb[0].mxu0
  %725 = vmatprep.mubr.bf16.mxu0 0
  %726 = vmatmul.mubr.bf16.gmra.mrb[0].mxu0 %v513
  %v727 = vpop.f32.mrb[0].mxu0
  %v728 = vadd.f32 0.0, %v727
  %v729 = vpop.f32.mrb[0].mxu0
  %v730 = vpop.f32.mrb[0].mxu0
  %v731 = vadd.f32 0.0, %v730
  %v732 = vpop.f32.mrb[0].mxu0
  %733 = vmatprep.mubr.bf16.mxu0 0
  %734 = vmatmul.mubr.bf16.gmra.mrb[0].mxu0 %v516
  %v735 = vpop.f32.mrb[0].mxu0
  %v736 = vadd.f32 0.0, %v735
  %v737 = vpop.f32.mrb[0].mxu0
  %v738 = vpop.f32.mrb[0].mxu0
  %v739 = vadd.f32 0.0, %v738
  %v740 = vpop.f32.mrb[0].mxu0
  %741 = vmatprep.mubr.bf16.mxu0 0
  %742 = vmatmul.mubr.bf16.gmra.mrb[0].mxu0 %v519
  %v743 = vpop.f32.mrb[0].mxu0
  %v744 = vadd.f32 0.0, %v743
  %v745 = vpop.f32.mrb[0].mxu0
  %v746 = vpop.f32.mrb[0].mxu0
  %v747 = vadd.f32 0.0, %v746
  %v748 = vpop.f32.mrb[0].mxu0
  %749 = vmatprep.mubr.bf16.mxu0 0
  %750 = vmatmul.mubr.bf16.gmra.mrb[0].mxu0 %v522
  %v751 = vpop.f32.mrb[0].mxu0
  %v752 = vadd.f32 0.0, %v751
  %v753 = vpop.f32.mrb[0].mxu0
  %v754 = vpop.f32.mrb[0].mxu0
  %v755 = vadd.f32 0.0, %v754
  %v756 = vpop.f32.mrb[0].mxu0
  %757 = vmatprep.mubr.bf16.mxu0 0
  %758 = vmatmul.mubr.bf16.gmra.mrb[0].mxu0 %v525
  %v759 = vpop.f32.mrb[0].mxu0
  %v760 = vadd.f32 0.0, %v759
  %v761 = vpop.f32.mrb[0].mxu0
  %v762 = vpop.f32.mrb[0].mxu0
  %v763 = vadd.f32 0.0, %v762
  %v764 = vpop.f32.mrb[0].mxu0
  %765 = vmatprep.mubr.bf16.mxu0 0
  %766 = vmatmul.mubr.bf16.gmra.mrb[0].mxu0 %v528
  %v767 = vpop.f32.mrb[0].mxu0
  %v768 = vadd.f32 0.0, %v767
  %v769 = vpop.f32.mrb[0].mxu0
  %v770 = vpop.f32.mrb[0].mxu0
  %v771 = vadd.f32 0.0, %v770
  %v772 = vpop.f32.mrb[0].mxu0
  %773 = vmatprep.mubr.bf16.mxu0 0
  %774 = vmatmul.mubr.bf16.gmra.mrb[0].mxu0 %v531
  %v775 = vpop.f32.mrb[0].mxu0
  %v776 = vadd.f32 0.0, %v775
  %v777 = vpop.f32.mrb[0].mxu0
  %v778 = vpop.f32.mrb[0].mxu0
  %v779 = vadd.f32 0.0, %v778
  %v780 = vpop.f32.mrb[0].mxu0
  %781 = vmatprep.mubr.bf16.mxu0 0
  %782 = vmatmul.mubr.bf16.gmra.mrb[0].mxu0 %v534
  %v783 = vpop.f32.mrb[0].mxu0
  %v784 = vadd.f32 0.0, %v783
  %v785 = vpop.f32.mrb[0].mxu0
  %v786 = vpop.f32.mrb[0].mxu0
  %v787 = vadd.f32 0.0, %v786
  %v788 = vpop.f32.mrb[0].mxu0
  %789 = vmatprep.mubr.bf16.mxu0 0
  %790 = vmatmul.mubr.bf16.gmra.mrb[0].mxu0 %v537
  %v791 = vpop.f32.mrb[0].mxu0
  %v792 = vadd.f32 0.0, %v791
  %v793 = vpop.f32.mrb[0].mxu0
  %v794 = vpop.f32.mrb[0].mxu0
  %v795 = vadd.f32 0.0, %v794
  %v796 = vpop.f32.mrb[0].mxu0
  %797 = vmatprep.mubr.bf16.mxu0 0
  %798 = vmatmul.mubr.bf16.gmra.mrb[0].mxu0 %v540
  %v799 = vpop.f32.mrb[0].mxu0
  %v800 = vadd.f32 0.0, %v799
  %v801 = vpop.f32.mrb[0].mxu0
  %v802 = vpop.f32.mrb[0].mxu0
  %v803 = vadd.f32 0.0, %v802
  %v804 = vpop.f32.mrb[0].mxu0
  %805 = vmatprep.mubr.bf16.mxu0 0
  %806 = vmatmul.mubr.bf16.gmra.mrb[0].mxu0 %v543
  %v807 = vpop.f32.mrb[0].mxu0
  %v808 = vadd.f32 0.0, %v807
  %v809 = vpop.f32.mrb[0].mxu0
  %v810 = vpop.f32.mrb[0].mxu0
  %v811 = vadd.f32 0.0, %v810
  %v812 = vpop.f32.mrb[0].mxu0
  %813 = vmatprep.mubr.bf16.mxu0 0
  %814 = vmatmul.mubr.bf16.gmra.mrb[0].mxu0 %v546
  %v815 = vpop.f32.mrb[0].mxu0
  %v816 = vadd.f32 0.0, %v815
  %v817 = vpop.f32.mrb[0].mxu0
  %v818 = vpop.f32.mrb[0].mxu0
  %v819 = vadd.f32 0.0, %v818
  %v820 = vpop.f32.mrb[0].mxu0
  %821 = vmatprep.mubr.bf16.mxu0 0
  %822 = vmatmul.mubr.bf16.gmra.mrb[0].mxu0 %v549
  %v823 = vpop.f32.mrb[0].mxu0
  %v824 = vadd.f32 0.0, %v823
  %v825 = vpop.f32.mrb[0].mxu0
  %v826 = vpop.f32.mrb[0].mxu0
  %v827 = vadd.f32 0.0, %v826
  %v828 = vpop.f32.mrb[0].mxu0
  %829 = vmatprep.mubr.bf16.mxu0 0
  %830 = vmatmul.mubr.bf16.gmra.mrb[0].mxu0 %v552
  %v831 = vpop.f32.mrb[0].mxu0
  %v832 = vadd.f32 0.0, %v831
  %v833 = vpop.f32.mrb[0].mxu0
  %v834 = vpop.f32.mrb[0].mxu0
  %v835 = vadd.f32 0.0, %v834
  %v836 = vpop.f32.mrb[0].mxu0
  %837 = vmatprep.mubr.bf16.mxu0 0
  %838 = vmatmul.mubr.bf16.gmra.mrb[0].mxu0 %v555
  %v839 = vpop.f32.mrb[0].mxu0
  %v840 = vadd.f32 0.0, %v839
  %v841 = vpop.f32.mrb[0].mxu0
  %v842 = vpop.f32.mrb[0].mxu0
  %v843 = vadd.f32 0.0, %v842
  %v844 = vpop.f32.mrb[0].mxu0
  %845 = vdwg.mxu0
  %850 = vrot.lane.b32.xlu0 %v608, 1
  %v851 = vpop.permute.xlu0 %850
  %852 = vrot.lane.b32.xlu0 %v611, 1
  %v853 = vpop.permute.xlu0 %852
  %854 = vrot.lane.b32.xlu0 %v616, 1
  %v855 = vpop.permute.xlu0 %854
  %856 = vrot.lane.b32.xlu0 %v619, 1
  %v857 = vpop.permute.xlu0 %856
  %866 = vrot.lane.b32.xlu0 %v624, 2
  %v867 = vpop.permute.xlu0 %866
  %868 = vrot.lane.b32.xlu0 %v627, 2
  %v869 = vpop.permute.xlu0 %868
  %870 = vrot.lane.b32.xlu0 %v632, 2
  %v871 = vpop.permute.xlu0 %870
  %872 = vrot.lane.b32.xlu0 %v635, 2
  %v873 = vpop.permute.xlu0 %872
  %882 = vrot.lane.b32.xlu0 %v640, 3
  %v883 = vpop.permute.xlu0 %882
  %884 = vrot.lane.b32.xlu0 %v643, 3
  %v885 = vpop.permute.xlu0 %884
  %886 = vrot.lane.b32.xlu0 %v648, 3
  %v887 = vpop.permute.xlu0 %886
  %888 = vrot.lane.b32.xlu0 %v651, 3
  %v889 = vpop.permute.xlu0 %888
  %898 = vrot.lane.b32.xlu0 %v656, 4
  %v899 = vpop.permute.xlu0 %898
  %900 = vrot.lane.b32.xlu0 %v659, 4
  %v901 = vpop.permute.xlu0 %900
  %902 = vrot.lane.b32.xlu0 %v664, 4
  %v903 = vpop.permute.xlu0 %902
  %904 = vrot.lane.b32.xlu0 %v667, 4
  %v905 = vpop.permute.xlu0 %904
  %914 = vrot.lane.b32.xlu0 %v672, 5
  %v915 = vpop.permute.xlu0 %914
  %916 = vrot.lane.b32.xlu0 %v675, 5
  %v917 = vpop.permute.xlu0 %916
  %918 = vrot.lane.b32.xlu0 %v680, 5
  %v919 = vpop.permute.xlu0 %918
  %920 = vrot.lane.b32.xlu0 %v683, 5
  %v921 = vpop.permute.xlu0 %920
  %930 = vrot.lane.b32.xlu0 %v688, 6
  %v931 = vpop.permute.xlu0 %930
  %932 = vrot.lane.b32.xlu0 %v691, 6
  %v933 = vpop.permute.xlu0 %932
  %934 = vrot.lane.b32.xlu0 %v696, 6
  %v935 = vpop.permute.xlu0 %934
  %936 = vrot.lane.b32.xlu0 %v699, 6
  %v937 = vpop.permute.xlu0 %936
  %946 = vrot.lane.b32.xlu0 %v704, 7
  %v947 = vpop.permute.xlu0 %946
  %948 = vrot.lane.b32.xlu0 %v707, 7
  %v949 = vpop.permute.xlu0 %948
  %950 = vrot.lane.b32.xlu0 %v712, 7
  %v951 = vpop.permute.xlu0 %950
  %952 = vrot.lane.b32.xlu0 %v715, 7
  %v953 = vpop.permute.xlu0 %952
  %962 = vrot.lane.b32.xlu0 %v720, 8
  %v963 = vpop.permute.xlu0 %962
  %964 = vrot.lane.b32.xlu0 %v723, 8
  %v965 = vpop.permute.xlu0 %964
  %966 = vrot.lane.b32.xlu0 %v728, 8
  %v967 = vpop.permute.xlu0 %966
  %968 = vrot.lane.b32.xlu0 %v731, 8
  %v969 = vpop.permute.xlu0 %968
  %978 = vrot.lane.b32.xlu0 %v736, 9
  %v979 = vpop.permute.xlu0 %978
  %980 = vrot.lane.b32.xlu0 %v739, 9
  %v981 = vpop.permute.xlu0 %980
  %982 = vrot.lane.b32.xlu0 %v744, 9
  %v983 = vpop.permute.xlu0 %982
  %984 = vrot.lane.b32.xlu0 %v747, 9
  %v985 = vpop.permute.xlu0 %984
  %994 = vrot.lane.b32.xlu0 %v752, 10
  %v995 = vpop.permute.xlu0 %994
  %996 = vrot.lane.b32.xlu0 %v755, 10
  %v997 = vpop.permute.xlu0 %996
  %998 = vrot.lane.b32.xlu0 %v760, 10
  %v999 = vpop.permute.xlu0 %998
  %1000 = vrot.lane.b32.xlu0 %v763, 10
  %v1001 = vpop.permute.xlu0 %1000
  %1010 = vrot.lane.b32.xlu0 %v768, 11
  %v1011 = vpop.permute.xlu0 %1010
  %1012 = vrot.lane.b32.xlu0 %v771, 11
  %v1013 = vpop.permute.xlu0 %1012
  %1014 = vrot.lane.b32.xlu0 %v776, 11
  %v1015 = vpop.permute.xlu0 %1014
  %1016 = vrot.lane.b32.xlu0 %v779, 11
  %v1017 = vpop.permute.xlu0 %1016
  %1026 = vrot.lane.b32.xlu0 %v784, 12
  %v1027 = vpop.permute.xlu0 %1026
  %1028 = vrot.lane.b32.xlu0 %v787, 12
  %v1029 = vpop.permute.xlu0 %1028
  %1030 = vrot.lane.b32.xlu0 %v792, 12
  %v1031 = vpop.permute.xlu0 %1030
  %1032 = vrot.lane.b32.xlu0 %v795, 12
  %v1033 = vpop.permute.xlu0 %1032
  %1042 = vrot.lane.b32.xlu0 %v800, 13
  %v1043 = vpop.permute.xlu0 %1042
  %1044 = vrot.lane.b32.xlu0 %v803, 13
  %v1045 = vpop.permute.xlu0 %1044
  %1046 = vrot.lane.b32.xlu0 %v808, 13
  %v1047 = vpop.permute.xlu0 %1046
  %1048 = vrot.lane.b32.xlu0 %v811, 13
  %v1049 = vpop.permute.xlu0 %1048
  %1058 = vrot.lane.b32.xlu0 %v816, 14
  %v1059 = vpop.permute.xlu0 %1058
  %1060 = vrot.lane.b32.xlu0 %v819, 14
  %v1061 = vpop.permute.xlu0 %1060
  %1062 = vrot.lane.b32.xlu0 %v824, 14
  %v1063 = vpop.permute.xlu0 %1062
  %1064 = vrot.lane.b32.xlu0 %v827, 14
  %v1065 = vpop.permute.xlu0 %1064
  %1074 = vrot.lane.b32.xlu0 %v832, 15
  %v1075 = vpop.permute.xlu0 %1074
  %1076 = vrot.lane.b32.xlu0 %v835, 15
  %v1077 = vpop.permute.xlu0 %1076
  %1078 = vrot.lane.b32.xlu0 %v840, 15
  %v1079 = vpop.permute.xlu0 %1078
  %1080 = vrot.lane.b32.xlu0 %v843, 15
  %v1081 = vpop.permute.xlu0 %1080
  %vm1086 = vcmask 7168
  %v1087 = vsel %vm1086, %v592, %v851
  %v1088 = vsel %vm1086, %v595, %v853
  %v1089 = vsel %vm1086, %v600, %v855
  %v1090 = vsel %vm1086, %v603, %v857
  %vm1091 = vcmask 15360
  %v1092 = vsel %vm1091, %v1087, %v867
  %v1093 = vsel %vm1091, %v1088, %v869
  %v1094 = vsel %vm1091, %v1089, %v871
  %v1095 = vsel %vm1091, %v1090, %v873
  %vm1096 = vcmask 23552
  %v1097 = vsel %vm1096, %v1092, %v883
  %v1098 = vsel %vm1096, %v1093, %v885
  %v1099 = vsel %vm1096, %v1094, %v887
  %v1100 = vsel %vm1096, %v1095, %v889
  %vm1101 = vcmask 31744
  %v1102 = vsel %vm1101, %v1097, %v899
  %v1103 = vsel %vm1101, %v1098, %v901
  %v1104 = vsel %vm1101, %v1099, %v903
  %v1105 = vsel %vm1101, %v1100, %v905
  %vm1106 = vcmask 39936
  %v1107 = vsel %vm1106, %v1102, %v915
  %v1108 = vsel %vm1106, %v1103, %v917
  %v1109 = vsel %vm1106, %v1104, %v919
  %v1110 = vsel %vm1106, %v1105, %v921
  %vm1111 = vcmask 48128
  %v1112 = vsel %vm1111, %v1107, %v931
  %v1113 = vsel %vm1111, %v1108, %v933
  %v1114 = vsel %vm1111, %v1109, %v935
  %v1115 = vsel %vm1111, %v1110, %v937
  %vm1116 = vcmask 56320
  %v1117 = vsel %vm1116, %v1112, %v947
  %v1118 = vsel %vm1116, %v1113, %v949
  %v1119 = vsel %vm1116, %v1114, %v951
  %v1120 = vsel %vm1116, %v1115, %v953
  %vm1121 = vcmask 64512
  %v1122 = vsel %vm1121, %v1117, %v963
  %v1123 = vsel %vm1121, %v1118, %v965
  %v1124 = vsel %vm1121, %v1119, %v967
  %v1125 = vsel %vm1121, %v1120, %v969
  %vm1126 = vcmask 72704
  %v1127 = vsel %vm1126, %v1122, %v979
  %v1128 = vsel %vm1126, %v1123, %v981
  %v1129 = vsel %vm1126, %v1124, %v983
  %v1130 = vsel %vm1126, %v1125, %v985
  %vm1131 = vcmask 80896
  %v1132 = vsel %vm1131, %v1127, %v995
  %v1133 = vsel %vm1131, %v1128, %v997
  %v1134 = vsel %vm1131, %v1129, %v999
  %v1135 = vsel %vm1131, %v1130, %v1001
  %vm1136 = vcmask 89088
  %v1137 = vsel %vm1136, %v1132, %v1011
  %v1138 = vsel %vm1136, %v1133, %v1013
  %v1139 = vsel %vm1136, %v1134, %v1015
  %v1140 = vsel %vm1136, %v1135, %v1017
  %vm1141 = vcmask 97280
  %v1142 = vsel %vm1141, %v1137, %v1027
  %v1143 = vsel %vm1141, %v1138, %v1029
  %v1144 = vsel %vm1141, %v1139, %v1031
  %v1145 = vsel %vm1141, %v1140, %v1033
  %vm1146 = vcmask 105472
  %v1147 = vsel %vm1146, %v1142, %v1043
  %v1148 = vsel %vm1146, %v1143, %v1045
  %v1149 = vsel %vm1146, %v1144, %v1047
  %v1150 = vsel %vm1146, %v1145, %v1049
  %vm1151 = vcmask 113664
  %v1152 = vsel %vm1151, %v1147, %v1059
  %v1153 = vsel %vm1151, %v1148, %v1061
  %v1154 = vsel %vm1151, %v1149, %v1063
  %v1155 = vsel %vm1151, %v1150, %v1065
  %vm1156 = vcmask 121856
  %v1157 = vsel %vm1156, %v1152, %v1075
  %v1158 = vsel %vm1156, %v1153, %v1077
  %v1159 = vsel %vm1156, %v1154, %v1079
  %v1160 = vsel %vm1156, %v1155, %v1081
  %1165 = vrot.lane.b32.xlu0 %v592, 127
  %v1166 = vpop.permute.xlu0 %1165
  %1167 = vrot.lane.b32.xlu0 %v595, 127
  %v1168 = vpop.permute.xlu0 %1167
  %1169 = vrot.lane.b32.xlu0 %v600, 127
  %v1170 = vpop.permute.xlu0 %1169
  %1171 = vrot.lane.b32.xlu0 %v603, 127
  %v1172 = vpop.permute.xlu0 %1171
  %1177 = vrot.lane.b32.xlu0 %v624, 1
  %v1178 = vpop.permute.xlu0 %1177
  %1179 = vrot.lane.b32.xlu0 %v627, 1
  %v1180 = vpop.permute.xlu0 %1179
  %1181 = vrot.lane.b32.xlu0 %v632, 1
  %v1182 = vpop.permute.xlu0 %1181
  %1183 = vrot.lane.b32.xlu0 %v635, 1
  %v1184 = vpop.permute.xlu0 %1183
  %1189 = vrot.lane.b32.xlu0 %v640, 2
  %v1190 = vpop.permute.xlu0 %1189
  %1191 = vrot.lane.b32.xlu0 %v643, 2
  %v1192 = vpop.permute.xlu0 %1191
  %1193 = vrot.lane.b32.xlu0 %v648, 2
  %v1194 = vpop.permute.xlu0 %1193
  %1195 = vrot.lane.b32.xlu0 %v651, 2
  %v1196 = vpop.permute.xlu0 %1195
  %1201 = vrot.lane.b32.xlu0 %v656, 3
  %v1202 = vpop.permute.xlu0 %1201
  %1203 = vrot.lane.b32.xlu0 %v659, 3
  %v1204 = vpop.permute.xlu0 %1203
  %1205 = vrot.lane.b32.xlu0 %v664, 3
  %v1206 = vpop.permute.xlu0 %1205
  %1207 = vrot.lane.b32.xlu0 %v667, 3
  %v1208 = vpop.permute.xlu0 %1207
  %1213 = vrot.lane.b32.xlu0 %v672, 4
  %v1214 = vpop.permute.xlu0 %1213
  %1215 = vrot.lane.b32.xlu0 %v675, 4
  %v1216 = vpop.permute.xlu0 %1215
  %1217 = vrot.lane.b32.xlu0 %v680, 4
  %v1218 = vpop.permute.xlu0 %1217
  %1219 = vrot.lane.b32.xlu0 %v683, 4
  %v1220 = vpop.permute.xlu0 %1219
  %1225 = vrot.lane.b32.xlu0 %v688, 5
  %v1226 = vpop.permute.xlu0 %1225
  %1227 = vrot.lane.b32.xlu0 %v691, 5
  %v1228 = vpop.permute.xlu0 %1227
  %1229 = vrot.lane.b32.xlu0 %v696, 5
  %v1230 = vpop.permute.xlu0 %1229
  %1231 = vrot.lane.b32.xlu0 %v699, 5
  %v1232 = vpop.permute.xlu0 %1231
  %1237 = vrot.lane.b32.xlu0 %v704, 6
  %v1238 = vpop.permute.xlu0 %1237
  %1239 = vrot.lane.b32.xlu0 %v707, 6
  %v1240 = vpop.permute.xlu0 %1239
  %1241 = vrot.lane.b32.xlu0 %v712, 6
  %v1242 = vpop.permute.xlu0 %1241
  %1243 = vrot.lane.b32.xlu0 %v715, 6
  %v1244 = vpop.permute.xlu0 %1243
  %1249 = vrot.lane.b32.xlu0 %v720, 7
  %v1250 = vpop.permute.xlu0 %1249
  %1251 = vrot.lane.b32.xlu0 %v723, 7
  %v1252 = vpop.permute.xlu0 %1251
  %1253 = vrot.lane.b32.xlu0 %v728, 7
  %v1254 = vpop.permute.xlu0 %1253
  %1255 = vrot.lane.b32.xlu0 %v731, 7
  %v1256 = vpop.permute.xlu0 %1255
  %1261 = vrot.lane.b32.xlu0 %v736, 8
  %v1262 = vpop.permute.xlu0 %1261
  %1263 = vrot.lane.b32.xlu0 %v739, 8
  %v1264 = vpop.permute.xlu0 %1263
  %1265 = vrot.lane.b32.xlu0 %v744, 8
  %v1266 = vpop.permute.xlu0 %1265
  %1267 = vrot.lane.b32.xlu0 %v747, 8
  %v1268 = vpop.permute.xlu0 %1267
  %1273 = vrot.lane.b32.xlu0 %v752, 9
  %v1274 = vpop.permute.xlu0 %1273
  %1275 = vrot.lane.b32.xlu0 %v755, 9
  %v1276 = vpop.permute.xlu0 %1275
  %1277 = vrot.lane.b32.xlu0 %v760, 9
  %v1278 = vpop.permute.xlu0 %1277
  %1279 = vrot.lane.b32.xlu0 %v763, 9
  %v1280 = vpop.permute.xlu0 %1279
  %1285 = vrot.lane.b32.xlu0 %v768, 10
  %v1286 = vpop.permute.xlu0 %1285
  %1287 = vrot.lane.b32.xlu0 %v771, 10
  %v1288 = vpop.permute.xlu0 %1287
  %1289 = vrot.lane.b32.xlu0 %v776, 10
  %v1290 = vpop.permute.xlu0 %1289
  %1291 = vrot.lane.b32.xlu0 %v779, 10
  %v1292 = vpop.permute.xlu0 %1291
  %1297 = vrot.lane.b32.xlu0 %v784, 11
  %v1298 = vpop.permute.xlu0 %1297
  %1299 = vrot.lane.b32.xlu0 %v787, 11
  %v1300 = vpop.permute.xlu0 %1299
  %1301 = vrot.lane.b32.xlu0 %v792, 11
  %v1302 = vpop.permute.xlu0 %1301
  %1303 = vrot.lane.b32.xlu0 %v795, 11
  %v1304 = vpop.permute.xlu0 %1303
  %1309 = vrot.lane.b32.xlu0 %v800, 12
  %v1310 = vpop.permute.xlu0 %1309
  %1311 = vrot.lane.b32.xlu0 %v803, 12
  %v1312 = vpop.permute.xlu0 %1311
  %1313 = vrot.lane.b32.xlu0 %v808, 12
  %v1314 = vpop.permute.xlu0 %1313
  %1315 = vrot.lane.b32.xlu0 %v811, 12
  %v1316 = vpop.permute.xlu0 %1315
  %1321 = vrot.lane.b32.xlu0 %v816, 13
  %v1322 = vpop.permute.xlu0 %1321
  %1323 = vrot.lane.b32.xlu0 %v819, 13
  %v1324 = vpop.permute.xlu0 %1323
  %1325 = vrot.lane.b32.xlu0 %v824, 13
  %v1326 = vpop.permute.xlu0 %1325
  %1327 = vrot.lane.b32.xlu0 %v827, 13
  %v1328 = vpop.permute.xlu0 %1327
  %1333 = vrot.lane.b32.xlu0 %v832, 14
  %v1334 = vpop.permute.xlu0 %1333
  %1335 = vrot.lane.b32.xlu0 %v835, 14
  %v1336 = vpop.permute.xlu0 %1335
  %1337 = vrot.lane.b32.xlu0 %v840, 14
  %v1338 = vpop.permute.xlu0 %1337
  %1339 = vrot.lane.b32.xlu0 %v843, 14
  %v1340 = vpop.permute.xlu0 %1339
  %v1345 = vsel %vm1086, %v1166, %v608
  %v1346 = vsel %vm1086, %v1168, %v611
  %v1347 = vsel %vm1086, %v1170, %v616
  %v1348 = vsel %vm1086, %v1172, %v619
  %v1349 = vsel %vm1091, %v1345, %v1178
  %v1350 = vsel %vm1091, %v1346, %v1180
  %v1351 = vsel %vm1091, %v1347, %v1182
  %v1352 = vsel %vm1091, %v1348, %v1184
  %v1353 = vsel %vm1096, %v1349, %v1190
  %v1354 = vsel %vm1096, %v1350, %v1192
  %v1355 = vsel %vm1096, %v1351, %v1194
  %v1356 = vsel %vm1096, %v1352, %v1196
  %v1357 = vsel %vm1101, %v1353, %v1202
  %v1358 = vsel %vm1101, %v1354, %v1204
  %v1359 = vsel %vm1101, %v1355, %v1206
  %v1360 = vsel %vm1101, %v1356, %v1208
  %v1361 = vsel %vm1106, %v1357, %v1214
  %v1362 = vsel %vm1106, %v1358, %v1216
  %v1363 = vsel %vm1106, %v1359, %v1218
  %v1364 = vsel %vm1106, %v1360, %v1220
  %v1365 = vsel %vm1111, %v1361, %v1226
  %v1366 = vsel %vm1111, %v1362, %v1228
  %v1367 = vsel %vm1111, %v1363, %v1230
  %v1368 = vsel %vm1111, %v1364, %v1232
  %v1369 = vsel %vm1116, %v1365, %v1238
  %v1370 = vsel %vm1116, %v1366, %v1240
  %v1371 = vsel %vm1116, %v1367, %v1242
  %v1372 = vsel %vm1116, %v1368, %v1244
  %v1373 = vsel %vm1121, %v1369, %v1250
  %v1374 = vsel %vm1121, %v1370, %v1252
  %v1375 = vsel %vm1121, %v1371, %v1254
  %v1376 = vsel %vm1121, %v1372, %v1256
  %v1377 = vsel %vm1126, %v1373, %v1262
  %v1378 = vsel %vm1126, %v1374, %v1264
  %v1379 = vsel %vm1126, %v1375, %v1266
  %v1380 = vsel %vm1126, %v1376, %v1268
  %v1381 = vsel %vm1131, %v1377, %v1274
  %v1382 = vsel %vm1131, %v1378, %v1276
  %v1383 = vsel %vm1131, %v1379, %v1278
  %v1384 = vsel %vm1131, %v1380, %v1280
  %v1385 = vsel %vm1136, %v1381, %v1286
  %v1386 = vsel %vm1136, %v1382, %v1288
  %v1387 = vsel %vm1136, %v1383, %v1290
  %v1388 = vsel %vm1136, %v1384, %v1292
  %v1389 = vsel %vm1141, %v1385, %v1298
  %v1390 = vsel %vm1141, %v1386, %v1300
  %v1391 = vsel %vm1141, %v1387, %v1302
  %v1392 = vsel %vm1141, %v1388, %v1304
  %v1393 = vsel %vm1146, %v1389, %v1310
  %v1394 = vsel %vm1146, %v1390, %v1312
  %v1395 = vsel %vm1146, %v1391, %v1314
  %v1396 = vsel %vm1146, %v1392, %v1316
  %v1397 = vsel %vm1151, %v1393, %v1322
  %v1398 = vsel %vm1151, %v1394, %v1324
  %v1399 = vsel %vm1151, %v1395, %v1326
  %v1400 = vsel %vm1151, %v1396, %v1328
  %v1401 = vsel %vm1156, %v1397, %v1334
  %v1402 = vsel %vm1156, %v1398, %v1336
  %v1403 = vsel %vm1156, %v1399, %v1338
  %v1404 = vsel %vm1156, %v1400, %v1340
  %1409 = vrot.lane.b32.xlu0 %v1401, 16
  %v1410 = vpop.permute.xlu0 %1409
  %1411 = vrot.lane.b32.xlu0 %v1402, 16
  %v1412 = vpop.permute.xlu0 %1411
  %1413 = vrot.lane.b32.xlu0 %v1403, 16
  %v1414 = vpop.permute.xlu0 %1413
  %1415 = vrot.lane.b32.xlu0 %v1404, 16
  %v1416 = vpop.permute.xlu0 %1415
  %v1421 = vsel %vm460, %v1157, %v1410
  %v1422 = vsel %vm460, %v1158, %v1412
  %v1423 = vsel %vm460, %v1159, %v1414
  %v1424 = vsel %vm460, %v1160, %v1416
  %vm1425 = vcmask 261120
  %v1426 = vsel %vm1425, %v1421, 0.0
  %1427 = vadd.xlane.f32.xlu0 %v1426
  %v1428 = vpop.xlane.xlu0 %1427
  %v1429 = vsel %vm1425, %v1422, 0.0
  %1430 = vadd.xlane.f32.xlu0 %v1429
  %v1431 = vpop.xlane.xlu0 %1430
  %v1432 = vsel %vm1425, %v1423, 0.0
  %1433 = vadd.xlane.f32.xlu0 %v1432
  %v1434 = vpop.xlane.xlu0 %1433
  %v1435 = vsel %vm1425, %v1424, 0.0
  %1436 = vadd.xlane.f32.xlu0 %v1435
  %v1437 = vpop.xlane.xlu0 %1436
  %v1438 = vmul.f32 %v1421, %v1421
  %v1439 = vmul.f32 %v1422, %v1422
  %v1440 = vmul.f32 %v1423, %v1423
  %v1441 = vmul.f32 %v1424, %v1424
  %v1442 = vsel %vm1425, %v1438, 0.0
  %1443 = vadd.xlane.f32.xlu0 %v1442
  %v1444 = vpop.xlane.xlu0 %1443
  %v1445 = vsel %vm1425, %v1439, 0.0
  %1446 = vadd.xlane.f32.xlu0 %v1445
  %v1447 = vpop.xlane.xlu0 %1446
  %v1448 = vsel %vm1425, %v1440, 0.0
  %1449 = vadd.xlane.f32.xlu0 %v1448
  %v1450 = vpop.xlane.xlu0 %1449
  %v1451 = vsel %vm1425, %v1441, 0.0
  %1452 = vadd.xlane.f32.xlu0 %v1451
  %v1453 = vpop.xlane.xlu0 %1452
  %v1454 = vmul.f32 %v1428, 0.03125
  %v1455 = vmul.f32 %v1431, 0.03125
  %v1456 = vmul.f32 %v1434, 0.03125
  %v1457 = vmul.f32 %v1437, 0.03125
  %v1458 = vmul.f32 %v1444, 0.03125
  %v1459 = vmul.f32 %v1447, 0.03125
  %v1460 = vmul.f32 %v1450, 0.03125
  %v1461 = vmul.f32 %v1453, 0.03125
  %v1462 = vmul.f32 %v1454, %v1454
  %v1463 = vmul.f32 %v1455, %v1455
  %v1464 = vmul.f32 %v1456, %v1456
  %v1465 = vmul.f32 %v1457, %v1457
  %v1466 = vsub.f32 %v1458, %v1462
  %v1467 = vsub.f32 %v1459, %v1463
  %v1468 = vsub.f32 %v1460, %v1464
  %v1469 = vsub.f32 %v1461, %v1465
  %v1470 = vmax.f32 %v1466, 0.0
  %v1471 = vmax.f32 %v1467, 0.0
  %v1472 = vmax.f32 %v1468, 0.0
  %v1473 = vmax.f32 %v1469, 0.0
  %v1474 = vsub.f32 %v1421, %v1454
  %v1475 = vsub.f32 %v1422, %v1455
  %v1476 = vsub.f32 %v1423, %v1456
  %v1477 = vsub.f32 %v1424, %v1457
  %v1478 = vadd.f32 %v1470, 1e-05
  %v1479 = vadd.f32 %v1471, 1e-05
  %v1480 = vadd.f32 %v1472, 1e-05
  %v1481 = vadd.f32 %v1473, 1e-05
  %v1482 = vrsqrt.pop %v1478
  %v1483 = vrsqrt.pop %v1479
  %v1484 = vrsqrt.pop %v1480
  %v1485 = vrsqrt.pop %v1481
  %v1486 = vmul.f32 %v1474, %v1482
  %v1487 = vmul.f32 %v1475, %v1483
  %v1488 = vmul.f32 %v1476, %v1484
  %v1489 = vmul.f32 %v1477, %v1485
  %v1490 = vld [vmem:[%s6] sm:$0xff]
  %v1491 = vld [vmem:[%s6 + $0x8] sm:$0xff]
  %v1492 = vld [vmem:[%s6 + $0x10] sm:$0xff]
  %v1493 = vld [vmem:[%s6 + $0x18] sm:$0xff]
  %1495 = vset.pattern.permute.xlu0 0
  %1496 = vperm.xlu0 %1495, %v1490
  %v1497 = vpop.permute.xlu0 %1496
  %1500 = vset.pattern.permute.xlu0 0
  %1501 = vperm.xlu0 %1500, %v1491
  %v1502 = vpop.permute.xlu0 %1501
  %1505 = vset.pattern.permute.xlu0 0
  %1506 = vperm.xlu0 %1505, %v1492
  %v1507 = vpop.permute.xlu0 %1506
  %1510 = vset.pattern.permute.xlu0 0
  %1511 = vperm.xlu0 %1510, %v1493
  %v1512 = vpop.permute.xlu0 %1511
  %v1514 = vmul.f32 %v1486, %v1497
  %v1515 = vmul.f32 %v1487, %v1502
  %v1516 = vmul.f32 %v1488, %v1507
  %v1517 = vmul.f32 %v1489, %v1512
  %v1518 = vld [vmem:[%s7] sm:$0xff]
  %v1519 = vld [vmem:[%s7 + $0x8] sm:$0xff]
  %v1520 = vld [vmem:[%s7 + $0x10] sm:$0xff]
  %v1521 = vld [vmem:[%s7 + $0x18] sm:$0xff]
  %1523 = vset.pattern.permute.xlu0 0
  %1524 = vperm.xlu0 %1523, %v1518
  %v1525 = vpop.permute.xlu0 %1524
  %1528 = vset.pattern.permute.xlu0 0
  %1529 = vperm.xlu0 %1528, %v1519
  %v1530 = vpop.permute.xlu0 %1529
  %1533 = vset.pattern.permute.xlu0 0
  %1534 = vperm.xlu0 %1533, %v1520
  %v1535 = vpop.permute.xlu0 %1534
  %1538 = vset.pattern.permute.xlu0 0
  %1539 = vperm.xlu0 %1538, %v1521
  %v1540 = vpop.permute.xlu0 %1539
  %v1542 = vadd.f32 %v1514, %v1525
  %v1543 = vadd.f32 %v1515, %v1530
  %v1544 = vadd.f32 %v1516, %v1535
  %v1545 = vadd.f32 %v1517, %v1540
  %v1546 = vmax.f32 %v1542, 0.0
  %v1547 = vmax.f32 %v1543, 0.0
  %v1548 = vmax.f32 %v1544, 0.0
  %v1549 = vmax.f32 %v1545, 0.0
  %v1550 = vld [vmem:[%s14] sm:$0xff]
  %v1551 = vld [vmem:[%s14 + $0x8] sm:$0xff]
  %v1552 = vld [vmem:[%s14 + $0x10] sm:$0xff]
  %v1553 = vld [vmem:[%s14 + $0x18] sm:$0xff]
  %v1554 = vld [vmem:[%s14 + $0x20] sm:$0xff]
  %v1555 = vld [vmem:[%s14 + $0x28] sm:$0xff]
  %v1556 = vld [vmem:[%s14 + $0x30] sm:$0xff]
  %v1557 = vld [vmem:[%s14 + $0x38] sm:$0xff]
  %v1558 = vunpack.c.l.s8.bf16 %v1550
  %v1559 = vunpack.c.h.s8.bf16 %v1550
  %v1560 = vunpack.c.l.s8.bf16 %v1551
  %v1561 = vunpack.c.h.s8.bf16 %v1551
  %v1562 = vunpack.c.l.s8.bf16 %v1552
  %v1563 = vunpack.c.h.s8.bf16 %v1552
  %v1564 = vunpack.c.l.s8.bf16 %v1553
  %v1565 = vunpack.c.h.s8.bf16 %v1553
  %v1566 = vunpack.c.l.s8.bf16 %v1554
  %v1567 = vunpack.c.h.s8.bf16 %v1554
  %v1568 = vunpack.c.l.s8.bf16 %v1555
  %v1569 = vunpack.c.h.s8.bf16 %v1555
  %v1570 = vunpack.c.l.s8.bf16 %v1556
  %v1571 = vunpack.c.h.s8.bf16 %v1556
  %v1572 = vunpack.c.l.s8.bf16 %v1557
  %v1573 = vunpack.c.h.s8.bf16 %v1557
  %v1574 = vld [vmem:[%s2] sm:$0xf]
  %v1575 = vld [vmem:[%s2 + $0x4] sm:$0xf]
  %v1576 = vld [vmem:[%s2 + $0x8] sm:$0xf]
  %v1577 = vld [vmem:[%s2 + $0xc] sm:$0xf]
  %v1578 = vld [vmem:[%s2 + $0x10] sm:$0xf]
  %v1579 = vld [vmem:[%s2 + $0x14] sm:$0xf]
  %v1580 = vld [vmem:[%s2 + $0x18] sm:$0xf]
  %v1581 = vld [vmem:[%s2 + $0x1c] sm:$0xf]
  %v1582 = vld [vmem:[%s2 + $0x20] sm:$0xf]
  %v1583 = vld [vmem:[%s2 + $0x24] sm:$0xf]
  %v1584 = vld [vmem:[%s2 + $0x28] sm:$0xf]
  %v1585 = vld [vmem:[%s2 + $0x2c] sm:$0xf]
  %v1586 = vld [vmem:[%s2 + $0x30] sm:$0xf]
  %v1587 = vld [vmem:[%s2 + $0x34] sm:$0xf]
  %v1588 = vld [vmem:[%s2 + $0x38] sm:$0xf]
  %v1589 = vld [vmem:[%s2 + $0x3c] sm:$0xf]
  %v1590 = vld [vmem:[%s2 + $0x40] sm:$0xf]
  %v1591 = vld [vmem:[%s2 + $0x44] sm:$0xf]
  %v1592 = vld [vmem:[%s2 + $0x48] sm:$0xf]
  %v1593 = vld [vmem:[%s2 + $0x4c] sm:$0xf]
  %v1594 = vld [vmem:[%s2 + $0x50] sm:$0xf]
  %v1595 = vld [vmem:[%s2 + $0x54] sm:$0xf]
  %v1596 = vld [vmem:[%s2 + $0x58] sm:$0xf]
  %v1597 = vld [vmem:[%s2 + $0x5c] sm:$0xf]
  %v1598 = vld [vmem:[%s2 + $0x60] sm:$0xf]
  %v1599 = vld [vmem:[%s2 + $0x64] sm:$0xf]
  %v1600 = vld [vmem:[%s2 + $0x68] sm:$0xf]
  %v1601 = vld [vmem:[%s2 + $0x6c] sm:$0xf]
  %v1602 = vld [vmem:[%s2 + $0x70] sm:$0xf]
  %v1603 = vld [vmem:[%s2 + $0x74] sm:$0xf]
  %v1604 = vld [vmem:[%s2 + $0x78] sm:$0xf]
  %v1605 = vld [vmem:[%s2 + $0x7c] sm:$0xf]
  %v1606 = vpack.c.bf16 %v1547, %v1546
  %v1607 = vpack.c.bf16 %v1549, %v1548
  %v1640 = vunpack.c.l.b16 %v1574
  %v1641 = vunpack.c.l.b16 %v1575
  %v1642 = vunpack.c.l.b16 %v1576
  %v1643 = vunpack.c.l.b16 %v1577
  %v1644 = vunpack.c.l.b16 %v1578
  %v1645 = vunpack.c.l.b16 %v1579
  %v1646 = vunpack.c.l.b16 %v1580
  %v1647 = vunpack.c.l.b16 %v1581
  %v1648 = vunpack.c.l.b16 %v1582
  %v1649 = vunpack.c.l.b16 %v1583
  %v1650 = vunpack.c.l.b16 %v1584
  %v1651 = vunpack.c.l.b16 %v1585
  %v1652 = vunpack.c.l.b16 %v1586
  %v1653 = vunpack.c.l.b16 %v1587
  %v1654 = vunpack.c.l.b16 %v1588
  %v1655 = vunpack.c.l.b16 %v1589
  %v1656 = vunpack.c.l.b16 %v1590
  %v1657 = vunpack.c.l.b16 %v1591
  %v1658 = vunpack.c.l.b16 %v1592
  %v1659 = vunpack.c.l.b16 %v1593
  %v1660 = vunpack.c.l.b16 %v1594
  %v1661 = vunpack.c.l.b16 %v1595
  %v1662 = vunpack.c.l.b16 %v1596
  %v1663 = vunpack.c.l.b16 %v1597
  %v1664 = vunpack.c.l.b16 %v1598
  %v1665 = vunpack.c.l.b16 %v1599
  %v1666 = vunpack.c.l.b16 %v1600
  %v1667 = vunpack.c.l.b16 %v1601
  %v1668 = vunpack.c.l.b16 %v1602
  %v1669 = vunpack.c.l.b16 %v1603
  %v1670 = vunpack.c.l.b16 %v1604
  %v1671 = vunpack.c.l.b16 %v1605
  %v1672 = vpack.c.b16 %v1641, %v1640
  %v1673 = vpack.c.b16 %v1643, %v1642
  %v1674 = vpack.c.b16 %v1645, %v1644
  %v1675 = vpack.c.b16 %v1647, %v1646
  %v1676 = vpack.c.b16 %v1649, %v1648
  %v1677 = vpack.c.b16 %v1651, %v1650
  %v1678 = vpack.c.b16 %v1653, %v1652
  %v1679 = vpack.c.b16 %v1655, %v1654
  %v1680 = vpack.c.b16 %v1657, %v1656
  %v1681 = vpack.c.b16 %v1659, %v1658
  %v1682 = vpack.c.b16 %v1661, %v1660
  %v1683 = vpack.c.b16 %v1663, %v1662
  %v1684 = vpack.c.b16 %v1665, %v1664
  %v1685 = vpack.c.b16 %v1667, %v1666
  %v1686 = vpack.c.b16 %v1669, %v1668
  %v1687 = vpack.c.b16 %v1671, %v1670
  %v1689 = vsel %vm1425, %v1672, 0
  %v1692 = vsel %vm1425, %v1673, 0
  %v1695 = vsel %vm1425, %v1674, 0
  %v1698 = vsel %vm1425, %v1675, 0
  %v1701 = vsel %vm1425, %v1676, 0
  %v1704 = vsel %vm1425, %v1677, 0
  %v1707 = vsel %vm1425, %v1678, 0
  %v1710 = vsel %vm1425, %v1679, 0
  %v1713 = vsel %vm1425, %v1680, 0
  %v1716 = vsel %vm1425, %v1681, 0
  %v1719 = vsel %vm1425, %v1682, 0
  %v1722 = vsel %vm1425, %v1683, 0
  %v1725 = vsel %vm1425, %v1684, 0
  %v1728 = vsel %vm1425, %v1685, 0
  %v1731 = vsel %vm1425, %v1686, 0
  %v1734 = vsel %vm1425, %v1687, 0
  %1736 = vmatprep.subr.bf16.mxu0 0
  %1737 = vmatpush1.bf16.msra.mxu0 %v1606
  %1738 = vmatprep.subr.bf16.mxu0 0
  %1739 = vmatpush1.bf16.msra.mxu0 %v1607
  %1740 = vmatprep.subr.bf16.mxu0 0
  %1741 = vmatpush1.bf16.msra.mxu0 0
  %1742 = vmatprep.subr.bf16.mxu0 0
  %1743 = vmatpush1.bf16.msra.mxu0 0
  %1744 = vmatprep.subr.bf16.mxu0 0
  %1745 = vmatpush1.bf16.msra.mxu0 0
  %1746 = vmatprep.subr.bf16.mxu0 0
  %1747 = vmatpush1.bf16.msra.mxu0 0
  %1748 = vmatprep.subr.bf16.mxu0 0
  %1749 = vmatpush1.bf16.msra.mxu0 0
  %1750 = vmatprep.subr.bf16.mxu0 0
  %1751 = vmatpush1.bf16.msra.mxu0 0
  %1752 = vmatprep.subr.bf16.mxu0 0
  %1753 = vmatpush1.bf16.msra.mxu0 0
  %1754 = vmatprep.subr.bf16.mxu0 0
  %1755 = vmatpush1.bf16.msra.mxu0 0
  %1756 = vmatprep.subr.bf16.mxu0 0
  %1757 = vmatpush1.bf16.msra.mxu0 0
  %1758 = vmatprep.subr.bf16.mxu0 0
  %1759 = vmatpush1.bf16.msra.mxu0 0
  %1760 = vmatprep.subr.bf16.mxu0 0
  %1761 = vmatpush1.bf16.msra.mxu0 0
  %1762 = vmatprep.subr.bf16.mxu0 0
  %1763 = vmatpush1.bf16.msra.mxu0 0
  %1764 = vmatprep.subr.bf16.mxu0 0
  %1765 = vmatpush1.bf16.msra.mxu0 0
  %1766 = vmatprep.subr.bf16.mxu0 0
  %1767 = vmatpush1.bf16.msra.mxu0 0
  %1768 = vmatprep.mubr.bf16.mxu0 0
  %1769 = vmatmul.mubr.bf16.gmra.mrb[0].mxu0 %v1689
  %v1770 = vpop.f32.mrb[0].mxu0
  %v1771 = vadd.f32 0.0, %v1770
  %v1772 = vpop.f32.mrb[0].mxu0
  %v1773 = vpop.f32.mrb[0].mxu0
  %v1774 = vadd.f32 0.0, %v1773
  %v1775 = vpop.f32.mrb[0].mxu0
  %1776 = vmatprep.mubr.bf16.mxu0 0
  %1777 = vmatmul.mubr.bf16.gmra.mrb[0].mxu0 %v1692
  %v1778 = vpop.f32.mrb[0].mxu0
  %v1779 = vadd.f32 0.0, %v1778
  %v1780 = vpop.f32.mrb[0].mxu0
  %v1781 = vpop.f32.mrb[0].mxu0
  %v1782 = vadd.f32 0.0, %v1781
  %v1783 = vpop.f32.mrb[0].mxu0
  %1784 = vmatprep.mubr.bf16.mxu0 0
  %1785 = vmatmul.mubr.bf16.gmra.mrb[0].mxu0 %v1695
  %v1786 = vpop.f32.mrb[0].mxu0
  %v1787 = vadd.f32 0.0, %v1786
  %v1788 = vpop.f32.mrb[0].mxu0
  %v1789 = vpop.f32.mrb[0].mxu0
  %v1790 = vadd.f32 0.0, %v1789
  %v1791 = vpop.f32.mrb[0].mxu0
  %1792 = vmatprep.mubr.bf16.mxu0 0
  %1793 = vmatmul.mubr.bf16.gmra.mrb[0].mxu0 %v1698
  %v1794 = vpop.f32.mrb[0].mxu0
  %v1795 = vadd.f32 0.0, %v1794
  %v1796 = vpop.f32.mrb[0].mxu0
  %v1797 = vpop.f32.mrb[0].mxu0
  %v1798 = vadd.f32 0.0, %v1797
  %v1799 = vpop.f32.mrb[0].mxu0
  %1800 = vmatprep.mubr.bf16.mxu0 0
  %1801 = vmatmul.mubr.bf16.gmra.mrb[0].mxu0 %v1701
  %v1802 = vpop.f32.mrb[0].mxu0
  %v1803 = vadd.f32 0.0, %v1802
  %v1804 = vpop.f32.mrb[0].mxu0
  %v1805 = vpop.f32.mrb[0].mxu0
  %v1806 = vadd.f32 0.0, %v1805
  %v1807 = vpop.f32.mrb[0].mxu0
  %1808 = vmatprep.mubr.bf16.mxu0 0
  %1809 = vmatmul.mubr.bf16.gmra.mrb[0].mxu0 %v1704
  %v1810 = vpop.f32.mrb[0].mxu0
  %v1811 = vadd.f32 0.0, %v1810
  %v1812 = vpop.f32.mrb[0].mxu0
  %v1813 = vpop.f32.mrb[0].mxu0
  %v1814 = vadd.f32 0.0, %v1813
  %v1815 = vpop.f32.mrb[0].mxu0
  %1816 = vmatprep.mubr.bf16.mxu0 0
  %1817 = vmatmul.mubr.bf16.gmra.mrb[0].mxu0 %v1707
  %v1818 = vpop.f32.mrb[0].mxu0
  %v1819 = vadd.f32 0.0, %v1818
  %v1820 = vpop.f32.mrb[0].mxu0
  %v1821 = vpop.f32.mrb[0].mxu0
  %v1822 = vadd.f32 0.0, %v1821
  %v1823 = vpop.f32.mrb[0].mxu0
  %1824 = vmatprep.mubr.bf16.mxu0 0
  %1825 = vmatmul.mubr.bf16.gmra.mrb[0].mxu0 %v1710
  %v1826 = vpop.f32.mrb[0].mxu0
  %v1827 = vadd.f32 0.0, %v1826
  %v1828 = vpop.f32.mrb[0].mxu0
  %v1829 = vpop.f32.mrb[0].mxu0
  %v1830 = vadd.f32 0.0, %v1829
  %v1831 = vpop.f32.mrb[0].mxu0
  %1832 = vmatprep.mubr.bf16.mxu0 0
  %1833 = vmatmul.mubr.bf16.gmra.mrb[0].mxu0 %v1713
  %v1834 = vpop.f32.mrb[0].mxu0
  %v1835 = vadd.f32 0.0, %v1834
  %v1836 = vpop.f32.mrb[0].mxu0
  %v1837 = vpop.f32.mrb[0].mxu0
  %v1838 = vadd.f32 0.0, %v1837
  %v1839 = vpop.f32.mrb[0].mxu0
  %1840 = vmatprep.mubr.bf16.mxu0 0
  %1841 = vmatmul.mubr.bf16.gmra.mrb[0].mxu0 %v1716
  %v1842 = vpop.f32.mrb[0].mxu0
  %v1843 = vadd.f32 0.0, %v1842
  %v1844 = vpop.f32.mrb[0].mxu0
  %v1845 = vpop.f32.mrb[0].mxu0
  %v1846 = vadd.f32 0.0, %v1845
  %v1847 = vpop.f32.mrb[0].mxu0
  %1848 = vmatprep.mubr.bf16.mxu0 0
  %1849 = vmatmul.mubr.bf16.gmra.mrb[0].mxu0 %v1719
  %v1850 = vpop.f32.mrb[0].mxu0
  %v1851 = vadd.f32 0.0, %v1850
  %v1852 = vpop.f32.mrb[0].mxu0
  %v1853 = vpop.f32.mrb[0].mxu0
  %v1854 = vadd.f32 0.0, %v1853
  %v1855 = vpop.f32.mrb[0].mxu0
  %1856 = vmatprep.mubr.bf16.mxu0 0
  %1857 = vmatmul.mubr.bf16.gmra.mrb[0].mxu0 %v1722
  %v1858 = vpop.f32.mrb[0].mxu0
  %v1859 = vadd.f32 0.0, %v1858
  %v1860 = vpop.f32.mrb[0].mxu0
  %v1861 = vpop.f32.mrb[0].mxu0
  %v1862 = vadd.f32 0.0, %v1861
  %v1863 = vpop.f32.mrb[0].mxu0
  %1864 = vmatprep.mubr.bf16.mxu0 0
  %1865 = vmatmul.mubr.bf16.gmra.mrb[0].mxu0 %v1725
  %v1866 = vpop.f32.mrb[0].mxu0
  %v1867 = vadd.f32 0.0, %v1866
  %v1868 = vpop.f32.mrb[0].mxu0
  %v1869 = vpop.f32.mrb[0].mxu0
  %v1870 = vadd.f32 0.0, %v1869
  %v1871 = vpop.f32.mrb[0].mxu0
  %1872 = vmatprep.mubr.bf16.mxu0 0
  %1873 = vmatmul.mubr.bf16.gmra.mrb[0].mxu0 %v1728
  %v1874 = vpop.f32.mrb[0].mxu0
  %v1875 = vadd.f32 0.0, %v1874
  %v1876 = vpop.f32.mrb[0].mxu0
  %v1877 = vpop.f32.mrb[0].mxu0
  %v1878 = vadd.f32 0.0, %v1877
  %v1879 = vpop.f32.mrb[0].mxu0
  %1880 = vmatprep.mubr.bf16.mxu0 0
  %1881 = vmatmul.mubr.bf16.gmra.mrb[0].mxu0 %v1731
  %v1882 = vpop.f32.mrb[0].mxu0
  %v1883 = vadd.f32 0.0, %v1882
  %v1884 = vpop.f32.mrb[0].mxu0
  %v1885 = vpop.f32.mrb[0].mxu0
  %v1886 = vadd.f32 0.0, %v1885
  %v1887 = vpop.f32.mrb[0].mxu0
  %1888 = vmatprep.mubr.bf16.mxu0 0
  %1889 = vmatmul.mubr.bf16.gmra.mrb[0].mxu0 %v1734
  %v1890 = vpop.f32.mrb[0].mxu0
  %v1891 = vadd.f32 0.0, %v1890
  %v1892 = vpop.f32.mrb[0].mxu0
  %v1893 = vpop.f32.mrb[0].mxu0
  %v1894 = vadd.f32 0.0, %v1893
  %v1895 = vpop.f32.mrb[0].mxu0
  %1896 = vdwg.mxu0
  %1899 = vrot.lane.b32.xlu0 %v1779, 16
  %v1900 = vpop.permute.xlu0 %1899
  %1901 = vrot.lane.b32.xlu0 %v1782, 16
  %v1902 = vpop.permute.xlu0 %1901
  %1907 = vrot.lane.b32.xlu0 %v1787, 32
  %v1908 = vpop.permute.xlu0 %1907
  %1909 = vrot.lane.b32.xlu0 %v1790, 32
  %v1910 = vpop.permute.xlu0 %1909
  %1915 = vrot.lane.b32.xlu0 %v1795, 48
  %v1916 = vpop.permute.xlu0 %1915
  %1917 = vrot.lane.b32.xlu0 %v1798, 48
  %v1918 = vpop.permute.xlu0 %1917
  %1923 = vrot.lane.b32.xlu0 %v1803, 64
  %v1924 = vpop.permute.xlu0 %1923
  %1925 = vrot.lane.b32.xlu0 %v1806, 64
  %v1926 = vpop.permute.xlu0 %1925
  %1931 = vrot.lane.b32.xlu0 %v1811, 80
  %v1932 = vpop.permute.xlu0 %1931
  %1933 = vrot.lane.b32.xlu0 %v1814, 80
  %v1934 = vpop.permute.xlu0 %1933
  %1939 = vrot.lane.b32.xlu0 %v1819, 96
  %v1940 = vpop.permute.xlu0 %1939
  %1941 = vrot.lane.b32.xlu0 %v1822, 96
  %v1942 = vpop.permute.xlu0 %1941
  %1947 = vrot.lane.b32.xlu0 %v1827, 112
  %v1948 = vpop.permute.xlu0 %1947
  %1949 = vrot.lane.b32.xlu0 %v1830, 112
  %v1950 = vpop.permute.xlu0 %1949
  %1955 = vrot.lane.b32.xlu0 %v1843, 16
  %v1956 = vpop.permute.xlu0 %1955
  %1957 = vrot.lane.b32.xlu0 %v1846, 16
  %v1958 = vpop.permute.xlu0 %1957
  %1963 = vrot.lane.b32.xlu0 %v1851, 32
  %v1964 = vpop.permute.xlu0 %1963
  %1965 = vrot.lane.b32.xlu0 %v1854, 32
  %v1966 = vpop.permute.xlu0 %1965
  %1971 = vrot.lane.b32.xlu0 %v1859, 48
  %v1972 = vpop.permute.xlu0 %1971
  %1973 = vrot.lane.b32.xlu0 %v1862, 48
  %v1974 = vpop.permute.xlu0 %1973
  %1979 = vrot.lane.b32.xlu0 %v1867, 64
  %v1980 = vpop.permute.xlu0 %1979
  %1981 = vrot.lane.b32.xlu0 %v1870, 64
  %v1982 = vpop.permute.xlu0 %1981
  %1987 = vrot.lane.b32.xlu0 %v1875, 80
  %v1988 = vpop.permute.xlu0 %1987
  %1989 = vrot.lane.b32.xlu0 %v1878, 80
  %v1990 = vpop.permute.xlu0 %1989
  %1995 = vrot.lane.b32.xlu0 %v1883, 96
  %v1996 = vpop.permute.xlu0 %1995
  %1997 = vrot.lane.b32.xlu0 %v1886, 96
  %v1998 = vpop.permute.xlu0 %1997
  %2003 = vrot.lane.b32.xlu0 %v1891, 112
  %v2004 = vpop.permute.xlu0 %2003
  %2005 = vrot.lane.b32.xlu0 %v1894, 112
  %v2006 = vpop.permute.xlu0 %2005
  %v2009 = vsel %vm460, %v1771, %v1900
  %v2010 = vsel %vm460, %v1774, %v1902
  %v2011 = vsel %vm1425, %v2009, %v1908
  %v2012 = vsel %vm1425, %v2010, %v1910
  %vm2013 = vcmask 392192
  %v2014 = vsel %vm2013, %v2011, %v1916
  %v2015 = vsel %vm2013, %v2012, %v1918
  %vm2016 = vcmask 523264
  %v2017 = vsel %vm2016, %v2014, %v1924
  %v2018 = vsel %vm2016, %v2015, %v1926
  %vm2019 = vcmask 654336
  %v2020 = vsel %vm2019, %v2017, %v1932
  %v2021 = vsel %vm2019, %v2018, %v1934
  %vm2022 = vcmask 785408
  %v2023 = vsel %vm2022, %v2020, %v1940
  %v2024 = vsel %vm2022, %v2021, %v1942
  %vm2025 = vcmask 916480
  %v2026 = vsel %vm2025, %v2023, %v1948
  %v2027 = vsel %vm2025, %v2024, %v1950
  %v2028 = vsel %vm460, %v1835, %v1956
  %v2029 = vsel %vm460, %v1838, %v1958
  %v2030 = vsel %vm1425, %v2028, %v1964
  %v2031 = vsel %vm1425, %v2029, %v1966
  %v2032 = vsel %vm2013, %v2030, %v1972
  %v2033 = vsel %vm2013, %v2031, %v1974
  %v2034 = vsel %vm2016, %v2032, %v1980
  %v2035 = vsel %vm2016, %v2033, %v1982
  %v2036 = vsel %vm2019, %v2034, %v1988
  %v2037 = vsel %vm2019, %v2035, %v1990
  %v2038 = vsel %vm2022, %v2036, %v1996
  %v2039 = vsel %vm2022, %v2037, %v1998
  %v2040 = vsel %vm2025, %v2038, %v2004
  %v2041 = vsel %vm2025, %v2039, %v2006
  %2044 = vrot.lane.b32.xlu0 %v1771, 112
  %v2045 = vpop.permute.xlu0 %2044
  %2046 = vrot.lane.b32.xlu0 %v1774, 112
  %v2047 = vpop.permute.xlu0 %2046
  %2050 = vrot.lane.b32.xlu0 %v1787, 16
  %v2051 = vpop.permute.xlu0 %2050
  %2052 = vrot.lane.b32.xlu0 %v1790, 16
  %v2053 = vpop.permute.xlu0 %2052
  %2056 = vrot.lane.b32.xlu0 %v1795, 32
  %v2057 = vpop.permute.xlu0 %2056
  %2058 = vrot.lane.b32.xlu0 %v1798, 32
  %v2059 = vpop.permute.xlu0 %2058
  %2062 = vrot.lane.b32.xlu0 %v1803, 48
  %v2063 = vpop.permute.xlu0 %2062
  %2064 = vrot.lane.b32.xlu0 %v1806, 48
  %v2065 = vpop.permute.xlu0 %2064
  %2068 = vrot.lane.b32.xlu0 %v1811, 64
  %v2069 = vpop.permute.xlu0 %2068
  %2070 = vrot.lane.b32.xlu0 %v1814, 64
  %v2071 = vpop.permute.xlu0 %2070
  %2074 = vrot.lane.b32.xlu0 %v1819, 80
  %v2075 = vpop.permute.xlu0 %2074
  %2076 = vrot.lane.b32.xlu0 %v1822, 80
  %v2077 = vpop.permute.xlu0 %2076
  %2080 = vrot.lane.b32.xlu0 %v1827, 96
  %v2081 = vpop.permute.xlu0 %2080
  %2082 = vrot.lane.b32.xlu0 %v1830, 96
  %v2083 = vpop.permute.xlu0 %2082
  %2088 = vrot.lane.b32.xlu0 %v1835, 112
  %v2089 = vpop.permute.xlu0 %2088
  %2090 = vrot.lane.b32.xlu0 %v1838, 112
  %v2091 = vpop.permute.xlu0 %2090
  %2094 = vrot.lane.b32.xlu0 %v1851, 16
  %v2095 = vpop.permute.xlu0 %2094
  %2096 = vrot.lane.b32.xlu0 %v1854, 16
  %v2097 = vpop.permute.xlu0 %2096
  %2100 = vrot.lane.b32.xlu0 %v1859, 32
  %v2101 = vpop.permute.xlu0 %2100
  %2102 = vrot.lane.b32.xlu0 %v1862, 32
  %v2103 = vpop.permute.xlu0 %2102
  %2106 = vrot.lane.b32.xlu0 %v1867, 48
  %v2107 = vpop.permute.xlu0 %2106
  %2108 = vrot.lane.b32.xlu0 %v1870, 48
  %v2109 = vpop.permute.xlu0 %2108
  %2112 = vrot.lane.b32.xlu0 %v1875, 64
  %v2113 = vpop.permute.xlu0 %2112
  %2114 = vrot.lane.b32.xlu0 %v1878, 64
  %v2115 = vpop.permute.xlu0 %2114
  %2118 = vrot.lane.b32.xlu0 %v1883, 80
  %v2119 = vpop.permute.xlu0 %2118
  %2120 = vrot.lane.b32.xlu0 %v1886, 80
  %v2121 = vpop.permute.xlu0 %2120
  %2124 = vrot.lane.b32.xlu0 %v1891, 96
  %v2125 = vpop.permute.xlu0 %2124
  %2126 = vrot.lane.b32.xlu0 %v1894, 96
  %v2127 = vpop.permute.xlu0 %2126
  %v2130 = vsel %vm460, %v2045, %v1779
  %v2131 = vsel %vm460, %v2047, %v1782
  %v2132 = vsel %vm1425, %v2130, %v2051
  %v2133 = vsel %vm1425, %v2131, %v2053
  %v2134 = vsel %vm2013, %v2132, %v2057
  %v2135 = vsel %vm2013, %v2133, %v2059
  %v2136 = vsel %vm2016, %v2134, %v2063
  %v2137 = vsel %vm2016, %v2135, %v2065
  %v2138 = vsel %vm2019, %v2136, %v2069
  %v2139 = vsel %vm2019, %v2137, %v2071
  %v2140 = vsel %vm2022, %v2138, %v2075
  %v2141 = vsel %vm2022, %v2139, %v2077
  %v2142 = vsel %vm2025, %v2140, %v2081
  %v2143 = vsel %vm2025, %v2141, %v2083
  %v2144 = vsel %vm460, %v2089, %v1843
  %v2145 = vsel %vm460, %v2091, %v1846
  %v2146 = vsel %vm1425, %v2144, %v2095
  %v2147 = vsel %vm1425, %v2145, %v2097
  %v2148 = vsel %vm2013, %v2146, %v2101
  %v2149 = vsel %vm2013, %v2147, %v2103
  %v2150 = vsel %vm2016, %v2148, %v2107
  %v2151 = vsel %vm2016, %v2149, %v2109
  %v2152 = vsel %vm2019, %v2150, %v2113
  %v2153 = vsel %vm2019, %v2151, %v2115
  %v2154 = vsel %vm2022, %v2152, %v2119
  %v2155 = vsel %vm2022, %v2153, %v2121
  %v2156 = vsel %vm2025, %v2154, %v2125
  %v2157 = vsel %vm2025, %v2155, %v2127
  %v2158 = vpack.c.bf16 %v2027, %v2026
  %v2159 = vpack.c.bf16 %v2041, %v2040
  %v2160 = vpack.c.bf16 %v2143, %v2142
  %v2161 = vpack.c.bf16 %v2157, %v2156
  %2162 = vmatprep.subr.bf16.mxu0 0
  %2163 = vmatpush1.bf16.msra.mxu0 %v1558
  %2164 = vmatprep.subr.bf16.mxu0 0
  %2165 = vmatpush1.bf16.msra.mxu0 %v1559
  %2166 = vmatprep.subr.bf16.mxu0 0
  %2167 = vmatpush1.bf16.msra.mxu0 %v1560
  %2168 = vmatprep.subr.bf16.mxu0 0
  %2169 = vmatpush1.bf16.msra.mxu0 %v1561
  %2170 = vmatprep.subr.bf16.mxu0 0
  %2171 = vmatpush1.bf16.msra.mxu0 %v1562
  %2172 = vmatprep.subr.bf16.mxu0 0
  %2173 = vmatpush1.bf16.msra.mxu0 %v1563
  %2174 = vmatprep.subr.bf16.mxu0 0
  %2175 = vmatpush1.bf16.msra.mxu0 %v1564
  %2176 = vmatprep.subr.bf16.mxu0 0
  %2177 = vmatpush1.bf16.msra.mxu0 %v1565
  %2178 = vmatprep.subr.bf16.mxu0 0
  %2179 = vmatpush1.bf16.msra.mxu0 %v1566
  %2180 = vmatprep.subr.bf16.mxu0 0
  %2181 = vmatpush1.bf16.msra.mxu0 %v1567
  %2182 = vmatprep.subr.bf16.mxu0 0
  %2183 = vmatpush1.bf16.msra.mxu0 %v1568
  %2184 = vmatprep.subr.bf16.mxu0 0
  %2185 = vmatpush1.bf16.msra.mxu0 %v1569
  %2186 = vmatprep.subr.bf16.mxu0 0
  %2187 = vmatpush1.bf16.msra.mxu0 %v1570
  %2188 = vmatprep.subr.bf16.mxu0 0
  %2189 = vmatpush1.bf16.msra.mxu0 %v1571
  %2190 = vmatprep.subr.bf16.mxu0 0
  %2191 = vmatpush1.bf16.msra.mxu0 %v1572
  %2192 = vmatprep.subr.bf16.mxu0 0
  %2193 = vmatpush1.bf16.msra.mxu0 %v1573
  %2194 = vmatprep.mubr.bf16.mxu0 %v2159
  %2195 = vmatmul.mubr.bf16.gmra.mrb[0].mxu0 %v2158
  %v2196 = vpop.f32.mrb[0].mxu0
  %v2197 = vadd.f32 0.0, %v2196
  %v2198 = vpop.f32.mrb[0].mxu0
  %v2199 = vpop.f32.mrb[0].mxu0
  %v2200 = vadd.f32 0.0, %v2199
  %v2201 = vpop.f32.mrb[0].mxu0
  %2202 = vmatprep.mubr.bf16.mxu0 %v2161
  %2203 = vmatmul.mubr.bf16.gmra.mrb[0].mxu0 %v2160
  %v2204 = vpop.f32.mrb[0].mxu0
  %v2205 = vadd.f32 0.0, %v2204
  %v2206 = vpop.f32.mrb[0].mxu0
  %v2207 = vpop.f32.mrb[0].mxu0
  %v2208 = vadd.f32 0.0, %v2207
  %v2209 = vpop.f32.mrb[0].mxu0
  %2210 = vdwg.mxu0
  %2213 = vrot.lane.b32.xlu0 %v2205, 64
  %v2214 = vpop.permute.xlu0 %2213
  %2215 = vrot.lane.b32.xlu0 %v2208, 64
  %v2216 = vpop.permute.xlu0 %2215
  %v2219 = vsel %vm2016, %v2197, %v2214
  %v2220 = vsel %vm2016, %v2200, %v2216
  %2221 = vadd.xlane.f32.xlu0 %v2219
  %v2222 = vpop.xlane.xlu0 %2221
  %2223 = vadd.xlane.f32.xlu0 %v2220
  %v2224 = vpop.xlane.xlu0 %2223
  %v2225 = vmul.f32 %v2219, %v2219
  %v2226 = vmul.f32 %v2220, %v2220
  %2227 = vadd.xlane.f32.xlu0 %v2225
  %v2228 = vpop.xlane.xlu0 %2227
  %2229 = vadd.xlane.f32.xlu0 %v2226
  %v2230 = vpop.xlane.xlu0 %2229
  %v2231 = vmul.f32 %v2222, 0.0078125
  %v2232 = vmul.f32 %v2224, 0.0078125
  %v2233 = vmul.f32 %v2228, 0.0078125
  %v2234 = vmul.f32 %v2230, 0.0078125
  %v2235 = vmul.f32 %v2231, %v2231
  %v2236 = vmul.f32 %v2232, %v2232
  %v2237 = vsub.f32 %v2233, %v2235
  %v2238 = vsub.f32 %v2234, %v2236
  %v2239 = vmax.f32 %v2237, 0.0
  %v2240 = vmax.f32 %v2238, 0.0
  %v2241 = vsub.f32 %v2219, %v2231
  %v2242 = vsub.f32 %v2220, %v2232
  %v2243 = vadd.f32 %v2239, 1e-05
  %v2244 = vadd.f32 %v2240, 1e-05
  %v2245 = vrsqrt.pop %v2243
  %v2246 = vrsqrt.pop %v2244
  %v2247 = vmul.f32 %v2241, %v2245
  %v2248 = vmul.f32 %v2242, %v2246
  %v2249 = vld [vmem:[%s8] sm:$0xff]
  %v2250 = vld [vmem:[%s8 + $0x8] sm:$0xff]
  %2252 = vset.pattern.permute.xlu0 0
  %2253 = vperm.xlu0 %2252, %v2249
  %v2254 = vpop.permute.xlu0 %2253
  %2257 = vset.pattern.permute.xlu0 0
  %2258 = vperm.xlu0 %2257, %v2250
  %v2259 = vpop.permute.xlu0 %2258
  %v2261 = vmul.f32 %v2247, %v2254
  %v2262 = vmul.f32 %v2248, %v2259
  %v2263 = vld [vmem:[%s9] sm:$0xff]
  %v2264 = vld [vmem:[%s9 + $0x8] sm:$0xff]
  %2266 = vset.pattern.permute.xlu0 0
  %2267 = vperm.xlu0 %2266, %v2263
  %v2268 = vpop.permute.xlu0 %2267
  %2271 = vset.pattern.permute.xlu0 0
  %2272 = vperm.xlu0 %2271, %v2264
  %v2273 = vpop.permute.xlu0 %2272
  %v2275 = vadd.f32 %v2261, %v2268
  %v2276 = vadd.f32 %v2262, %v2273
  %v2277 = vmax.f32 %v2275, 0.0
  %v2278 = vmax.f32 %v2276, 0.0
  %s2279 = smul.u32 2, 128
  %s2280 = smul.u32 %s2279, 2
  %s2281 = sshll.u32 %s2280, 4
  %2282 = dma.done [#allocation4], %s2281
  %v2283 = vld [vmem:[#allocation2] sm:$0xff]
  %v2284 = vld [vmem:[#allocation2 + $0x8] sm:$0xff]
  %v2285 = vld [vmem:[#allocation2 + $0x10] sm:$0xff]
  %v2286 = vld [vmem:[#allocation2 + $0x18] sm:$0xff]
  %v2287 = vld [vmem:[#allocation2 + $0x20] sm:$0xff]
  %v2288 = vld [vmem:[#allocation2 + $0x28] sm:$0xff]
  %v2289 = vld [vmem:[#allocation2 + $0x30] sm:$0xff]
  %v2290 = vld [vmem:[#allocation2 + $0x38] sm:$0xff]
  %v2291 = vld [vmem:[#allocation2 + $0x40] sm:$0xff]
  %v2292 = vld [vmem:[#allocation2 + $0x48] sm:$0xff]
  %v2293 = vld [vmem:[#allocation2 + $0x50] sm:$0xff]
  %v2294 = vld [vmem:[#allocation2 + $0x58] sm:$0xff]
  %v2295 = vld [vmem:[#allocation2 + $0x60] sm:$0xff]
  %v2296 = vld [vmem:[#allocation2 + $0x68] sm:$0xff]
  %v2297 = vld [vmem:[#allocation2 + $0x70] sm:$0xff]
  %v2298 = vld [vmem:[#allocation2 + $0x78] sm:$0xff]
  %v2299 = vld [vmem:[#allocation2 + $0x80] sm:$0xff]
  %v2300 = vld [vmem:[#allocation2 + $0x88] sm:$0xff]
  %v2301 = vld [vmem:[#allocation2 + $0x90] sm:$0xff]
  %v2302 = vld [vmem:[#allocation2 + $0x98] sm:$0xff]
  %v2303 = vld [vmem:[#allocation2 + $0xa0] sm:$0xff]
  %v2304 = vld [vmem:[#allocation2 + $0xa8] sm:$0xff]
  %v2305 = vld [vmem:[#allocation2 + $0xb0] sm:$0xff]
  %v2306 = vld [vmem:[#allocation2 + $0xb8] sm:$0xff]
  %v2307 = vld [vmem:[#allocation2 + $0xc0] sm:$0xff]
  %v2308 = vld [vmem:[#allocation2 + $0xc8] sm:$0xff]
  %v2309 = vld [vmem:[#allocation2 + $0xd0] sm:$0xff]
  %v2310 = vld [vmem:[#allocation2 + $0xd8] sm:$0xff]
  %v2311 = vld [vmem:[#allocation2 + $0xe0] sm:$0xff]
  %v2312 = vld [vmem:[#allocation2 + $0xe8] sm:$0xff]
  %v2313 = vld [vmem:[#allocation2 + $0xf0] sm:$0xff]
  %v2314 = vld [vmem:[#allocation2 + $0xf8] sm:$0xff]
  %v2315 = vld [vmem:[#allocation2 + $0x100] sm:$0xff]
  %v2316 = vld [vmem:[#allocation2 + $0x108] sm:$0xff]
  %v2317 = vld [vmem:[#allocation2 + $0x110] sm:$0xff]
  %v2318 = vld [vmem:[#allocation2 + $0x118] sm:$0xff]
  %v2319 = vld [vmem:[#allocation2 + $0x120] sm:$0xff]
  %v2320 = vld [vmem:[#allocation2 + $0x128] sm:$0xff]
  %v2321 = vld [vmem:[#allocation2 + $0x130] sm:$0xff]
  %v2322 = vld [vmem:[#allocation2 + $0x138] sm:$0xff]
  %v2323 = vld [vmem:[#allocation2 + $0x140] sm:$0xff]
  %v2324 = vld [vmem:[#allocation2 + $0x148] sm:$0xff]
  %v2325 = vld [vmem:[#allocation2 + $0x150] sm:$0xff]
  %v2326 = vld [vmem:[#allocation2 + $0x158] sm:$0xff]
  %v2327 = vld [vmem:[#allocation2 + $0x160] sm:$0xff]
  %v2328 = vld [vmem:[#allocation2 + $0x168] sm:$0xff]
  %v2329 = vld [vmem:[#allocation2 + $0x170] sm:$0xff]
  %v2330 = vld [vmem:[#allocation2 + $0x178] sm:$0xff]
  %v2331 = vld [vmem:[#allocation2 + $0x180] sm:$0xff]
  %v2332 = vld [vmem:[#allocation2 + $0x188] sm:$0xff]
  %v2333 = vld [vmem:[#allocation2 + $0x190] sm:$0xff]
  %v2334 = vld [vmem:[#allocation2 + $0x198] sm:$0xff]
  %v2335 = vld [vmem:[#allocation2 + $0x1a0] sm:$0xff]
  %v2336 = vld [vmem:[#allocation2 + $0x1a8] sm:$0xff]
  %v2337 = vld [vmem:[#allocation2 + $0x1b0] sm:$0xff]
  %v2338 = vld [vmem:[#allocation2 + $0x1b8] sm:$0xff]
  %v2339 = vld [vmem:[#allocation2 + $0x1c0] sm:$0xff]
  %v2340 = vld [vmem:[#allocation2 + $0x1c8] sm:$0xff]
  %v2341 = vld [vmem:[#allocation2 + $0x1d0] sm:$0xff]
  %v2342 = vld [vmem:[#allocation2 + $0x1d8] sm:$0xff]
  %v2343 = vld [vmem:[#allocation2 + $0x1e0] sm:$0xff]
  %v2344 = vld [vmem:[#allocation2 + $0x1e8] sm:$0xff]
  %v2345 = vld [vmem:[#allocation2 + $0x1f0] sm:$0xff]
  %v2346 = vld [vmem:[#allocation2 + $0x1f8] sm:$0xff]
  %v2347 = vunpack.c.l.s8.bf16 %v2283
  %v2348 = vunpack.c.l.s8.bf16 %v2284
  %v2349 = vunpack.c.h.s8.bf16 %v2283
  %v2350 = vunpack.c.h.s8.bf16 %v2284
  %v2351 = vunpack.c.l.s8.bf16 %v2285
  %v2352 = vunpack.c.l.s8.bf16 %v2286
  %v2353 = vunpack.c.h.s8.bf16 %v2285
  %v2354 = vunpack.c.h.s8.bf16 %v2286
  %v2355 = vunpack.c.l.s8.bf16 %v2287
  %v2356 = vunpack.c.l.s8.bf16 %v2288
  %v2357 = vunpack.c.h.s8.bf16 %v2287
  %v2358 = vunpack.c.h.s8.bf16 %v2288
  %v2359 = vunpack.c.l.s8.bf16 %v2289
  %v2360 = vunpack.c.l.s8.bf16 %v2290
  %v2361 = vunpack.c.h.s8.bf16 %v2289
  %v2362 = vunpack.c.h.s8.bf16 %v2290
  %v2363 = vunpack.c.l.s8.bf16 %v2291
  %v2364 = vunpack.c.l.s8.bf16 %v2292
  %v2365 = vunpack.c.h.s8.bf16 %v2291
  %v2366 = vunpack.c.h.s8.bf16 %v2292
  %v2367 = vunpack.c.l.s8.bf16 %v2293
  %v2368 = vunpack.c.l.s8.bf16 %v2294
  %v2369 = vunpack.c.h.s8.bf16 %v2293
  %v2370 = vunpack.c.h.s8.bf16 %v2294
  %v2371 = vunpack.c.l.s8.bf16 %v2295
  %v2372 = vunpack.c.l.s8.bf16 %v2296
  %v2373 = vunpack.c.h.s8.bf16 %v2295
  %v2374 = vunpack.c.h.s8.bf16 %v2296
  %v2375 = vunpack.c.l.s8.bf16 %v2297
  %v2376 = vunpack.c.l.s8.bf16 %v2298
  %v2377 = vunpack.c.h.s8.bf16 %v2297
  %v2378 = vunpack.c.h.s8.bf16 %v2298
  %v2379 = vunpack.c.l.s8.bf16 %v2299
  %v2380 = vunpack.c.l.s8.bf16 %v2300
  %v2381 = vunpack.c.h.s8.bf16 %v2299
  %v2382 = vunpack.c.h.s8.bf16 %v2300
  %v2383 = vunpack.c.l.s8.bf16 %v2301
  %v2384 = vunpack.c.l.s8.bf16 %v2302
  %v2385 = vunpack.c.h.s8.bf16 %v2301
  %v2386 = vunpack.c.h.s8.bf16 %v2302
  %v2387 = vunpack.c.l.s8.bf16 %v2303
  %v2388 = vunpack.c.l.s8.bf16 %v2304
  %v2389 = vunpack.c.h.s8.bf16 %v2303
  %v2390 = vunpack.c.h.s8.bf16 %v2304
  %v2391 = vunpack.c.l.s8.bf16 %v2305
  %v2392 = vunpack.c.l.s8.bf16 %v2306
  %v2393 = vunpack.c.h.s8.bf16 %v2305
  %v2394 = vunpack.c.h.s8.bf16 %v2306
  %v2395 = vunpack.c.l.s8.bf16 %v2307
  %v2396 = vunpack.c.l.s8.bf16 %v2308
  %v2397 = vunpack.c.h.s8.bf16 %v2307
  %v2398 = vunpack.c.h.s8.bf16 %v2308
  %v2399 = vunpack.c.l.s8.bf16 %v2309
  %v2400 = vunpack.c.l.s8.bf16 %v2310
  %v2401 = vunpack.c.h.s8.bf16 %v2309
  %v2402 = vunpack.c.h.s8.bf16 %v2310
  %v2403 = vunpack.c.l.s8.bf16 %v2311
  %v2404 = vunpack.c.l.s8.bf16 %v2312
  %v2405 = vunpack.c.h.s8.bf16 %v2311
  %v2406 = vunpack.c.h.s8.bf16 %v2312
  %v2407 = vunpack.c.l.s8.bf16 %v2313
  %v2408 = vunpack.c.l.s8.bf16 %v2314
  %v2409 = vunpack.c.h.s8.bf16 %v2313
  %v2410 = vunpack.c.h.s8.bf16 %v2314
  %v2411 = vunpack.c.l.s8.bf16 %v2315
  %v2412 = vunpack.c.l.s8.bf16 %v2316
  %v2413 = vunpack.c.h.s8.bf16 %v2315
  %v2414 = vunpack.c.h.s8.bf16 %v2316
  %v2415 = vunpack.c.l.s8.bf16 %v2317
  %v2416 = vunpack.c.l.s8.bf16 %v2318
  %v2417 = vunpack.c.h.s8.bf16 %v2317
  %v2418 = vunpack.c.h.s8.bf16 %v2318
  %v2419 = vunpack.c.l.s8.bf16 %v2319
  %v2420 = vunpack.c.l.s8.bf16 %v2320
  %v2421 = vunpack.c.h.s8.bf16 %v2319
  %v2422 = vunpack.c.h.s8.bf16 %v2320
  %v2423 = vunpack.c.l.s8.bf16 %v2321
  %v2424 = vunpack.c.l.s8.bf16 %v2322
  %v2425 = vunpack.c.h.s8.bf16 %v2321
  %v2426 = vunpack.c.h.s8.bf16 %v2322
  %v2427 = vunpack.c.l.s8.bf16 %v2323
  %v2428 = vunpack.c.l.s8.bf16 %v2324
  %v2429 = vunpack.c.h.s8.bf16 %v2323
  %v2430 = vunpack.c.h.s8.bf16 %v2324
  %v2431 = vunpack.c.l.s8.bf16 %v2325
  %v2432 = vunpack.c.l.s8.bf16 %v2326
  %v2433 = vunpack.c.h.s8.bf16 %v2325
  %v2434 = vunpack.c.h.s8.bf16 %v2326
  %v2435 = vunpack.c.l.s8.bf16 %v2327
  %v2436 = vunpack.c.l.s8.bf16 %v2328
  %v2437 = vunpack.c.h.s8.bf16 %v2327
  %v2438 = vunpack.c.h.s8.bf16 %v2328
  %v2439 = vunpack.c.l.s8.bf16 %v2329
  %v2440 = vunpack.c.l.s8.bf16 %v2330
  %v2441 = vunpack.c.h.s8.bf16 %v2329
  %v2442 = vunpack.c.h.s8.bf16 %v2330
  %v2443 = vunpack.c.l.s8.bf16 %v2331
  %v2444 = vunpack.c.l.s8.bf16 %v2332
  %v2445 = vunpack.c.h.s8.bf16 %v2331
  %v2446 = vunpack.c.h.s8.bf16 %v2332
  %v2447 = vunpack.c.l.s8.bf16 %v2333
  %v2448 = vunpack.c.l.s8.bf16 %v2334
  %v2449 = vunpack.c.h.s8.bf16 %v2333
  %v2450 = vunpack.c.h.s8.bf16 %v2334
  %v2451 = vunpack.c.l.s8.bf16 %v2335
  %v2452 = vunpack.c.l.s8.bf16 %v2336
  %v2453 = vunpack.c.h.s8.bf16 %v2335
  %v2454 = vunpack.c.h.s8.bf16 %v2336
  %v2455 = vunpack.c.l.s8.bf16 %v2337
  %v2456 = vunpack.c.l.s8.bf16 %v2338
  %v2457 = vunpack.c.h.s8.bf16 %v2337
  %v2458 = vunpack.c.h.s8.bf16 %v2338
  %v2459 = vunpack.c.l.s8.bf16 %v2339
  %v2460 = vunpack.c.l.s8.bf16 %v2340
  %v2461 = vunpack.c.h.s8.bf16 %v2339
  %v2462 = vunpack.c.h.s8.bf16 %v2340
  %v2463 = vunpack.c.l.s8.bf16 %v2341
  %v2464 = vunpack.c.l.s8.bf16 %v2342
  %v2465 = vunpack.c.h.s8.bf16 %v2341
  %v2466 = vunpack.c.h.s8.bf16 %v2342
  %v2467 = vunpack.c.l.s8.bf16 %v2343
  %v2468 = vunpack.c.l.s8.bf16 %v2344
  %v2469 = vunpack.c.h.s8.bf16 %v2343
  %v2470 = vunpack.c.h.s8.bf16 %v2344
  %v2471 = vunpack.c.l.s8.bf16 %v2345
  %v2472 = vunpack.c.l.s8.bf16 %v2346
  %v2473 = vunpack.c.h.s8.bf16 %v2345
  %v2474 = vunpack.c.h.s8.bf16 %v2346
  %v2475 = vld [vmem:[%s3] sm:$0xf]
  %v2476 = vld [vmem:[%s3 + $0x4] sm:$0xf]
  %v2477 = vld [vmem:[%s3 + $0x8] sm:$0xf]
  %v2478 = vld [vmem:[%s3 + $0xc] sm:$0xf]
  %v2479 = vld [vmem:[%s3 + $0x10] sm:$0xf]
  %v2480 = vld [vmem:[%s3 + $0x14] sm:$0xf]
  %v2481 = vld [vmem:[%s3 + $0x18] sm:$0xf]
  %v2482 = vld [vmem:[%s3 + $0x1c] sm:$0xf]
  %v2483 = vld [vmem:[%s3 + $0x20] sm:$0xf]
  %v2484 = vld [vmem:[%s3 + $0x24] sm:$0xf]
  %v2485 = vld [vmem:[%s3 + $0x28] sm:$0xf]
  %v2486 = vld [vmem:[%s3 + $0x2c] sm:$0xf]
  %v2487 = vld [vmem:[%s3 + $0x30] sm:$0xf]
  %v2488 = vld [vmem:[%s3 + $0x34] sm:$0xf]
  %v2489 = vld [vmem:[%s3 + $0x38] sm:$0xf]
  %v2490 = vld [vmem:[%s3 + $0x3c] sm:$0xf]
  %v2491 = vpack.c.bf16 %v2278, %v2277
  %v2508 = vunpack.c.l.b16 %v2475
  %v2509 = vunpack.c.l.b16 %v2476
  %v2510 = vunpack.c.l.b16 %v2477
  %v2511 = vunpack.c.l.b16 %v2478
  %v2512 = vunpack.c.l.b16 %v2479
  %v2513 = vunpack.c.l.b16 %v2480
  %v2514 = vunpack.c.l.b16 %v2481
  %v2515 = vunpack.c.l.b16 %v2482
  %v2516 = vunpack.c.l.b16 %v2483
  %v2517 = vunpack.c.l.b16 %v2484
  %v2518 = vunpack.c.l.b16 %v2485
  %v2519 = vunpack.c.l.b16 %v2486
  %v2520 = vunpack.c.l.b16 %v2487
  %v2521 = vunpack.c.l.b16 %v2488
  %v2522 = vunpack.c.l.b16 %v2489
  %v2523 = vunpack.c.l.b16 %v2490
  %v2524 = vpack.c.b16 %v2509, %v2508
  %v2525 = vpack.c.b16 %v2511, %v2510
  %v2526 = vpack.c.b16 %v2513, %v2512
  %v2527 = vpack.c.b16 %v2515, %v2514
  %v2528 = vpack.c.b16 %v2517, %v2516
  %v2529 = vpack.c.b16 %v2519, %v2518
  %v2530 = vpack.c.b16 %v2521, %v2520
  %v2531 = vpack.c.b16 %v2523, %v2522
  %v2533 = vsel %vm460, %v2524, 0
  %v2536 = vsel %vm460, %v2525, 0
  %v2539 = vsel %vm460, %v2526, 0
  %v2542 = vsel %vm460, %v2527, 0
  %v2545 = vsel %vm460, %v2528, 0
  %v2548 = vsel %vm460, %v2529, 0
  %v2551 = vsel %vm460, %v2530, 0
  %v2554 = vsel %vm460, %v2531, 0
  %2556 = vmatprep.subr.bf16.mxu0 0
  %2557 = vmatpush1.bf16.msra.mxu0 %v2491
  %2558 = vmatprep.subr.bf16.mxu0 0
  %2559 = vmatpush1.bf16.msra.mxu0 0
  %2560 = vmatprep.subr.bf16.mxu0 0
  %2561 = vmatpush1.bf16.msra.mxu0 0
  %2562 = vmatprep.subr.bf16.mxu0 0
  %2563 = vmatpush1.bf16.msra.mxu0 0
  %2564 = vmatprep.subr.bf16.mxu0 0
  %2565 = vmatpush1.bf16.msra.mxu0 0
  %2566 = vmatprep.subr.bf16.mxu0 0
  %2567 = vmatpush1.bf16.msra.mxu0 0
  %2568 = vmatprep.subr.bf16.mxu0 0
  %2569 = vmatpush1.bf16.msra.mxu0 0
  %2570 = vmatprep.subr.bf16.mxu0 0
  %2571 = vmatpush1.bf16.msra.mxu0 0
  %2572 = vmatprep.subr.bf16.mxu0 0
  %2573 = vmatpush1.bf16.msra.mxu0 0
  %2574 = vmatprep.subr.bf16.mxu0 0
  %2575 = vmatpush1.bf16.msra.mxu0 0
  %2576 = vmatprep.subr.bf16.mxu0 0
  %2577 = vmatpush1.bf16.msra.mxu0 0
  %2578 = vmatprep.subr.bf16.mxu0 0
  %2579 = vmatpush1.bf16.msra.mxu0 0
  %2580 = vmatprep.subr.bf16.mxu0 0
  %2581 = vmatpush1.bf16.msra.mxu0 0
  %2582 = vmatprep.subr.bf16.mxu0 0
  %2583 = vmatpush1.bf16.msra.mxu0 0
  %2584 = vmatprep.subr.bf16.mxu0 0
  %2585 = vmatpush1.bf16.msra.mxu0 0
  %2586 = vmatprep.subr.bf16.mxu0 0
  %2587 = vmatpush1.bf16.msra.mxu0 0
  %2588 = vmatprep.mubr.bf16.mxu0 0
  %2589 = vmatmul.mubr.bf16.gmra.mrb[0].mxu0 %v2533
  %v2590 = vpop.f32.mrb[0].mxu0
  %v2591 = vadd.f32 0.0, %v2590
  %v2592 = vpop.f32.mrb[0].mxu0
  %v2593 = vpop.f32.mrb[0].mxu0
  %v2594 = vadd.f32 0.0, %v2593
  %v2595 = vpop.f32.mrb[0].mxu0
  %2596 = vmatprep.mubr.bf16.mxu0 0
  %2597 = vmatmul.mubr.bf16.gmra.mrb[0].mxu0 %v2536
  %v2598 = vpop.f32.mrb[0].mxu0
  %v2599 = vadd.f32 0.0, %v2598
  %v2600 = vpop.f32.mrb[0].mxu0
  %v2601 = vpop.f32.mrb[0].mxu0
  %v2602 = vadd.f32 0.0, %v2601
  %v2603 = vpop.f32.mrb[0].mxu0
  %2604 = vmatprep.mubr.bf16.mxu0 0
  %2605 = vmatmul.mubr.bf16.gmra.mrb[0].mxu0 %v2539
  %v2606 = vpop.f32.mrb[0].mxu0
  %v2607 = vadd.f32 0.0, %v2606
  %v2608 = vpop.f32.mrb[0].mxu0
  %v2609 = vpop.f32.mrb[0].mxu0
  %v2610 = vadd.f32 0.0, %v2609
  %v2611 = vpop.f32.mrb[0].mxu0
  %2612 = vmatprep.mubr.bf16.mxu0 0
  %2613 = vmatmul.mubr.bf16.gmra.mrb[0].mxu0 %v2542
  %v2614 = vpop.f32.mrb[0].mxu0
  %v2615 = vadd.f32 0.0, %v2614
  %v2616 = vpop.f32.mrb[0].mxu0
  %v2617 = vpop.f32.mrb[0].mxu0
  %v2618 = vadd.f32 0.0, %v2617
  %v2619 = vpop.f32.mrb[0].mxu0
  %2620 = vmatprep.mubr.bf16.mxu0 0
  %2621 = vmatmul.mubr.bf16.gmra.mrb[0].mxu0 %v2545
  %v2622 = vpop.f32.mrb[0].mxu0
  %v2623 = vadd.f32 0.0, %v2622
  %v2624 = vpop.f32.mrb[0].mxu0
  %v2625 = vpop.f32.mrb[0].mxu0
  %v2626 = vadd.f32 0.0, %v2625
  %v2627 = vpop.f32.mrb[0].mxu0
  %2628 = vmatprep.mubr.bf16.mxu0 0
  %2629 = vmatmul.mubr.bf16.gmra.mrb[0].mxu0 %v2548
  %v2630 = vpop.f32.mrb[0].mxu0
  %v2631 = vadd.f32 0.0, %v2630
  %v2632 = vpop.f32.mrb[0].mxu0
  %v2633 = vpop.f32.mrb[0].mxu0
  %v2634 = vadd.f32 0.0, %v2633
  %v2635 = vpop.f32.mrb[0].mxu0
  %2636 = vmatprep.mubr.bf16.mxu0 0
  %2637 = vmatmul.mubr.bf16.gmra.mrb[0].mxu0 %v2551
  %v2638 = vpop.f32.mrb[0].mxu0
  %v2639 = vadd.f32 0.0, %v2638
  %v2640 = vpop.f32.mrb[0].mxu0
  %v2641 = vpop.f32.mrb[0].mxu0
  %v2642 = vadd.f32 0.0, %v2641
  %v2643 = vpop.f32.mrb[0].mxu0
  %2644 = vmatprep.mubr.bf16.mxu0 0
  %2645 = vmatmul.mubr.bf16.gmra.mrb[0].mxu0 %v2554
  %v2646 = vpop.f32.mrb[0].mxu0
  %v2647 = vadd.f32 0.0, %v2646
  %v2648 = vpop.f32.mrb[0].mxu0
  %v2649 = vpop.f32.mrb[0].mxu0
  %v2650 = vadd.f32 0.0, %v2649
  %v2651 = vpop.f32.mrb[0].mxu0
  %2652 = vdwg.mxu0
  %2654 = vrot.lane.b32.xlu0 %v2594, 64
  %v2655 = vpop.permute.xlu0 %2654
  %2658 = vrot.lane.b32.xlu0 %v2602, 64
  %v2659 = vpop.permute.xlu0 %2658
  %2662 = vrot.lane.b32.xlu0 %v2610, 64
  %v2663 = vpop.permute.xlu0 %2662
  %2666 = vrot.lane.b32.xlu0 %v2618, 64
  %v2667 = vpop.permute.xlu0 %2666
  %2670 = vrot.lane.b32.xlu0 %v2626, 64
  %v2671 = vpop.permute.xlu0 %2670
  %2674 = vrot.lane.b32.xlu0 %v2634, 64
  %v2675 = vpop.permute.xlu0 %2674
  %2678 = vrot.lane.b32.xlu0 %v2642, 64
  %v2679 = vpop.permute.xlu0 %2678
  %2682 = vrot.lane.b32.xlu0 %v2650, 64
  %v2683 = vpop.permute.xlu0 %2682
  %v2685 = vsel %vm2016, %v2591, %v2655
  %v2686 = vsel %vm2016, %v2599, %v2659
  %v2687 = vsel %vm2016, %v2607, %v2663
  %v2688 = vsel %vm2016, %v2615, %v2667
  %v2689 = vsel %vm2016, %v2623, %v2671
  %v2690 = vsel %vm2016, %v2631, %v2675
  %v2691 = vsel %vm2016, %v2639, %v2679
  %v2692 = vsel %vm2016, %v2647, %v2683
  %2694 = vrot.lane.b32.xlu0 %v2591, 64
  %v2695 = vpop.permute.xlu0 %2694
  %2698 = vrot.lane.b32.xlu0 %v2599, 64
  %v2699 = vpop.permute.xlu0 %2698
  %2702 = vrot.lane.b32.xlu0 %v2607, 64
  %v2703 = vpop.permute.xlu0 %2702
  %2706 = vrot.lane.b32.xlu0 %v2615, 64
  %v2707 = vpop.permute.xlu0 %2706
  %2710 = vrot.lane.b32.xlu0 %v2623, 64
  %v2711 = vpop.permute.xlu0 %2710
  %2714 = vrot.lane.b32.xlu0 %v2631, 64
  %v2715 = vpop.permute.xlu0 %2714
  %2718 = vrot.lane.b32.xlu0 %v2639, 64
  %v2719 = vpop.permute.xlu0 %2718
  %2722 = vrot.lane.b32.xlu0 %v2647, 64
  %v2723 = vpop.permute.xlu0 %2722
  %v2725 = vsel %vm2016, %v2695, %v2594
  %v2726 = vsel %vm2016, %v2699, %v2602
  %v2727 = vsel %vm2016, %v2703, %v2610
  %v2728 = vsel %vm2016, %v2707, %v2618
  %v2729 = vsel %vm2016, %v2711, %v2626
  %v2730 = vsel %vm2016, %v2715, %v2634
  %v2731 = vsel %vm2016, %v2719, %v2642
  %v2732 = vsel %vm2016, %v2723, %v2650
  %v2733 = vpack.c.bf16 %v2725, %v2685
  %v2734 = vpack.c.bf16 %v2726, %v2686
  %v2735 = vpack.c.bf16 %v2727, %v2687
  %v2736 = vpack.c.bf16 %v2728, %v2688
  %v2737 = vpack.c.bf16 %v2729, %v2689
  %v2738 = vpack.c.bf16 %v2730, %v2690
  %v2739 = vpack.c.bf16 %v2731, %v2691
  %v2740 = vpack.c.bf16 %v2732, %v2692
  %2741 = vmatprep.subr.bf16.mxu0 %v2348
  %2742 = vmatpush1.bf16.msra.mxu0 %v2347
  %2743 = vmatprep.subr.bf16.mxu0 %v2350
  %2744 = vmatpush1.bf16.msra.mxu0 %v2349
  %2745 = vmatprep.subr.bf16.mxu0 %v2352
  %2746 = vmatpush1.bf16.msra.mxu0 %v2351
  %2747 = vmatprep.subr.bf16.mxu0 %v2354
  %2748 = vmatpush1.bf16.msra.mxu0 %v2353
  %2749 = vmatprep.subr.bf16.mxu0 %v2356
  %2750 = vmatpush1.bf16.msra.mxu0 %v2355
  %2751 = vmatprep.subr.bf16.mxu0 %v2358
  %2752 = vmatpush1.bf16.msra.mxu0 %v2357
  %2753 = vmatprep.subr.bf16.mxu0 %v2360
  %2754 = vmatpush1.bf16.msra.mxu0 %v2359
  %2755 = vmatprep.subr.bf16.mxu0 %v2362
  %2756 = vmatpush1.bf16.msra.mxu0 %v2361
  %2757 = vmatprep.subr.bf16.mxu0 %v2364
  %2758 = vmatpush1.bf16.msra.mxu0 %v2363
  %2759 = vmatprep.subr.bf16.mxu0 %v2366
  %2760 = vmatpush1.bf16.msra.mxu0 %v2365
  %2761 = vmatprep.subr.bf16.mxu0 %v2368
  %2762 = vmatpush1.bf16.msra.mxu0 %v2367
  %2763 = vmatprep.subr.bf16.mxu0 %v2370
  %2764 = vmatpush1.bf16.msra.mxu0 %v2369
  %2765 = vmatprep.subr.bf16.mxu0 %v2372
  %2766 = vmatpush1.bf16.msra.mxu0 %v2371
  %2767 = vmatprep.subr.bf16.mxu0 %v2374
  %2768 = vmatpush1.bf16.msra.mxu0 %v2373
  %2769 = vmatprep.subr.bf16.mxu0 %v2376
  %2770 = vmatpush1.bf16.msra.mxu0 %v2375
  %2771 = vmatprep.subr.bf16.mxu0 %v2378
  %2772 = vmatpush1.bf16.msra.mxu0 %v2377
  %2773 = vmatprep.mubr.bf16.mxu0 %v2734
  %2774 = vmatmul.mubr.bf16.gmra.mrb[0].mxu0 %v2733
  %v2775 = vpop.f32.mrb[0].mxu0
  %v2776 = vadd.f32 0.0, %v2775
  %v2777 = vpop.f32.mrb[0].mxu0
  %v2778 = vadd.f32 0.0, %v2777
  %v2779 = vpop.f32.mrb[0].mxu0
  %v2780 = vadd.f32 0.0, %v2779
  %v2781 = vpop.f32.mrb[0].mxu0
  %v2782 = vadd.f32 0.0, %v2781
  %2783 = vdwg.mxu0
  %2784 = vmatprep.subr.bf16.mxu0 %v2380
  %2785 = vmatpush1.bf16.msra.mxu0 %v2379
  %2786 = vmatprep.subr.bf16.mxu0 %v2382
  %2787 = vmatpush1.bf16.msra.mxu0 %v2381
  %2788 = vmatprep.subr.bf16.mxu0 %v2384
  %2789 = vmatpush1.bf16.msra.mxu0 %v2383
  %2790 = vmatprep.subr.bf16.mxu0 %v2386
  %2791 = vmatpush1.bf16.msra.mxu0 %v2385
  %2792 = vmatprep.subr.bf16.mxu0 %v2388
  %2793 = vmatpush1.bf16.msra.mxu0 %v2387
  %2794 = vmatprep.subr.bf16.mxu0 %v2390
  %2795 = vmatpush1.bf16.msra.mxu0 %v2389
  %2796 = vmatprep.subr.bf16.mxu0 %v2392
  %2797 = vmatpush1.bf16.msra.mxu0 %v2391
  %2798 = vmatprep.subr.bf16.mxu0 %v2394
  %2799 = vmatpush1.bf16.msra.mxu0 %v2393
  %2800 = vmatprep.subr.bf16.mxu0 %v2396
  %2801 = vmatpush1.bf16.msra.mxu0 %v2395
  %2802 = vmatprep.subr.bf16.mxu0 %v2398
  %2803 = vmatpush1.bf16.msra.mxu0 %v2397
  %2804 = vmatprep.subr.bf16.mxu0 %v2400
  %2805 = vmatpush1.bf16.msra.mxu0 %v2399
  %2806 = vmatprep.subr.bf16.mxu0 %v2402
  %2807 = vmatpush1.bf16.msra.mxu0 %v2401
  %2808 = vmatprep.subr.bf16.mxu0 %v2404
  %2809 = vmatpush1.bf16.msra.mxu0 %v2403
  %2810 = vmatprep.subr.bf16.mxu0 %v2406
  %2811 = vmatpush1.bf16.msra.mxu0 %v2405
  %2812 = vmatprep.subr.bf16.mxu0 %v2408
  %2813 = vmatpush1.bf16.msra.mxu0 %v2407
  %2814 = vmatprep.subr.bf16.mxu0 %v2410
  %2815 = vmatpush1.bf16.msra.mxu0 %v2409
  %2816 = vmatprep.mubr.bf16.mxu0 %v2736
  %2817 = vmatmul.mubr.bf16.gmra.mrb[0].mxu0 %v2735
  %v2818 = vpop.f32.mrb[0].mxu0
  %v2819 = vadd.f32 %v2776, %v2818
  %v2820 = vpop.f32.mrb[0].mxu0
  %v2821 = vadd.f32 %v2778, %v2820
  %v2822 = vpop.f32.mrb[0].mxu0
  %v2823 = vadd.f32 %v2780, %v2822
  %v2824 = vpop.f32.mrb[0].mxu0
  %v2825 = vadd.f32 %v2782, %v2824
  %2826 = vdwg.mxu0
  %2827 = vmatprep.subr.bf16.mxu0 %v2412
  %2828 = vmatpush1.bf16.msra.mxu0 %v2411
  %2829 = vmatprep.subr.bf16.mxu0 %v2414
  %2830 = vmatpush1.bf16.msra.mxu0 %v2413
  %2831 = vmatprep.subr.bf16.mxu0 %v2416
  %2832 = vmatpush1.bf16.msra.mxu0 %v2415
  %2833 = vmatprep.subr.bf16.mxu0 %v2418
  %2834 = vmatpush1.bf16.msra.mxu0 %v2417
  %2835 = vmatprep.subr.bf16.mxu0 %v2420
  %2836 = vmatpush1.bf16.msra.mxu0 %v2419
  %2837 = vmatprep.subr.bf16.mxu0 %v2422
  %2838 = vmatpush1.bf16.msra.mxu0 %v2421
  %2839 = vmatprep.subr.bf16.mxu0 %v2424
  %2840 = vmatpush1.bf16.msra.mxu0 %v2423
  %2841 = vmatprep.subr.bf16.mxu0 %v2426
  %2842 = vmatpush1.bf16.msra.mxu0 %v2425
  %2843 = vmatprep.subr.bf16.mxu0 %v2428
  %2844 = vmatpush1.bf16.msra.mxu0 %v2427
  %2845 = vmatprep.subr.bf16.mxu0 %v2430
  %2846 = vmatpush1.bf16.msra.mxu0 %v2429
  %2847 = vmatprep.subr.bf16.mxu0 %v2432
  %2848 = vmatpush1.bf16.msra.mxu0 %v2431
  %2849 = vmatprep.subr.bf16.mxu0 %v2434
  %2850 = vmatpush1.bf16.msra.mxu0 %v2433
  %2851 = vmatprep.subr.bf16.mxu0 %v2436
  %2852 = vmatpush1.bf16.msra.mxu0 %v2435
  %2853 = vmatprep.subr.bf16.mxu0 %v2438
  %2854 = vmatpush1.bf16.msra.mxu0 %v2437
  %2855 = vmatprep.subr.bf16.mxu0 %v2440
  %2856 = vmatpush1.bf16.msra.mxu0 %v2439
  %2857 = vmatprep.subr.bf16.mxu0 %v2442
  %2858 = vmatpush1.bf16.msra.mxu0 %v2441
  %2859 = vmatprep.mubr.bf16.mxu0 %v2738
  %2860 = vmatmul.mubr.bf16.gmra.mrb[0].mxu0 %v2737
  %v2861 = vpop.f32.mrb[0].mxu0
  %v2862 = vadd.f32 %v2819, %v2861
  %v2863 = vpop.f32.mrb[0].mxu0
  %v2864 = vadd.f32 %v2821, %v2863
  %v2865 = vpop.f32.mrb[0].mxu0
  %v2866 = vadd.f32 %v2823, %v2865
  %v2867 = vpop.f32.mrb[0].mxu0
  %v2868 = vadd.f32 %v2825, %v2867
  %2869 = vdwg.mxu0
  %2870 = vmatprep.subr.bf16.mxu0 %v2444
  %2871 = vmatpush1.bf16.msra.mxu0 %v2443
  %2872 = vmatprep.subr.bf16.mxu0 %v2446
  %2873 = vmatpush1.bf16.msra.mxu0 %v2445
  %2874 = vmatprep.subr.bf16.mxu0 %v2448
  %2875 = vmatpush1.bf16.msra.mxu0 %v2447
  %2876 = vmatprep.subr.bf16.mxu0 %v2450
  %2877 = vmatpush1.bf16.msra.mxu0 %v2449
  %2878 = vmatprep.subr.bf16.mxu0 %v2452
  %2879 = vmatpush1.bf16.msra.mxu0 %v2451
  %2880 = vmatprep.subr.bf16.mxu0 %v2454
  %2881 = vmatpush1.bf16.msra.mxu0 %v2453
  %2882 = vmatprep.subr.bf16.mxu0 %v2456
  %2883 = vmatpush1.bf16.msra.mxu0 %v2455
  %2884 = vmatprep.subr.bf16.mxu0 %v2458
  %2885 = vmatpush1.bf16.msra.mxu0 %v2457
  %2886 = vmatprep.subr.bf16.mxu0 %v2460
  %2887 = vmatpush1.bf16.msra.mxu0 %v2459
  %2888 = vmatprep.subr.bf16.mxu0 %v2462
  %2889 = vmatpush1.bf16.msra.mxu0 %v2461
  %2890 = vmatprep.subr.bf16.mxu0 %v2464
  %2891 = vmatpush1.bf16.msra.mxu0 %v2463
  %2892 = vmatprep.subr.bf16.mxu0 %v2466
  %2893 = vmatpush1.bf16.msra.mxu0 %v2465
  %2894 = vmatprep.subr.bf16.mxu0 %v2468
  %2895 = vmatpush1.bf16.msra.mxu0 %v2467
  %2896 = vmatprep.subr.bf16.mxu0 %v2470
  %2897 = vmatpush1.bf16.msra.mxu0 %v2469
  %2898 = vmatprep.subr.bf16.mxu0 %v2472
  %2899 = vmatpush1.bf16.msra.mxu0 %v2471
  %2900 = vmatprep.subr.bf16.mxu0 %v2474
  %2901 = vmatpush1.bf16.msra.mxu0 %v2473
  %2902 = vmatprep.mubr.bf16.mxu0 %v2740
  %2903 = vmatmul.mubr.bf16.gmra.mrb[0].mxu0 %v2739
  %v2904 = vpop.f32.mrb[0].mxu0
  %v2905 = vadd.f32 %v2862, %v2904
  %v2906 = vpop.f32.mrb[0].mxu0
  %v2907 = vadd.f32 %v2864, %v2906
  %v2908 = vpop.f32.mrb[0].mxu0
  %v2909 = vadd.f32 %v2866, %v2908
  %v2910 = vpop.f32.mrb[0].mxu0
  %v2911 = vadd.f32 %v2868, %v2910
  %2912 = vdwg.mxu0
  %v2913 = vadd.f32 %v2905, %v2907
  %v2914 = vadd.f32 %v2913, %v2909
  %v2915 = vadd.f32 %v2914, %v2911
  %2916 = vadd.xlane.f32.xlu0 %v2915
  %v2917 = vpop.xlane.xlu0 %2916
  %v2918 = vmul.f32 %v2905, %v2905
  %v2919 = vmul.f32 %v2907, %v2907
  %v2920 = vmul.f32 %v2909, %v2909
  %v2921 = vmul.f32 %v2911, %v2911
  %v2922 = vadd.f32 %v2918, %v2919
  %v2923 = vadd.f32 %v2922, %v2920
  %v2924 = vadd.f32 %v2923, %v2921
  %2925 = vadd.xlane.f32.xlu0 %v2924
  %v2926 = vpop.xlane.xlu0 %2925
  %v2927 = vmul.f32 %v2917, 0.001953125
  %v2928 = vmul.f32 %v2926, 0.001953125
  %v2929 = vmul.f32 %v2927, %v2927
  %v2930 = vsub.f32 %v2928, %v2929
  %v2931 = vmax.f32 %v2930, 0.0
  %v2932 = vsub.f32 %v2905, %v2927
  %v2933 = vsub.f32 %v2907, %v2927
  %v2934 = vsub.f32 %v2909, %v2927
  %v2935 = vsub.f32 %v2911, %v2927
  %v2936 = vadd.f32 %v2931, 1e-05
  %v2937 = vrsqrt.pop %v2936
  %v2938 = vmul.f32 %v2932, %v2937
  %v2939 = vmul.f32 %v2933, %v2937
  %v2940 = vmul.f32 %v2934, %v2937
  %v2941 = vmul.f32 %v2935, %v2937
  %v2942 = vld [vmem:[%s10] sm:$0xff]
  %2944 = vset.pattern.permute.xlu0 0
  %2945 = vperm.xlu0 %2944, %v2942
  %v2946 = vpop.permute.xlu0 %2945
  %v2948 = vmul.f32 %v2938, %v2946
  %v2949 = vmul.f32 %v2939, %v2946
  %v2950 = vmul.f32 %v2940, %v2946
  %v2951 = vmul.f32 %v2941, %v2946
  %v2952 = vld [vmem:[%s11] sm:$0xff]
  %2954 = vset.pattern.permute.xlu0 0
  %2955 = vperm.xlu0 %2954, %v2952
  %v2956 = vpop.permute.xlu0 %2955
  %v2958 = vadd.f32 %v2948, %v2956
  %v2959 = vadd.f32 %v2949, %v2956
  %v2960 = vadd.f32 %v2950, %v2956
  %v2961 = vadd.f32 %v2951, %v2956
  %v2962 = vmax.f32 %v2958, 0.0
  %v2963 = vmax.f32 %v2959, 0.0
  %v2964 = vmax.f32 %v2960, 0.0
  %v2965 = vmax.f32 %v2961, 0.0
  %s2966 = smul.u32 %s2279, 8
  %s2967 = sshll.u32 %s2966, 4
  %2968 = dma.done %s221, %s2967
  %v2969 = vld [vmem:[#allocation3] sm:$0xff]
  %v2970 = vld [vmem:[#allocation3 + $0x8] sm:$0xff]
  %v2971 = vld [vmem:[#allocation3 + $0x10] sm:$0xff]
  %v2972 = vld [vmem:[#allocation3 + $0x18] sm:$0xff]
  %v2973 = vld [vmem:[#allocation3 + $0x20] sm:$0xff]
  %v2974 = vld [vmem:[#allocation3 + $0x28] sm:$0xff]
  %v2975 = vld [vmem:[#allocation3 + $0x30] sm:$0xff]
  %v2976 = vld [vmem:[#allocation3 + $0x38] sm:$0xff]
  %v2977 = vld [vmem:[#allocation3 + $0x40] sm:$0xff]
  %v2978 = vld [vmem:[#allocation3 + $0x48] sm:$0xff]
  %v2979 = vld [vmem:[#allocation3 + $0x50] sm:$0xff]
  %v2980 = vld [vmem:[#allocation3 + $0x58] sm:$0xff]
  %v2981 = vld [vmem:[#allocation3 + $0x60] sm:$0xff]
  %v2982 = vld [vmem:[#allocation3 + $0x68] sm:$0xff]
  %v2983 = vld [vmem:[#allocation3 + $0x70] sm:$0xff]
  %v2984 = vld [vmem:[#allocation3 + $0x78] sm:$0xff]
  %v2985 = vld [vmem:[#allocation3 + $0x80] sm:$0xff]
  %v2986 = vld [vmem:[#allocation3 + $0x88] sm:$0xff]
  %v2987 = vld [vmem:[#allocation3 + $0x90] sm:$0xff]
  %v2988 = vld [vmem:[#allocation3 + $0x98] sm:$0xff]
  %v2989 = vld [vmem:[#allocation3 + $0xa0] sm:$0xff]
  %v2990 = vld [vmem:[#allocation3 + $0xa8] sm:$0xff]
  %v2991 = vld [vmem:[#allocation3 + $0xb0] sm:$0xff]
  %v2992 = vld [vmem:[#allocation3 + $0xb8] sm:$0xff]
  %v2993 = vld [vmem:[#allocation3 + $0xc0] sm:$0xff]
  %v2994 = vld [vmem:[#allocation3 + $0xc8] sm:$0xff]
  %v2995 = vld [vmem:[#allocation3 + $0xd0] sm:$0xff]
  %v2996 = vld [vmem:[#allocation3 + $0xd8] sm:$0xff]
  %v2997 = vld [vmem:[#allocation3 + $0xe0] sm:$0xff]
  %v2998 = vld [vmem:[#allocation3 + $0xe8] sm:$0xff]
  %v2999 = vld [vmem:[#allocation3 + $0xf0] sm:$0xff]
  %v3000 = vld [vmem:[#allocation3 + $0xf8] sm:$0xff]
  %v3001 = vld [vmem:[#allocation3 + $0x100] sm:$0xff]
  %v3002 = vld [vmem:[#allocation3 + $0x108] sm:$0xff]
  %v3003 = vld [vmem:[#allocation3 + $0x110] sm:$0xff]
  %v3004 = vld [vmem:[#allocation3 + $0x118] sm:$0xff]
  %v3005 = vld [vmem:[#allocation3 + $0x120] sm:$0xff]
  %v3006 = vld [vmem:[#allocation3 + $0x128] sm:$0xff]
  %v3007 = vld [vmem:[#allocation3 + $0x130] sm:$0xff]
  %v3008 = vld [vmem:[#allocation3 + $0x138] sm:$0xff]
  %v3009 = vld [vmem:[#allocation3 + $0x140] sm:$0xff]
  %v3010 = vld [vmem:[#allocation3 + $0x148] sm:$0xff]
  %v3011 = vld [vmem:[#allocation3 + $0x150] sm:$0xff]
  %v3012 = vld [vmem:[#allocation3 + $0x158] sm:$0xff]
  %v3013 = vld [vmem:[#allocation3 + $0x160] sm:$0xff]
  %v3014 = vld [vmem:[#allocation3 + $0x168] sm:$0xff]
  %v3015 = vld [vmem:[#allocation3 + $0x170] sm:$0xff]
  %v3016 = vld [vmem:[#allocation3 + $0x178] sm:$0xff]
  %v3017 = vld [vmem:[#allocation3 + $0x180] sm:$0xff]
  %v3018 = vld [vmem:[#allocation3 + $0x188] sm:$0xff]
  %v3019 = vld [vmem:[#allocation3 + $0x190] sm:$0xff]
  %v3020 = vld [vmem:[#allocation3 + $0x198] sm:$0xff]
  %v3021 = vld [vmem:[#allocation3 + $0x1a0] sm:$0xff]
  %v3022 = vld [vmem:[#allocation3 + $0x1a8] sm:$0xff]
  %v3023 = vld [vmem:[#allocation3 + $0x1b0] sm:$0xff]
  %v3024 = vld [vmem:[#allocation3 + $0x1b8] sm:$0xff]
  %v3025 = vld [vmem:[#allocation3 + $0x1c0] sm:$0xff]
  %v3026 = vld [vmem:[#allocation3 + $0x1c8] sm:$0xff]
  %v3027 = vld [vmem:[#allocation3 + $0x1d0] sm:$0xff]
  %v3028 = vld [vmem:[#allocation3 + $0x1d8] sm:$0xff]
  %v3029 = vld [vmem:[#allocation3 + $0x1e0] sm:$0xff]
  %v3030 = vld [vmem:[#allocation3 + $0x1e8] sm:$0xff]
  %v3031 = vld [vmem:[#allocation3 + $0x1f0] sm:$0xff]
  %v3032 = vld [vmem:[#allocation3 + $0x1f8] sm:$0xff]
  %v3033 = vld [vmem:[#allocation3 + $0x200] sm:$0xff]
  %v3034 = vld [vmem:[#allocation3 + $0x208] sm:$0xff]
  %v3035 = vld [vmem:[#allocation3 + $0x210] sm:$0xff]
  %v3036 = vld [vmem:[#allocation3 + $0x218] sm:$0xff]
  %v3037 = vld [vmem:[#allocation3 + $0x220] sm:$0xff]
  %v3038 = vld [vmem:[#allocation3 + $0x228] sm:$0xff]
  %v3039 = vld [vmem:[#allocation3 + $0x230] sm:$0xff]
  %v3040 = vld [vmem:[#allocation3 + $0x238] sm:$0xff]
  %v3041 = vld [vmem:[#allocation3 + $0x240] sm:$0xff]
  %v3042 = vld [vmem:[#allocation3 + $0x248] sm:$0xff]
  %v3043 = vld [vmem:[#allocation3 + $0x250] sm:$0xff]
  %v3044 = vld [vmem:[#allocation3 + $0x258] sm:$0xff]
  %v3045 = vld [vmem:[#allocation3 + $0x260] sm:$0xff]
  %v3046 = vld [vmem:[#allocation3 + $0x268] sm:$0xff]
  %v3047 = vld [vmem:[#allocation3 + $0x270] sm:$0xff]
  %v3048 = vld [vmem:[#allocation3 + $0x278] sm:$0xff]
  %v3049 = vld [vmem:[#allocation3 + $0x280] sm:$0xff]
  %v3050 = vld [vmem:[#allocation3 + $0x288] sm:$0xff]
  %v3051 = vld [vmem:[#allocation3 + $0x290] sm:$0xff]
  %v3052 = vld [vmem:[#allocation3 + $0x298] sm:$0xff]
  %v3053 = vld [vmem:[#allocation3 + $0x2a0] sm:$0xff]
  %v3054 = vld [vmem:[#allocation3 + $0x2a8] sm:$0xff]
  %v3055 = vld [vmem:[#allocation3 + $0x2b0] sm:$0xff]
  %v3056 = vld [vmem:[#allocation3 + $0x2b8] sm:$0xff]
  %v3057 = vld [vmem:[#allocation3 + $0x2c0] sm:$0xff]
  %v3058 = vld [vmem:[#allocation3 + $0x2c8] sm:$0xff]
  %v3059 = vld [vmem:[#allocation3 + $0x2d0] sm:$0xff]
  %v3060 = vld [vmem:[#allocation3 + $0x2d8] sm:$0xff]
  %v3061 = vld [vmem:[#allocation3 + $0x2e0] sm:$0xff]
  %v3062 = vld [vmem:[#allocation3 + $0x2e8] sm:$0xff]
  %v3063 = vld [vmem:[#allocation3 + $0x2f0] sm:$0xff]
  %v3064 = vld [vmem:[#allocation3 + $0x2f8] sm:$0xff]
  %v3065 = vld [vmem:[#allocation3 + $0x300] sm:$0xff]
  %v3066 = vld [vmem:[#allocation3 + $0x308] sm:$0xff]
  %v3067 = vld [vmem:[#allocation3 + $0x310] sm:$0xff]
  %v3068 = vld [vmem:[#allocation3 + $0x318] sm:$0xff]
  %v3069 = vld [vmem:[#allocation3 + $0x320] sm:$0xff]
  %v3070 = vld [vmem:[#allocation3 + $0x328] sm:$0xff]
  %v3071 = vld [vmem:[#allocation3 + $0x330] sm:$0xff]
  %v3072 = vld [vmem:[#allocation3 + $0x338] sm:$0xff]
  %v3073 = vld [vmem:[#allocation3 + $0x340] sm:$0xff]
  %v3074 = vld [vmem:[#allocation3 + $0x348] sm:$0xff]
  %v3075 = vld [vmem:[#allocation3 + $0x350] sm:$0xff]
  %v3076 = vld [vmem:[#allocation3 + $0x358] sm:$0xff]
  %v3077 = vld [vmem:[#allocation3 + $0x360] sm:$0xff]
  %v3078 = vld [vmem:[#allocation3 + $0x368] sm:$0xff]
  %v3079 = vld [vmem:[#allocation3 + $0x370] sm:$0xff]
  %v3080 = vld [vmem:[#allocation3 + $0x378] sm:$0xff]
  %v3081 = vld [vmem:[#allocation3 + $0x380] sm:$0xff]
  %v3082 = vld [vmem:[#allocation3 + $0x388] sm:$0xff]
  %v3083 = vld [vmem:[#allocation3 + $0x390] sm:$0xff]
  %v3084 = vld [vmem:[#allocation3 + $0x398] sm:$0xff]
  %v3085 = vld [vmem:[#allocation3 + $0x3a0] sm:$0xff]
  %v3086 = vld [vmem:[#allocation3 + $0x3a8] sm:$0xff]
  %v3087 = vld [vmem:[#allocation3 + $0x3b0] sm:$0xff]
  %v3088 = vld [vmem:[#allocation3 + $0x3b8] sm:$0xff]
  %v3089 = vld [vmem:[#allocation3 + $0x3c0] sm:$0xff]
  %v3090 = vld [vmem:[#allocation3 + $0x3c8] sm:$0xff]
  %v3091 = vld [vmem:[#allocation3 + $0x3d0] sm:$0xff]
  %v3092 = vld [vmem:[#allocation3 + $0x3d8] sm:$0xff]
  %v3093 = vld [vmem:[#allocation3 + $0x3e0] sm:$0xff]
  %v3094 = vld [vmem:[#allocation3 + $0x3e8] sm:$0xff]
  %v3095 = vld [vmem:[#allocation3 + $0x3f0] sm:$0xff]
  %v3096 = vld [vmem:[#allocation3 + $0x3f8] sm:$0xff]
  %v3097 = vld [vmem:[#allocation3 + $0x400] sm:$0xff]
  %v3098 = vld [vmem:[#allocation3 + $0x408] sm:$0xff]
  %v3099 = vld [vmem:[#allocation3 + $0x410] sm:$0xff]
  %v3100 = vld [vmem:[#allocation3 + $0x418] sm:$0xff]
  %v3101 = vld [vmem:[#allocation3 + $0x420] sm:$0xff]
  %v3102 = vld [vmem:[#allocation3 + $0x428] sm:$0xff]
  %v3103 = vld [vmem:[#allocation3 + $0x430] sm:$0xff]
  %v3104 = vld [vmem:[#allocation3 + $0x438] sm:$0xff]
  %v3105 = vld [vmem:[#allocation3 + $0x440] sm:$0xff]
  %v3106 = vld [vmem:[#allocation3 + $0x448] sm:$0xff]
  %v3107 = vld [vmem:[#allocation3 + $0x450] sm:$0xff]
  %v3108 = vld [vmem:[#allocation3 + $0x458] sm:$0xff]
  %v3109 = vld [vmem:[#allocation3 + $0x460] sm:$0xff]
  %v3110 = vld [vmem:[#allocation3 + $0x468] sm:$0xff]
  %v3111 = vld [vmem:[#allocation3 + $0x470] sm:$0xff]
  %v3112 = vld [vmem:[#allocation3 + $0x478] sm:$0xff]
  %v3113 = vld [vmem:[#allocation3 + $0x480] sm:$0xff]
  %v3114 = vld [vmem:[#allocation3 + $0x488] sm:$0xff]
  %v3115 = vld [vmem:[#allocation3 + $0x490] sm:$0xff]
  %v3116 = vld [vmem:[#allocation3 + $0x498] sm:$0xff]
  %v3117 = vld [vmem:[#allocation3 + $0x4a0] sm:$0xff]
  %v3118 = vld [vmem:[#allocation3 + $0x4a8] sm:$0xff]
  %v3119 = vld [vmem:[#allocation3 + $0x4b0] sm:$0xff]
  %v3120 = vld [vmem:[#allocation3 + $0x4b8] sm:$0xff]
  %v3121 = vld [vmem:[#allocation3 + $0x4c0] sm:$0xff]
  %v3122 = vld [vmem:[#allocation3 + $0x4c8] sm:$0xff]
  %v3123 = vld [vmem:[#allocation3 + $0x4d0] sm:$0xff]
  %v3124 = vld [vmem:[#allocation3 + $0x4d8] sm:$0xff]
  %v3125 = vld [vmem:[#allocation3 + $0x4e0] sm:$0xff]
  %v3126 = vld [vmem:[#allocation3 + $0x4e8] sm:$0xff]
  %v3127 = vld [vmem:[#allocation3 + $0x4f0] sm:$0xff]
  %v3128 = vld [vmem:[#allocation3 + $0x4f8] sm:$0xff]
  %v3129 = vld [vmem:[#allocation3 + $0x500] sm:$0xff]
  %v3130 = vld [vmem:[#allocation3 + $0x508] sm:$0xff]
  %v3131 = vld [vmem:[#allocation3 + $0x510] sm:$0xff]
  %v3132 = vld [vmem:[#allocation3 + $0x518] sm:$0xff]
  %v3133 = vld [vmem:[#allocation3 + $0x520] sm:$0xff]
  %v3134 = vld [vmem:[#allocation3 + $0x528] sm:$0xff]
  %v3135 = vld [vmem:[#allocation3 + $0x530] sm:$0xff]
  %v3136 = vld [vmem:[#allocation3 + $0x538] sm:$0xff]
  %v3137 = vld [vmem:[#allocation3 + $0x540] sm:$0xff]
  %v3138 = vld [vmem:[#allocation3 + $0x548] sm:$0xff]
  %v3139 = vld [vmem:[#allocation3 + $0x550] sm:$0xff]
  %v3140 = vld [vmem:[#allocation3 + $0x558] sm:$0xff]
  %v3141 = vld [vmem:[#allocation3 + $0x560] sm:$0xff]
  %v3142 = vld [vmem:[#allocation3 + $0x568] sm:$0xff]
  %v3143 = vld [vmem:[#allocation3 + $0x570] sm:$0xff]
  %v3144 = vld [vmem:[#allocation3 + $0x578] sm:$0xff]
  %v3145 = vld [vmem:[#allocation3 + $0x580] sm:$0xff]
  %v3146 = vld [vmem:[#allocation3 + $0x588] sm:$0xff]
  %v3147 = vld [vmem:[#allocation3 + $0x590] sm:$0xff]
  %v3148 = vld [vmem:[#allocation3 + $0x598] sm:$0xff]
  %v3149 = vld [vmem:[#allocation3 + $0x5a0] sm:$0xff]
  %v3150 = vld [vmem:[#allocation3 + $0x5a8] sm:$0xff]
  %v3151 = vld [vmem:[#allocation3 + $0x5b0] sm:$0xff]
  %v3152 = vld [vmem:[#allocation3 + $0x5b8] sm:$0xff]
  %v3153 = vld [vmem:[#allocation3 + $0x5c0] sm:$0xff]
  %v3154 = vld [vmem:[#allocation3 + $0x5c8] sm:$0xff]
  %v3155 = vld [vmem:[#allocation3 + $0x5d0] sm:$0xff]
  %v3156 = vld [vmem:[#allocation3 + $0x5d8] sm:$0xff]
  %v3157 = vld [vmem:[#allocation3 + $0x5e0] sm:$0xff]
  %v3158 = vld [vmem:[#allocation3 + $0x5e8] sm:$0xff]
  %v3159 = vld [vmem:[#allocation3 + $0x5f0] sm:$0xff]
  %v3160 = vld [vmem:[#allocation3 + $0x5f8] sm:$0xff]
  %v3161 = vld [vmem:[#allocation3 + $0x600] sm:$0xff]
  %v3162 = vld [vmem:[#allocation3 + $0x608] sm:$0xff]
  %v3163 = vld [vmem:[#allocation3 + $0x610] sm:$0xff]
  %v3164 = vld [vmem:[#allocation3 + $0x618] sm:$0xff]
  %v3165 = vld [vmem:[#allocation3 + $0x620] sm:$0xff]
  %v3166 = vld [vmem:[#allocation3 + $0x628] sm:$0xff]
  %v3167 = vld [vmem:[#allocation3 + $0x630] sm:$0xff]
  %v3168 = vld [vmem:[#allocation3 + $0x638] sm:$0xff]
  %v3169 = vld [vmem:[#allocation3 + $0x640] sm:$0xff]
  %v3170 = vld [vmem:[#allocation3 + $0x648] sm:$0xff]
  %v3171 = vld [vmem:[#allocation3 + $0x650] sm:$0xff]
  %v3172 = vld [vmem:[#allocation3 + $0x658] sm:$0xff]
  %v3173 = vld [vmem:[#allocation3 + $0x660] sm:$0xff]
  %v3174 = vld [vmem:[#allocation3 + $0x668] sm:$0xff]
  %v3175 = vld [vmem:[#allocation3 + $0x670] sm:$0xff]
  %v3176 = vld [vmem:[#allocation3 + $0x678] sm:$0xff]
  %v3177 = vld [vmem:[#allocation3 + $0x680] sm:$0xff]
  %v3178 = vld [vmem:[#allocation3 + $0x688] sm:$0xff]
  %v3179 = vld [vmem:[#allocation3 + $0x690] sm:$0xff]
  %v3180 = vld [vmem:[#allocation3 + $0x698] sm:$0xff]
  %v3181 = vld [vmem:[#allocation3 + $0x6a0] sm:$0xff]
  %v3182 = vld [vmem:[#allocation3 + $0x6a8] sm:$0xff]
  %v3183 = vld [vmem:[#allocation3 + $0x6b0] sm:$0xff]
  %v3184 = vld [vmem:[#allocation3 + $0x6b8] sm:$0xff]
  %v3185 = vld [vmem:[#allocation3 + $0x6c0] sm:$0xff]
  %v3186 = vld [vmem:[#allocation3 + $0x6c8] sm:$0xff]
  %v3187 = vld [vmem:[#allocation3 + $0x6d0] sm:$0xff]
  %v3188 = vld [vmem:[#allocation3 + $0x6d8] sm:$0xff]
  %v3189 = vld [vmem:[#allocation3 + $0x6e0] sm:$0xff]
  %v3190 = vld [vmem:[#allocation3 + $0x6e8] sm:$0xff]
  %v3191 = vld [vmem:[#allocation3 + $0x6f0] sm:$0xff]
  %v3192 = vld [vmem:[#allocation3 + $0x6f8] sm:$0xff]
  %v3193 = vld [vmem:[#allocation3 + $0x700] sm:$0xff]
  %v3194 = vld [vmem:[#allocation3 + $0x708] sm:$0xff]
  %v3195 = vld [vmem:[#allocation3 + $0x710] sm:$0xff]
  %v3196 = vld [vmem:[#allocation3 + $0x718] sm:$0xff]
  %v3197 = vld [vmem:[#allocation3 + $0x720] sm:$0xff]
  %v3198 = vld [vmem:[#allocation3 + $0x728] sm:$0xff]
  %v3199 = vld [vmem:[#allocation3 + $0x730] sm:$0xff]
  %v3200 = vld [vmem:[#allocation3 + $0x738] sm:$0xff]
  %v3201 = vld [vmem:[#allocation3 + $0x740] sm:$0xff]
  %v3202 = vld [vmem:[#allocation3 + $0x748] sm:$0xff]
  %v3203 = vld [vmem:[#allocation3 + $0x750] sm:$0xff]
  %v3204 = vld [vmem:[#allocation3 + $0x758] sm:$0xff]
  %v3205 = vld [vmem:[#allocation3 + $0x760] sm:$0xff]
  %v3206 = vld [vmem:[#allocation3 + $0x768] sm:$0xff]
  %v3207 = vld [vmem:[#allocation3 + $0x770] sm:$0xff]
  %v3208 = vld [vmem:[#allocation3 + $0x778] sm:$0xff]
  %v3209 = vld [vmem:[#allocation3 + $0x780] sm:$0xff]
  %v3210 = vld [vmem:[#allocation3 + $0x788] sm:$0xff]
  %v3211 = vld [vmem:[#allocation3 + $0x790] sm:$0xff]
  %v3212 = vld [vmem:[#allocation3 + $0x798] sm:$0xff]
  %v3213 = vld [vmem:[#allocation3 + $0x7a0] sm:$0xff]
  %v3214 = vld [vmem:[#allocation3 + $0x7a8] sm:$0xff]
  %v3215 = vld [vmem:[#allocation3 + $0x7b0] sm:$0xff]
  %v3216 = vld [vmem:[#allocation3 + $0x7b8] sm:$0xff]
  %v3217 = vld [vmem:[#allocation3 + $0x7c0] sm:$0xff]
  %v3218 = vld [vmem:[#allocation3 + $0x7c8] sm:$0xff]
  %v3219 = vld [vmem:[#allocation3 + $0x7d0] sm:$0xff]
  %v3220 = vld [vmem:[#allocation3 + $0x7d8] sm:$0xff]
  %v3221 = vld [vmem:[#allocation3 + $0x7e0] sm:$0xff]
  %v3222 = vld [vmem:[#allocation3 + $0x7e8] sm:$0xff]
  %v3223 = vld [vmem:[#allocation3 + $0x7f0] sm:$0xff]
  %v3224 = vld [vmem:[#allocation3 + $0x7f8] sm:$0xff]
  %v3225 = vunpack.c.l.s8.bf16 %v2969
  %v3226 = vunpack.c.l.s8.bf16 %v2970
  %v3227 = vunpack.c.l.s8.bf16 %v2971
  %v3228 = vunpack.c.l.s8.bf16 %v2972
  %v3229 = vunpack.c.l.s8.bf16 %v2973
  %v3230 = vunpack.c.l.s8.bf16 %v2974
  %v3231 = vunpack.c.l.s8.bf16 %v2975
  %v3232 = vunpack.c.l.s8.bf16 %v2976
  %v3233 = vunpack.c.h.s8.bf16 %v2969
  %v3234 = vunpack.c.h.s8.bf16 %v2970
  %v3235 = vunpack.c.h.s8.bf16 %v2971
  %v3236 = vunpack.c.h.s8.bf16 %v2972
  %v3237 = vunpack.c.h.s8.bf16 %v2973
  %v3238 = vunpack.c.h.s8.bf16 %v2974
  %v3239 = vunpack.c.h.s8.bf16 %v2975
  %v3240 = vunpack.c.h.s8.bf16 %v2976
  %v3241 = vunpack.c.l.s8.bf16 %v2977
  %v3242 = vunpack.c.l.s8.bf16 %v2978
  %v3243 = vunpack.c.l.s8.bf16 %v2979
  %v3244 = vunpack.c.l.s8.bf16 %v2980
  %v3245 = vunpack.c.l.s8.bf16 %v2981
  %v3246 = vunpack.c.l.s8.bf16 %v2982
  %v3247 = vunpack.c.l.s8.bf16 %v2983
  %v3248 = vunpack.c.l.s8.bf16 %v2984
  %v3249 = vunpack.c.h.s8.bf16 %v2977
  %v3250 = vunpack.c.h.s8.bf16 %v2978
  %v3251 = vunpack.c.h.s8.bf16 %v2979
  %v3252 = vunpack.c.h.s8.bf16 %v2980
  %v3253 = vunpack.c.h.s8.bf16 %v2981
  %v3254 = vunpack.c.h.s8.bf16 %v2982
  %v3255 = vunpack.c.h.s8.bf16 %v2983
  %v3256 = vunpack.c.h.s8.bf16 %v2984
  %v3257 = vunpack.c.l.s8.bf16 %v2985
  %v3258 = vunpack.c.l.s8.bf16 %v2986
  %v3259 = vunpack.c.l.s8.bf16 %v2987
  %v3260 = vunpack.c.l.s8.bf16 %v2988
  %v3261 = vunpack.c.l.s8.bf16 %v2989
  %v3262 = vunpack.c.l.s8.bf16 %v2990
  %v3263 = vunpack.c.l.s8.bf16 %v2991
  %v3264 = vunpack.c.l.s8.bf16 %v2992
  %v3265 = vunpack.c.h.s8.bf16 %v2985
  %v3266 = vunpack.c.h.s8.bf16 %v2986
  %v3267 = vunpack.c.h.s8.bf16 %v2987
  %v3268 = vunpack.c.h.s8.bf16 %v2988
  %v3269 = vunpack.c.h.s8.bf16 %v2989
  %v3270 = vunpack.c.h.s8.bf16 %v2990
  %v3271 = vunpack.c.h.s8.bf16 %v2991
  %v3272 = vunpack.c.h.s8.bf16 %v2992
  %v3273 = vunpack.c.l.s8.bf16 %v2993
  %v3274 = vunpack.c.l.s8.bf16 %v2994
  %v3275 = vunpack.c.l.s8.bf16 %v2995
  %v3276 = vunpack.c.l.s8.bf16 %v2996
  %v3277 = vunpack.c.l.s8.bf16 %v2997
  %v3278 = vunpack.c.l.s8.bf16 %v2998
  %v3279 = vunpack.c.l.s8.bf16 %v2999
  %v3280 = vunpack.c.l.s8.bf16 %v3000
  %v3281 = vunpack.c.h.s8.bf16 %v2993
  %v3282 = vunpack.c.h.s8.bf16 %v2994
  %v3283 = vunpack.c.h.s8.bf16 %v2995
  %v3284 = vunpack.c.h.s8.bf16 %v2996
  %v3285 = vunpack.c.h.s8.bf16 %v2997
  %v3286 = vunpack.c.h.s8.bf16 %v2998
  %v3287 = vunpack.c.h.s8.bf16 %v2999
  %v3288 = vunpack.c.h.s8.bf16 %v3000
  %v3289 = vunpack.c.l.s8.bf16 %v3001
  %v3290 = vunpack.c.l.s8.bf16 %v3002
  %v3291 = vunpack.c.l.s8.bf16 %v3003
  %v3292 = vunpack.c.l.s8.bf16 %v3004
  %v3293 = vunpack.c.l.s8.bf16 %v3005
  %v3294 = vunpack.c.l.s8.bf16 %v3006
  %v3295 = vunpack.c.l.s8.bf16 %v3007
  %v3296 = vunpack.c.l.s8.bf16 %v3008
  %v3297 = vunpack.c.h.s8.bf16 %v3001
  %v3298 = vunpack.c.h.s8.bf16 %v3002
  %v3299 = vunpack.c.h.s8.bf16 %v3003
  %v3300 = vunpack.c.h.s8.bf16 %v3004
  %v3301 = vunpack.c.h.s8.bf16 %v3005
  %v3302 = vunpack.c.h.s8.bf16 %v3006
  %v3303 = vunpack.c.h.s8.bf16 %v3007
  %v3304 = vunpack.c.h.s8.bf16 %v3008
  %v3305 = vunpack.c.l.s8.bf16 %v3009
  %v3306 = vunpack.c.l.s8.bf16 %v3010
  %v3307 = vunpack.c.l.s8.bf16 %v3011
  %v3308 = vunpack.c.l.s8.bf16 %v3012
  %v3309 = vunpack.c.l.s8.bf16 %v3013
  %v3310 = vunpack.c.l.s8.bf16 %v3014
  %v3311 = vunpack.c.l.s8.bf16 %v3015
  %v3312 = vunpack.c.l.s8.bf16 %v3016
  %v3313 = vunpack.c.h.s8.bf16 %v3009
  %v3314 = vunpack.c.h.s8.bf16 %v3010
  %v3315 = vunpack.c.h.s8.bf16 %v3011
  %v3316 = vunpack.c.h.s8.bf16 %v3012
  %v3317 = vunpack.c.h.s8.bf16 %v3013
  %v3318 = vunpack.c.h.s8.bf16 %v3014
  %v3319 = vunpack.c.h.s8.bf16 %v3015
  %v3320 = vunpack.c.h.s8.bf16 %v3016
  %v3321 = vunpack.c.l.s8.bf16 %v3017
  %v3322 = vunpack.c.l.s8.bf16 %v3018
  %v3323 = vunpack.c.l.s8.bf16 %v3019
  %v3324 = vunpack.c.l.s8.bf16 %v3020
  %v3325 = vunpack.c.l.s8.bf16 %v3021
  %v3326 = vunpack.c.l.s8.bf16 %v3022
  %v3327 = vunpack.c.l.s8.bf16 %v3023
  %v3328 = vunpack.c.l.s8.bf16 %v3024
  %v3329 = vunpack.c.h.s8.bf16 %v3017
  %v3330 = vunpack.c.h.s8.bf16 %v3018
  %v3331 = vunpack.c.h.s8.bf16 %v3019
  %v3332 = vunpack.c.h.s8.bf16 %v3020
  %v3333 = vunpack.c.h.s8.bf16 %v3021
  %v3334 = vunpack.c.h.s8.bf16 %v3022
  %v3335 = vunpack.c.h.s8.bf16 %v3023
  %v3336 = vunpack.c.h.s8.bf16 %v3024
  %v3337 = vunpack.c.l.s8.bf16 %v3025
  %v3338 = vunpack.c.l.s8.bf16 %v3026
  %v3339 = vunpack.c.l.s8.bf16 %v3027
  %v3340 = vunpack.c.l.s8.bf16 %v3028
  %v3341 = vunpack.c.l.s8.bf16 %v3029
  %v3342 = vunpack.c.l.s8.bf16 %v3030
  %v3343 = vunpack.c.l.s8.bf16 %v3031
  %v3344 = vunpack.c.l.s8.bf16 %v3032
  %v3345 = vunpack.c.h.s8.bf16 %v3025
  %v3346 = vunpack.c.h.s8.bf16 %v3026
  %v3347 = vunpack.c.h.s8.bf16 %v3027
  %v3348 = vunpack.c.h.s8.bf16 %v3028
  %v3349 = vunpack.c.h.s8.bf16 %v3029
  %v3350 = vunpack.c.h.s8.bf16 %v3030
  %v3351 = vunpack.c.h.s8.bf16 %v3031
  %v3352 = vunpack.c.h.s8.bf16 %v3032
  %v3353 = vunpack.c.l.s8.bf16 %v3033
  %v3354 = vunpack.c.l.s8.bf16 %v3034
  %v3355 = vunpack.c.l.s8.bf16 %v3035
  %v3356 = vunpack.c.l.s8.bf16 %v3036
  %v3357 = vunpack.c.l.s8.bf16 %v3037
  %v3358 = vunpack.c.l.s8.bf16 %v3038
  %v3359 = vunpack.c.l.s8.bf16 %v3039
  %v3360 = vunpack.c.l.s8.bf16 %v3040
  %v3361 = vunpack.c.h.s8.bf16 %v3033
  %v3362 = vunpack.c.h.s8.bf16 %v3034
  %v3363 = vunpack.c.h.s8.bf16 %v3035
  %v3364 = vunpack.c.h.s8.bf16 %v3036
  %v3365 = vunpack.c.h.s8.bf16 %v3037
  %v3366 = vunpack.c.h.s8.bf16 %v3038
  %v3367 = vunpack.c.h.s8.bf16 %v3039
  %v3368 = vunpack.c.h.s8.bf16 %v3040
  %v3369 = vunpack.c.l.s8.bf16 %v3041
  %v3370 = vunpack.c.l.s8.bf16 %v3042
  %v3371 = vunpack.c.l.s8.bf16 %v3043
  %v3372 = vunpack.c.l.s8.bf16 %v3044
  %v3373 = vunpack.c.l.s8.bf16 %v3045
  %v3374 = vunpack.c.l.s8.bf16 %v3046
  %v3375 = vunpack.c.l.s8.bf16 %v3047
  %v3376 = vunpack.c.l.s8.bf16 %v3048
  %v3377 = vunpack.c.h.s8.bf16 %v3041
  %v3378 = vunpack.c.h.s8.bf16 %v3042
  %v3379 = vunpack.c.h.s8.bf16 %v3043
  %v3380 = vunpack.c.h.s8.bf16 %v3044
  %v3381 = vunpack.c.h.s8.bf16 %v3045
  %v3382 = vunpack.c.h.s8.bf16 %v3046
  %v3383 = vunpack.c.h.s8.bf16 %v3047
  %v3384 = vunpack.c.h.s8.bf16 %v3048
  %v3385 = vunpack.c.l.s8.bf16 %v3049
  %v3386 = vunpack.c.l.s8.bf16 %v3050
  %v3387 = vunpack.c.l.s8.bf16 %v3051
  %v3388 = vunpack.c.l.s8.bf16 %v3052
  %v3389 = vunpack.c.l.s8.bf16 %v3053
  %v3390 = vunpack.c.l.s8.bf16 %v3054
  %v3391 = vunpack.c.l.s8.bf16 %v3055
  %v3392 = vunpack.c.l.s8.bf16 %v3056
  %v3393 = vunpack.c.h.s8.bf16 %v3049
  %v3394 = vunpack.c.h.s8.bf16 %v3050
  %v3395 = vunpack.c.h.s8.bf16 %v3051
  %v3396 = vunpack.c.h.s8.bf16 %v3052
  %v3397 = vunpack.c.h.s8.bf16 %v3053
  %v3398 = vunpack.c.h.s8.bf16 %v3054
  %v3399 = vunpack.c.h.s8.bf16 %v3055
  %v3400 = vunpack.c.h.s8.bf16 %v3056
  %v3401 = vunpack.c.l.s8.bf16 %v3057
  %v3402 = vunpack.c.l.s8.bf16 %v3058
  %v3403 = vunpack.c.l.s8.bf16 %v3059
  %v3404 = vunpack.c.l.s8.bf16 %v3060
  %v3405 = vunpack.c.l.s8.bf16 %v3061
  %v3406 = vunpack.c.l.s8.bf16 %v3062
  %v3407 = vunpack.c.l.s8.bf16 %v3063
  %v3408 = vunpack.c.l.s8.bf16 %v3064
  %v3409 = vunpack.c.h.s8.bf16 %v3057
  %v3410 = vunpack.c.h.s8.bf16 %v3058
  %v3411 = vunpack.c.h.s8.bf16 %v3059
  %v3412 = vunpack.c.h.s8.bf16 %v3060
  %v3413 = vunpack.c.h.s8.bf16 %v3061
  %v3414 = vunpack.c.h.s8.bf16 %v3062
  %v3415 = vunpack.c.h.s8.bf16 %v3063
  %v3416 = vunpack.c.h.s8.bf16 %v3064
  %v3417 = vunpack.c.l.s8.bf16 %v3065
  %v3418 = vunpack.c.l.s8.bf16 %v3066
  %v3419 = vunpack.c.l.s8.bf16 %v3067
  %v3420 = vunpack.c.l.s8.bf16 %v3068
  %v3421 = vunpack.c.l.s8.bf16 %v3069
  %v3422 = vunpack.c.l.s8.bf16 %v3070
  %v3423 = vunpack.c.l.s8.bf16 %v3071
  %v3424 = vunpack.c.l.s8.bf16 %v3072
  %v3425 = vunpack.c.h.s8.bf16 %v3065
  %v3426 = vunpack.c.h.s8.bf16 %v3066
  %v3427 = vunpack.c.h.s8.bf16 %v3067
  %v3428 = vunpack.c.h.s8.bf16 %v3068
  %v3429 = vunpack.c.h.s8.bf16 %v3069
  %v3430 = vunpack.c.h.s8.bf16 %v3070
  %v3431 = vunpack.c.h.s8.bf16 %v3071
  %v3432 = vunpack.c.h.s8.bf16 %v3072
  %v3433 = vunpack.c.l.s8.bf16 %v3073
  %v3434 = vunpack.c.l.s8.bf16 %v3074
  %v3435 = vunpack.c.l.s8.bf16 %v3075
  %v3436 = vunpack.c.l.s8.bf16 %v3076
  %v3437 = vunpack.c.l.s8.bf16 %v3077
  %v3438 = vunpack.c.l.s8.bf16 %v3078
  %v3439 = vunpack.c.l.s8.bf16 %v3079
  %v3440 = vunpack.c.l.s8.bf16 %v3080
  %v3441 = vunpack.c.h.s8.bf16 %v3073
  %v3442 = vunpack.c.h.s8.bf16 %v3074
  %v3443 = vunpack.c.h.s8.bf16 %v3075
  %v3444 = vunpack.c.h.s8.bf16 %v3076
  %v3445 = vunpack.c.h.s8.bf16 %v3077
  %v3446 = vunpack.c.h.s8.bf16 %v3078
  %v3447 = vunpack.c.h.s8.bf16 %v3079
  %v3448 = vunpack.c.h.s8.bf16 %v3080
  %v3449 = vunpack.c.l.s8.bf16 %v3081
  %v3450 = vunpack.c.l.s8.bf16 %v3082
  %v3451 = vunpack.c.l.s8.bf16 %v3083
  %v3452 = vunpack.c.l.s8.bf16 %v3084
  %v3453 = vunpack.c.l.s8.bf16 %v3085
  %v3454 = vunpack.c.l.s8.bf16 %v3086
  %v3455 = vunpack.c.l.s8.bf16 %v3087
  %v3456 = vunpack.c.l.s8.bf16 %v3088
  %v3457 = vunpack.c.h.s8.bf16 %v3081
  %v3458 = vunpack.c.h.s8.bf16 %v3082
  %v3459 = vunpack.c.h.s8.bf16 %v3083
  %v3460 = vunpack.c.h.s8.bf16 %v3084
  %v3461 = vunpack.c.h.s8.bf16 %v3085
  %v3462 = vunpack.c.h.s8.bf16 %v3086
  %v3463 = vunpack.c.h.s8.bf16 %v3087
  %v3464 = vunpack.c.h.s8.bf16 %v3088
  %v3465 = vunpack.c.l.s8.bf16 %v3089
  %v3466 = vunpack.c.l.s8.bf16 %v3090
  %v3467 = vunpack.c.l.s8.bf16 %v3091
  %v3468 = vunpack.c.l.s8.bf16 %v3092
  %v3469 = vunpack.c.l.s8.bf16 %v3093
  %v3470 = vunpack.c.l.s8.bf16 %v3094
  %v3471 = vunpack.c.l.s8.bf16 %v3095
  %v3472 = vunpack.c.l.s8.bf16 %v3096
  %v3473 = vunpack.c.h.s8.bf16 %v3089
  %v3474 = vunpack.c.h.s8.bf16 %v3090
  %v3475 = vunpack.c.h.s8.bf16 %v3091
  %v3476 = vunpack.c.h.s8.bf16 %v3092
  %v3477 = vunpack.c.h.s8.bf16 %v3093
  %v3478 = vunpack.c.h.s8.bf16 %v3094
  %v3479 = vunpack.c.h.s8.bf16 %v3095
  %v3480 = vunpack.c.h.s8.bf16 %v3096
  %v3481 = vunpack.c.l.s8.bf16 %v3097
  %v3482 = vunpack.c.l.s8.bf16 %v3098
  %v3483 = vunpack.c.l.s8.bf16 %v3099
  %v3484 = vunpack.c.l.s8.bf16 %v3100
  %v3485 = vunpack.c.l.s8.bf16 %v3101
  %v3486 = vunpack.c.l.s8.bf16 %v3102
  %v3487 = vunpack.c.l.s8.bf16 %v3103
  %v3488 = vunpack.c.l.s8.bf16 %v3104
  %v3489 = vunpack.c.h.s8.bf16 %v3097
  %v3490 = vunpack.c.h.s8.bf16 %v3098
  %v3491 = vunpack.c.h.s8.bf16 %v3099
  %v3492 = vunpack.c.h.s8.bf16 %v3100
  %v3493 = vunpack.c.h.s8.bf16 %v3101
  %v3494 = vunpack.c.h.s8.bf16 %v3102
  %v3495 = vunpack.c.h.s8.bf16 %v3103
  %v3496 = vunpack.c.h.s8.bf16 %v3104
  %v3497 = vunpack.c.l.s8.bf16 %v3105
  %v3498 = vunpack.c.l.s8.bf16 %v3106
  %v3499 = vunpack.c.l.s8.bf16 %v3107
  %v3500 = vunpack.c.l.s8.bf16 %v3108
  %v3501 = vunpack.c.l.s8.bf16 %v3109
  %v3502 = vunpack.c.l.s8.bf16 %v3110
  %v3503 = vunpack.c.l.s8.bf16 %v3111
  %v3504 = vunpack.c.l.s8.bf16 %v3112
  %v3505 = vunpack.c.h.s8.bf16 %v3105
  %v3506 = vunpack.c.h.s8.bf16 %v3106
  %v3507 = vunpack.c.h.s8.bf16 %v3107
  %v3508 = vunpack.c.h.s8.bf16 %v3108
  %v3509 = vunpack.c.h.s8.bf16 %v3109
  %v3510 = vunpack.c.h.s8.bf16 %v3110
  %v3511 = vunpack.c.h.s8.bf16 %v3111
  %v3512 = vunpack.c.h.s8.bf16 %v3112
  %v3513 = vunpack.c.l.s8.bf16 %v3113
  %v3514 = vunpack.c.l.s8.bf16 %v3114
  %v3515 = vunpack.c.l.s8.bf16 %v3115
  %v3516 = vunpack.c.l.s8.bf16 %v3116
  %v3517 = vunpack.c.l.s8.bf16 %v3117
  %v3518 = vunpack.c.l.s8.bf16 %v3118
  %v3519 = vunpack.c.l.s8.bf16 %v3119
  %v3520 = vunpack.c.l.s8.bf16 %v3120
  %v3521 = vunpack.c.h.s8.bf16 %v3113
  %v3522 = vunpack.c.h.s8.bf16 %v3114
  %v3523 = vunpack.c.h.s8.bf16 %v3115
  %v3524 = vunpack.c.h.s8.bf16 %v3116
  %v3525 = vunpack.c.h.s8.bf16 %v3117
  %v3526 = vunpack.c.h.s8.bf16 %v3118
  %v3527 = vunpack.c.h.s8.bf16 %v3119
  %v3528 = vunpack.c.h.s8.bf16 %v3120
  %v3529 = vunpack.c.l.s8.bf16 %v3121
  %v3530 = vunpack.c.l.s8.bf16 %v3122
  %v3531 = vunpack.c.l.s8.bf16 %v3123
  %v3532 = vunpack.c.l.s8.bf16 %v3124
  %v3533 = vunpack.c.l.s8.bf16 %v3125
  %v3534 = vunpack.c.l.s8.bf16 %v3126
  %v3535 = vunpack.c.l.s8.bf16 %v3127
  %v3536 = vunpack.c.l.s8.bf16 %v3128
  %v3537 = vunpack.c.h.s8.bf16 %v3121
  %v3538 = vunpack.c.h.s8.bf16 %v3122
  %v3539 = vunpack.c.h.s8.bf16 %v3123
  %v3540 = vunpack.c.h.s8.bf16 %v3124
  %v3541 = vunpack.c.h.s8.bf16 %v3125
  %v3542 = vunpack.c.h.s8.bf16 %v3126
  %v3543 = vunpack.c.h.s8.bf16 %v3127
  %v3544 = vunpack.c.h.s8.bf16 %v3128
  %v3545 = vunpack.c.l.s8.bf16 %v3129
  %v3546 = vunpack.c.l.s8.bf16 %v3130
  %v3547 = vunpack.c.l.s8.bf16 %v3131
  %v3548 = vunpack.c.l.s8.bf16 %v3132
  %v3549 = vunpack.c.l.s8.bf16 %v3133
  %v3550 = vunpack.c.l.s8.bf16 %v3134
  %v3551 = vunpack.c.l.s8.bf16 %v3135
  %v3552 = vunpack.c.l.s8.bf16 %v3136
  %v3553 = vunpack.c.h.s8.bf16 %v3129
  %v3554 = vunpack.c.h.s8.bf16 %v3130
  %v3555 = vunpack.c.h.s8.bf16 %v3131
  %v3556 = vunpack.c.h.s8.bf16 %v3132
  %v3557 = vunpack.c.h.s8.bf16 %v3133
  %v3558 = vunpack.c.h.s8.bf16 %v3134
  %v3559 = vunpack.c.h.s8.bf16 %v3135
  %v3560 = vunpack.c.h.s8.bf16 %v3136
  %v3561 = vunpack.c.l.s8.bf16 %v3137
  %v3562 = vunpack.c.l.s8.bf16 %v3138
  %v3563 = vunpack.c.l.s8.bf16 %v3139
  %v3564 = vunpack.c.l.s8.bf16 %v3140
  %v3565 = vunpack.c.l.s8.bf16 %v3141
  %v3566 = vunpack.c.l.s8.bf16 %v3142
  %v3567 = vunpack.c.l.s8.bf16 %v3143
  %v3568 = vunpack.c.l.s8.bf16 %v3144
  %v3569 = vunpack.c.h.s8.bf16 %v3137
  %v3570 = vunpack.c.h.s8.bf16 %v3138
  %v3571 = vunpack.c.h.s8.bf16 %v3139
  %v3572 = vunpack.c.h.s8.bf16 %v3140
  %v3573 = vunpack.c.h.s8.bf16 %v3141
  %v3574 = vunpack.c.h.s8.bf16 %v3142
  %v3575 = vunpack.c.h.s8.bf16 %v3143
  %v3576 = vunpack.c.h.s8.bf16 %v3144
  %v3577 = vunpack.c.l.s8.bf16 %v3145
  %v3578 = vunpack.c.l.s8.bf16 %v3146
  %v3579 = vunpack.c.l.s8.bf16 %v3147
  %v3580 = vunpack.c.l.s8.bf16 %v3148
  %v3581 = vunpack.c.l.s8.bf16 %v3149
  %v3582 = vunpack.c.l.s8.bf16 %v3150
  %v3583 = vunpack.c.l.s8.bf16 %v3151
  %v3584 = vunpack.c.l.s8.bf16 %v3152
  %v3585 = vunpack.c.h.s8.bf16 %v3145
  %v3586 = vunpack.c.h.s8.bf16 %v3146
  %v3587 = vunpack.c.h.s8.bf16 %v3147
  %v3588 = vunpack.c.h.s8.bf16 %v3148
  %v3589 = vunpack.c.h.s8.bf16 %v3149
  %v3590 = vunpack.c.h.s8.bf16 %v3150
  %v3591 = vunpack.c.h.s8.bf16 %v3151
  %v3592 = vunpack.c.h.s8.bf16 %v3152
  %v3593 = vunpack.c.l.s8.bf16 %v3153
  %v3594 = vunpack.c.l.s8.bf16 %v3154
  %v3595 = vunpack.c.l.s8.bf16 %v3155
  %v3596 = vunpack.c.l.s8.bf16 %v3156
  %v3597 = vunpack.c.l.s8.bf16 %v3157
  %v3598 = vunpack.c.l.s8.bf16 %v3158
  %v3599 = vunpack.c.l.s8.bf16 %v3159
  %v3600 = vunpack.c.l.s8.bf16 %v3160
  %v3601 = vunpack.c.h.s8.bf16 %v3153
  %v3602 = vunpack.c.h.s8.bf16 %v3154
  %v3603 = vunpack.c.h.s8.bf16 %v3155
  %v3604 = vunpack.c.h.s8.bf16 %v3156
  %v3605 = vunpack.c.h.s8.bf16 %v3157
  %v3606 = vunpack.c.h.s8.bf16 %v3158
  %v3607 = vunpack.c.h.s8.bf16 %v3159
  %v3608 = vunpack.c.h.s8.bf16 %v3160
  %v3609 = vunpack.c.l.s8.bf16 %v3161
  %v3610 = vunpack.c.l.s8.bf16 %v3162
  %v3611 = vunpack.c.l.s8.bf16 %v3163
  %v3612 = vunpack.c.l.s8.bf16 %v3164
  %v3613 = vunpack.c.l.s8.bf16 %v3165
  %v3614 = vunpack.c.l.s8.bf16 %v3166
  %v3615 = vunpack.c.l.s8.bf16 %v3167
  %v3616 = vunpack.c.l.s8.bf16 %v3168
  %v3617 = vunpack.c.h.s8.bf16 %v3161
  %v3618 = vunpack.c.h.s8.bf16 %v3162
  %v3619 = vunpack.c.h.s8.bf16 %v3163
  %v3620 = vunpack.c.h.s8.bf16 %v3164
  %v3621 = vunpack.c.h.s8.bf16 %v3165
  %v3622 = vunpack.c.h.s8.bf16 %v3166
  %v3623 = vunpack.c.h.s8.bf16 %v3167
  %v3624 = vunpack.c.h.s8.bf16 %v3168
  %v3625 = vunpack.c.l.s8.bf16 %v3169
  %v3626 = vunpack.c.l.s8.bf16 %v3170
  %v3627 = vunpack.c.l.s8.bf16 %v3171
  %v3628 = vunpack.c.l.s8.bf16 %v3172
  %v3629 = vunpack.c.l.s8.bf16 %v3173
  %v3630 = vunpack.c.l.s8.bf16 %v3174
  %v3631 = vunpack.c.l.s8.bf16 %v3175
  %v3632 = vunpack.c.l.s8.bf16 %v3176
  %v3633 = vunpack.c.h.s8.bf16 %v3169
  %v3634 = vunpack.c.h.s8.bf16 %v3170
  %v3635 = vunpack.c.h.s8.bf16 %v3171
  %v3636 = vunpack.c.h.s8.bf16 %v3172
  %v3637 = vunpack.c.h.s8.bf16 %v3173
  %v3638 = vunpack.c.h.s8.bf16 %v3174
  %v3639 = vunpack.c.h.s8.bf16 %v3175
  %v3640 = vunpack.c.h.s8.bf16 %v3176
  %v3641 = vunpack.c.l.s8.bf16 %v3177
  %v3642 = vunpack.c.l.s8.bf16 %v3178
  %v3643 = vunpack.c.l.s8.bf16 %v3179
  %v3644 = vunpack.c.l.s8.bf16 %v3180
  %v3645 = vunpack.c.l.s8.bf16 %v3181
  %v3646 = vunpack.c.l.s8.bf16 %v3182
  %v3647 = vunpack.c.l.s8.bf16 %v3183
  %v3648 = vunpack.c.l.s8.bf16 %v3184
  %v3649 = vunpack.c.h.s8.bf16 %v3177
  %v3650 = vunpack.c.h.s8.bf16 %v3178
  %v3651 = vunpack.c.h.s8.bf16 %v3179
  %v3652 = vunpack.c.h.s8.bf16 %v3180
  %v3653 = vunpack.c.h.s8.bf16 %v3181
  %v3654 = vunpack.c.h.s8.bf16 %v3182
  %v3655 = vunpack.c.h.s8.bf16 %v3183
  %v3656 = vunpack.c.h.s8.bf16 %v3184
  %v3657 = vunpack.c.l.s8.bf16 %v3185
  %v3658 = vunpack.c.l.s8.bf16 %v3186
  %v3659 = vunpack.c.l.s8.bf16 %v3187
  %v3660 = vunpack.c.l.s8.bf16 %v3188
  %v3661 = vunpack.c.l.s8.bf16 %v3189
  %v3662 = vunpack.c.l.s8.bf16 %v3190
  %v3663 = vunpack.c.l.s8.bf16 %v3191
  %v3664 = vunpack.c.l.s8.bf16 %v3192
  %v3665 = vunpack.c.h.s8.bf16 %v3185
  %v3666 = vunpack.c.h.s8.bf16 %v3186
  %v3667 = vunpack.c.h.s8.bf16 %v3187
  %v3668 = vunpack.c.h.s8.bf16 %v3188
  %v3669 = vunpack.c.h.s8.bf16 %v3189
  %v3670 = vunpack.c.h.s8.bf16 %v3190
  %v3671 = vunpack.c.h.s8.bf16 %v3191
  %v3672 = vunpack.c.h.s8.bf16 %v3192
  %v3673 = vunpack.c.l.s8.bf16 %v3193
  %v3674 = vunpack.c.l.s8.bf16 %v3194
  %v3675 = vunpack.c.l.s8.bf16 %v3195
  %v3676 = vunpack.c.l.s8.bf16 %v3196
  %v3677 = vunpack.c.l.s8.bf16 %v3197
  %v3678 = vunpack.c.l.s8.bf16 %v3198
  %v3679 = vunpack.c.l.s8.bf16 %v3199
  %v3680 = vunpack.c.l.s8.bf16 %v3200
  %v3681 = vunpack.c.h.s8.bf16 %v3193
  %v3682 = vunpack.c.h.s8.bf16 %v3194
  %v3683 = vunpack.c.h.s8.bf16 %v3195
  %v3684 = vunpack.c.h.s8.bf16 %v3196
  %v3685 = vunpack.c.h.s8.bf16 %v3197
  %v3686 = vunpack.c.h.s8.bf16 %v3198
  %v3687 = vunpack.c.h.s8.bf16 %v3199
  %v3688 = vunpack.c.h.s8.bf16 %v3200
  %v3689 = vunpack.c.l.s8.bf16 %v3201
  %v3690 = vunpack.c.l.s8.bf16 %v3202
  %v3691 = vunpack.c.l.s8.bf16 %v3203
  %v3692 = vunpack.c.l.s8.bf16 %v3204
  %v3693 = vunpack.c.l.s8.bf16 %v3205
  %v3694 = vunpack.c.l.s8.bf16 %v3206
  %v3695 = vunpack.c.l.s8.bf16 %v3207
  %v3696 = vunpack.c.l.s8.bf16 %v3208
  %v3697 = vunpack.c.h.s8.bf16 %v3201
  %v3698 = vunpack.c.h.s8.bf16 %v3202
  %v3699 = vunpack.c.h.s8.bf16 %v3203
  %v3700 = vunpack.c.h.s8.bf16 %v3204
  %v3701 = vunpack.c.h.s8.bf16 %v3205
  %v3702 = vunpack.c.h.s8.bf16 %v3206
  %v3703 = vunpack.c.h.s8.bf16 %v3207
  %v3704 = vunpack.c.h.s8.bf16 %v3208
  %v3705 = vunpack.c.l.s8.bf16 %v3209
  %v3706 = vunpack.c.l.s8.bf16 %v3210
  %v3707 = vunpack.c.l.s8.bf16 %v3211
  %v3708 = vunpack.c.l.s8.bf16 %v3212
  %v3709 = vunpack.c.l.s8.bf16 %v3213
  %v3710 = vunpack.c.l.s8.bf16 %v3214
  %v3711 = vunpack.c.l.s8.bf16 %v3215
  %v3712 = vunpack.c.l.s8.bf16 %v3216
  %v3713 = vunpack.c.h.s8.bf16 %v3209
  %v3714 = vunpack.c.h.s8.bf16 %v3210
  %v3715 = vunpack.c.h.s8.bf16 %v3211
  %v3716 = vunpack.c.h.s8.bf16 %v3212
  %v3717 = vunpack.c.h.s8.bf16 %v3213
  %v3718 = vunpack.c.h.s8.bf16 %v3214
  %v3719 = vunpack.c.h.s8.bf16 %v3215
  %v3720 = vunpack.c.h.s8.bf16 %v3216
  %v3721 = vunpack.c.l.s8.bf16 %v3217
  %v3722 = vunpack.c.l.s8.bf16 %v3218
  %v3723 = vunpack.c.l.s8.bf16 %v3219
  %v3724 = vunpack.c.l.s8.bf16 %v3220
  %v3725 = vunpack.c.l.s8.bf16 %v3221
  %v3726 = vunpack.c.l.s8.bf16 %v3222
  %v3727 = vunpack.c.l.s8.bf16 %v3223
  %v3728 = vunpack.c.l.s8.bf16 %v3224
  %v3729 = vunpack.c.h.s8.bf16 %v3217
  %v3730 = vunpack.c.h.s8.bf16 %v3218
  %v3731 = vunpack.c.h.s8.bf16 %v3219
  %v3732 = vunpack.c.h.s8.bf16 %v3220
  %v3733 = vunpack.c.h.s8.bf16 %v3221
  %v3734 = vunpack.c.h.s8.bf16 %v3222
  %v3735 = vunpack.c.h.s8.bf16 %v3223
  %v3736 = vunpack.c.h.s8.bf16 %v3224
  %v3737 = vld [vmem:[%s4] sm:$0xf]
  %v3738 = vld [vmem:[%s4 + $0x4] sm:$0xf]
  %v3739 = vpack.c.bf16 %v2962, %v2962
  %v3740 = vpack.c.bf16 %v2963, %v2963
  %v3741 = vpack.c.bf16 %v2964, %v2964
  %v3742 = vpack.c.bf16 %v2965, %v2965
  %v3745 = vunpack.c.l.b16 %v3737
  %v3746 = vunpack.c.l.b16 %v3738
  %v3747 = vpack.c.b16 %v3746, %v3745
  %v3749 = vsel %vm1121, %v3747, 0
  %vm3751 = vcmask 1043456
  %v3753 = vsel %vm3751, %v3739, 0
  %v3756 = vsel %vm3751, %v3740, 0
  %v3759 = vsel %vm3751, %v3741, 0
  %v3762 = vsel %vm3751, %v3742, 0
  %3764 = vmatprep.subr.bf16.mxu0 %v3756
  %3765 = vmatpush1.bf16.msra.mxu0 %v3753
  %3766 = vmatprep.subr.bf16.mxu0 0
  %3767 = vmatpush1.bf16.msra.mxu0 0
  %3768 = vmatprep.subr.bf16.mxu0 0
  %3769 = vmatpush1.bf16.msra.mxu0 0
  %3770 = vmatprep.subr.bf16.mxu0 0
  %3771 = vmatpush1.bf16.msra.mxu0 0
  %3772 = vmatprep.subr.bf16.mxu0 0
  %3773 = vmatpush1.bf16.msra.mxu0 0
  %3774 = vmatprep.subr.bf16.mxu0 0
  %3775 = vmatpush1.bf16.msra.mxu0 0
  %3776 = vmatprep.subr.bf16.mxu0 0
  %3777 = vmatpush1.bf16.msra.mxu0 0
  %3778 = vmatprep.subr.bf16.mxu0 0
  %3779 = vmatpush1.bf16.msra.mxu0 0
  %3780 = vmatprep.subr.bf16.mxu0 0
  %3781 = vmatpush1.bf16.msra.mxu0 0
  %3782 = vmatprep.subr.bf16.mxu0 0
  %3783 = vmatpush1.bf16.msra.mxu0 0
  %3784 = vmatprep.subr.bf16.mxu0 0
  %3785 = vmatpush1.bf16.msra.mxu0 0
  %3786 = vmatprep.subr.bf16.mxu0 0
  %3787 = vmatpush1.bf16.msra.mxu0 0
  %3788 = vmatprep.subr.bf16.mxu0 0
  %3789 = vmatpush1.bf16.msra.mxu0 0
  %3790 = vmatprep.subr.bf16.mxu0 0
  %3791 = vmatpush1.bf16.msra.mxu0 0
  %3792 = vmatprep.subr.bf16.mxu0 0
  %3793 = vmatpush1.bf16.msra.mxu0 0
  %3794 = vmatprep.subr.bf16.mxu0 0
  %3795 = vmatpush1.bf16.msra.mxu0 0
  %3796 = vmatprep.mubr.bf16.mxu0 0
  %3797 = vmatmul.mubr.bf16.gmra.mrb[0].mxu0 %v3749
  %v3798 = vpop.f32.mrb[0].mxu0
  %v3799 = vadd.f32 0.0, %v3798
  %v3800 = vpop.f32.mrb[0].mxu0
  %v3801 = vadd.f32 0.0, %v3800
  %v3802 = vpop.f32.mrb[0].mxu0
  %v3803 = vadd.f32 0.0, %v3802
  %v3804 = vpop.f32.mrb[0].mxu0
  %v3805 = vadd.f32 0.0, %v3804
  %3806 = vdwg.mxu0
  %3807 = vmatprep.subr.bf16.mxu0 %v3762
  %3808 = vmatpush1.bf16.msra.mxu0 %v3759
  %3809 = vmatprep.subr.bf16.mxu0 0
  %3810 = vmatpush1.bf16.msra.mxu0 0
  %3811 = vmatprep.subr.bf16.mxu0 0
  %3812 = vmatpush1.bf16.msra.mxu0 0
  %3813 = vmatprep.subr.bf16.mxu0 0
  %3814 = vmatpush1.bf16.msra.mxu0 0
  %3815 = vmatprep.subr.bf16.mxu0 0
  %3816 = vmatpush1.bf16.msra.mxu0 0
  %3817 = vmatprep.subr.bf16.mxu0 0
  %3818 = vmatpush1.bf16.msra.mxu0 0
  %3819 = vmatprep.subr.bf16.mxu0 0
  %3820 = vmatpush1.bf16.msra.mxu0 0
  %3821 = vmatprep.subr.bf16.mxu0 0
  %3822 = vmatpush1.bf16.msra.mxu0 0
  %3823 = vmatprep.subr.bf16.mxu0 0
  %3824 = vmatpush1.bf16.msra.mxu0 0
  %3825 = vmatprep.subr.bf16.mxu0 0
  %3826 = vmatpush1.bf16.msra.mxu0 0
  %3827 = vmatprep.subr.bf16.mxu0 0
  %3828 = vmatpush1.bf16.msra.mxu0 0
  %3829 = vmatprep.subr.bf16.mxu0 0
  %3830 = vmatpush1.bf16.msra.mxu0 0
  %3831 = vmatprep.subr.bf16.mxu0 0
  %3832 = vmatpush1.bf16.msra.mxu0 0
  %3833 = vmatprep.subr.bf16.mxu0 0
  %3834 = vmatpush1.bf16.msra.mxu0 0
  %3835 = vmatprep.subr.bf16.mxu0 0
  %3836 = vmatpush1.bf16.msra.mxu0 0
  %3837 = vmatprep.subr.bf16.mxu0 0
  %3838 = vmatpush1.bf16.msra.mxu0 0
  %3839 = vmatprep.mubr.bf16.mxu0 0
  %3840 = vmatmul.mubr.bf16.gmra.mrb[0].mxu0 %v3749
  %v3841 = vpop.f32.mrb[0].mxu0
  %v3842 = vadd.f32 0.0, %v3841
  %v3843 = vpop.f32.mrb[0].mxu0
  %v3844 = vadd.f32 0.0, %v3843
  %v3845 = vpop.f32.mrb[0].mxu0
  %v3846 = vadd.f32 0.0, %v3845
  %v3847 = vpop.f32.mrb[0].mxu0
  %v3848 = vadd.f32 0.0, %v3847
  %3849 = vdwg.mxu0
  %v3852 = vrot.slane %v3799, 4
  %v3853 = vrot.slane %v3801, 4
  %v3858 = vrot.slane %v3803, 4
  %v3859 = vrot.slane %v3805, 4
  %v3864 = vrot.slane %v3842, 4
  %v3865 = vrot.slane %v3844, 4
  %v3868 = vrot.slane %v3846, 4
  %v3869 = vrot.slane %v3848, 4
  %v3870 = vrot.slane %v3864, 4
  %v3871 = vrot.slane %v3865, 4
  %v3872 = vrot.slane %v3868, 4
  %v3873 = vrot.slane %v3869, 4
  %v3882 = vsel %vm3751, %v3799, %v3864
  %v3883 = vsel %vm3751, %v3801, %v3865
  %v3884 = vsel %vm3751, %v3852, %v3870
  %v3885 = vsel %vm3751, %v3853, %v3871
  %v3886 = vsel %vm3751, %v3803, %v3868
  %v3887 = vsel %vm3751, %v3805, %v3869
  %v3888 = vsel %vm3751, %v3858, %v3872
  %v3889 = vsel %vm3751, %v3859, %v3873
  %v3890 = vpack.c.bf16 %v3882, %v3882
  %v3891 = vpack.c.bf16 %v3883, %v3883
  %v3892 = vpack.c.bf16 %v3884, %v3884
  %v3893 = vpack.c.bf16 %v3885, %v3885
  %v3894 = vpack.c.bf16 %v3886, %v3886
  %v3895 = vpack.c.bf16 %v3887, %v3887
  %v3896 = vpack.c.bf16 %v3888, %v3888
  %v3897 = vpack.c.bf16 %v3889, %v3889
  %3898 = vmatprep.subr.bf16.mxu0 %v3226
  %3899 = vmatpush1.bf16.msra.mxu0 %v3225
  %3900 = vmatprep.subr.bf16.mxu0 %v3234
  %3901 = vmatpush1.bf16.msra.mxu0 %v3233
  %3902 = vmatprep.subr.bf16.mxu0 %v3242
  %3903 = vmatpush1.bf16.msra.mxu0 %v3241
  %3904 = vmatprep.subr.bf16.mxu0 %v3250
  %3905 = vmatpush1.bf16.msra.mxu0 %v3249
  %3906 = vmatprep.subr.bf16.mxu0 %v3258
  %3907 = vmatpush1.bf16.msra.mxu0 %v3257
  %3908 = vmatprep.subr.bf16.mxu0 %v3266
  %3909 = vmatpush1.bf16.msra.mxu0 %v3265
  %3910 = vmatprep.subr.bf16.mxu0 %v3274
  %3911 = vmatpush1.bf16.msra.mxu0 %v3273
  %3912 = vmatprep.subr.bf16.mxu0 %v3282
  %3913 = vmatpush1.bf16.msra.mxu0 %v3281
  %3914 = vmatprep.subr.bf16.mxu0 %v3290
  %3915 = vmatpush1.bf16.msra.mxu0 %v3289
  %3916 = vmatprep.subr.bf16.mxu0 %v3298
  %3917 = vmatpush1.bf16.msra.mxu0 %v3297
  %3918 = vmatprep.subr.bf16.mxu0 %v3306
  %3919 = vmatpush1.bf16.msra.mxu0 %v3305
  %3920 = vmatprep.subr.bf16.mxu0 %v3314
  %3921 = vmatpush1.bf16.msra.mxu0 %v3313
  %3922 = vmatprep.subr.bf16.mxu0 %v3322
  %3923 = vmatpush1.bf16.msra.mxu0 %v3321
  %3924 = vmatprep.subr.bf16.mxu0 %v3330
  %3925 = vmatpush1.bf16.msra.mxu0 %v3329
  %3926 = vmatprep.subr.bf16.mxu0 %v3338
  %3927 = vmatpush1.bf16.msra.mxu0 %v3337
  %3928 = vmatprep.subr.bf16.mxu0 %v3346
  %3929 = vmatpush1.bf16.msra.mxu0 %v3345
  %3930 = vmatprep.mubr.bf16.mxu0 %v3891
  %3931 = vmatmul.mubr.bf16.gmra.mrb[0].mxu0 %v3890
  %v3932 = vpop.f32.mrb[0].mxu0
  %v3933 = vadd.f32 0.0, %v3932
  %v3934 = vpop.f32.mrb[0].mxu0
  %v3935 = vadd.f32 0.0, %v3934
  %v3936 = vpop.f32.mrb[0].mxu0
  %v3937 = vpop.f32.mrb[0].mxu0
  %3938 = vdwg.mxu0
  %3939 = vmatprep.subr.bf16.mxu0 %v3354
  %3940 = vmatpush1.bf16.msra.mxu0 %v3353
  %3941 = vmatprep.subr.bf16.mxu0 %v3362
  %3942 = vmatpush1.bf16.msra.mxu0 %v3361
  %3943 = vmatprep.subr.bf16.mxu0 %v3370
  %3944 = vmatpush1.bf16.msra.mxu0 %v3369
  %3945 = vmatprep.subr.bf16.mxu0 %v3378
  %3946 = vmatpush1.bf16.msra.mxu0 %v3377
  %3947 = vmatprep.subr.bf16.mxu0 %v3386
  %3948 = vmatpush1.bf16.msra.mxu0 %v3385
  %3949 = vmatprep.subr.bf16.mxu0 %v3394
  %3950 = vmatpush1.bf16.msra.mxu0 %v3393
  %3951 = vmatprep.subr.bf16.mxu0 %v3402
  %3952 = vmatpush1.bf16.msra.mxu0 %v3401
  %3953 = vmatprep.subr.bf16.mxu0 %v3410
  %3954 = vmatpush1.bf16.msra.mxu0 %v3409
  %3955 = vmatprep.subr.bf16.mxu0 %v3418
  %3956 = vmatpush1.bf16.msra.mxu0 %v3417
  %3957 = vmatprep.subr.bf16.mxu0 %v3426
  %3958 = vmatpush1.bf16.msra.mxu0 %v3425
  %3959 = vmatprep.subr.bf16.mxu0 %v3434
  %3960 = vmatpush1.bf16.msra.mxu0 %v3433
  %3961 = vmatprep.subr.bf16.mxu0 %v3442
  %3962 = vmatpush1.bf16.msra.mxu0 %v3441
  %3963 = vmatprep.subr.bf16.mxu0 %v3450
  %3964 = vmatpush1.bf16.msra.mxu0 %v3449
  %3965 = vmatprep.subr.bf16.mxu0 %v3458
  %3966 = vmatpush1.bf16.msra.mxu0 %v3457
  %3967 = vmatprep.subr.bf16.mxu0 %v3466
  %3968 = vmatpush1.bf16.msra.mxu0 %v3465
  %3969 = vmatprep.subr.bf16.mxu0 %v3474
  %3970 = vmatpush1.bf16.msra.mxu0 %v3473
  %3971 = vmatprep.mubr.bf16.mxu0 %v3893
  %3972 = vmatmul.mubr.bf16.gmra.mrb[0].mxu0 %v3892
  %v3973 = vpop.f32.mrb[0].mxu0
  %v3974 = vadd.f32 %v3933, %v3973
  %v3975 = vpop.f32.mrb[0].mxu0
  %v3976 = vadd.f32 %v3935, %v3975
  %v3977 = vpop.f32.mrb[0].mxu0
  %v3978 = vpop.f32.mrb[0].mxu0
  %3979 = vdwg.mxu0
  %3980 = vmatprep.subr.bf16.mxu0 %v3482
  %3981 = vmatpush1.bf16.msra.mxu0 %v3481
  %3982 = vmatprep.subr.bf16.mxu0 %v3490
  %3983 = vmatpush1.bf16.msra.mxu0 %v3489
  %3984 = vmatprep.subr.bf16.mxu0 %v3498
  %3985 = vmatpush1.bf16.msra.mxu0 %v3497
  %3986 = vmatprep.subr.bf16.mxu0 %v3506
  %3987 = vmatpush1.bf16.msra.mxu0 %v3505
  %3988 = vmatprep.subr.bf16.mxu0 %v3514
  %3989 = vmatpush1.bf16.msra.mxu0 %v3513
  %3990 = vmatprep.subr.bf16.mxu0 %v3522
  %3991 = vmatpush1.bf16.msra.mxu0 %v3521
  %3992 = vmatprep.subr.bf16.mxu0 %v3530
  %3993 = vmatpush1.bf16.msra.mxu0 %v3529
  %3994 = vmatprep.subr.bf16.mxu0 %v3538
  %3995 = vmatpush1.bf16.msra.mxu0 %v3537
  %3996 = vmatprep.subr.bf16.mxu0 %v3546
  %3997 = vmatpush1.bf16.msra.mxu0 %v3545
  %3998 = vmatprep.subr.bf16.mxu0 %v3554
  %3999 = vmatpush1.bf16.msra.mxu0 %v3553
  %4000 = vmatprep.subr.bf16.mxu0 %v3562
  %4001 = vmatpush1.bf16.msra.mxu0 %v3561
  %4002 = vmatprep.subr.bf16.mxu0 %v3570
  %4003 = vmatpush1.bf16.msra.mxu0 %v3569
  %4004 = vmatprep.subr.bf16.mxu0 %v3578
  %4005 = vmatpush1.bf16.msra.mxu0 %v3577
  %4006 = vmatprep.subr.bf16.mxu0 %v3586
  %4007 = vmatpush1.bf16.msra.mxu0 %v3585
  %4008 = vmatprep.subr.bf16.mxu0 %v3594
  %4009 = vmatpush1.bf16.msra.mxu0 %v3593
  %4010 = vmatprep.subr.bf16.mxu0 %v3602
  %4011 = vmatpush1.bf16.msra.mxu0 %v3601
  %4012 = vmatprep.mubr.bf16.mxu0 %v3895
  %4013 = vmatmul.mubr.bf16.gmra.mrb[0].mxu0 %v3894
  %v4014 = vpop.f32.mrb[0].mxu0
  %v4015 = vadd.f32 %v3974, %v4014
  %v4016 = vpop.f32.mrb[0].mxu0
  %v4017 = vadd.f32 %v3976, %v4016
  %v4018 = vpop.f32.mrb[0].mxu0
  %v4019 = vpop.f32.mrb[0].mxu0
  %4020 = vdwg.mxu0
  %4021 = vmatprep.subr.bf16.mxu0 %v3610
  %4022 = vmatpush1.bf16.msra.mxu0 %v3609
  %4023 = vmatprep.subr.bf16.mxu0 %v3618
  %4024 = vmatpush1.bf16.msra.mxu0 %v3617
  %4025 = vmatprep.subr.bf16.mxu0 %v3626
  %4026 = vmatpush1.bf16.msra.mxu0 %v3625
  %4027 = vmatprep.subr.bf16.mxu0 %v3634
  %4028 = vmatpush1.bf16.msra.mxu0 %v3633
  %4029 = vmatprep.subr.bf16.mxu0 %v3642
  %4030 = vmatpush1.bf16.msra.mxu0 %v3641
  %4031 = vmatprep.subr.bf16.mxu0 %v3650
  %4032 = vmatpush1.bf16.msra.mxu0 %v3649
  %4033 = vmatprep.subr.bf16.mxu0 %v3658
  %4034 = vmatpush1.bf16.msra.mxu0 %v3657
  %4035 = vmatprep.subr.bf16.mxu0 %v3666
  %4036 = vmatpush1.bf16.msra.mxu0 %v3665
  %4037 = vmatprep.subr.bf16.mxu0 %v3674
  %4038 = vmatpush1.bf16.msra.mxu0 %v3673
  %4039 = vmatprep.subr.bf16.mxu0 %v3682
  %4040 = vmatpush1.bf16.msra.mxu0 %v3681
  %4041 = vmatprep.subr.bf16.mxu0 %v3690
  %4042 = vmatpush1.bf16.msra.mxu0 %v3689
  %4043 = vmatprep.subr.bf16.mxu0 %v3698
  %4044 = vmatpush1.bf16.msra.mxu0 %v3697
  %4045 = vmatprep.subr.bf16.mxu0 %v3706
  %4046 = vmatpush1.bf16.msra.mxu0 %v3705
  %4047 = vmatprep.subr.bf16.mxu0 %v3714
  %4048 = vmatpush1.bf16.msra.mxu0 %v3713
  %4049 = vmatprep.subr.bf16.mxu0 %v3722
  %4050 = vmatpush1.bf16.msra.mxu0 %v3721
  %4051 = vmatprep.subr.bf16.mxu0 %v3730
  %4052 = vmatpush1.bf16.msra.mxu0 %v3729
  %4053 = vmatprep.mubr.bf16.mxu0 %v3897
  %4054 = vmatmul.mubr.bf16.gmra.mrb[0].mxu0 %v3896
  %v4055 = vpop.f32.mrb[0].mxu0
  %v4056 = vadd.f32 %v4015, %v4055
  %v4057 = vpop.f32.mrb[0].mxu0
  %v4058 = vadd.f32 %v4017, %v4057
  %v4059 = vpop.f32.mrb[0].mxu0
  %v4060 = vpop.f32.mrb[0].mxu0
  %4061 = vdwg.mxu0
  %4062 = vmatprep.subr.bf16.mxu0 %v3228
  %4063 = vmatpush1.bf16.msra.mxu0 %v3227
  %4064 = vmatprep.subr.bf16.mxu0 %v3236
  %4065 = vmatpush1.bf16.msra.mxu0 %v3235
  %4066 = vmatprep.subr.bf16.mxu0 %v3244
  %4067 = vmatpush1.bf16.msra.mxu0 %v3243
  %4068 = vmatprep.subr.bf16.mxu0 %v3252
  %4069 = vmatpush1.bf16.msra.mxu0 %v3251
  %4070 = vmatprep.subr.bf16.mxu0 %v3260
  %4071 = vmatpush1.bf16.msra.mxu0 %v3259
  %4072 = vmatprep.subr.bf16.mxu0 %v3268
  %4073 = vmatpush1.bf16.msra.mxu0 %v3267
  %4074 = vmatprep.subr.bf16.mxu0 %v3276
  %4075 = vmatpush1.bf16.msra.mxu0 %v3275
  %4076 = vmatprep.subr.bf16.mxu0 %v3284
  %4077 = vmatpush1.bf16.msra.mxu0 %v3283
  %4078 = vmatprep.subr.bf16.mxu0 %v3292
  %4079 = vmatpush1.bf16.msra.mxu0 %v3291
  %4080 = vmatprep.subr.bf16.mxu0 %v3300
  %4081 = vmatpush1.bf16.msra.mxu0 %v3299
  %4082 = vmatprep.subr.bf16.mxu0 %v3308
  %4083 = vmatpush1.bf16.msra.mxu0 %v3307
  %4084 = vmatprep.subr.bf16.mxu0 %v3316
  %4085 = vmatpush1.bf16.msra.mxu0 %v3315
  %4086 = vmatprep.subr.bf16.mxu0 %v3324
  %4087 = vmatpush1.bf16.msra.mxu0 %v3323
  %4088 = vmatprep.subr.bf16.mxu0 %v3332
  %4089 = vmatpush1.bf16.msra.mxu0 %v3331
  %4090 = vmatprep.subr.bf16.mxu0 %v3340
  %4091 = vmatpush1.bf16.msra.mxu0 %v3339
  %4092 = vmatprep.subr.bf16.mxu0 %v3348
  %4093 = vmatpush1.bf16.msra.mxu0 %v3347
  %4094 = vmatprep.mubr.bf16.mxu0 %v3891
  %4095 = vmatmul.mubr.bf16.gmra.mrb[0].mxu0 %v3890
  %v4096 = vpop.f32.mrb[0].mxu0
  %v4097 = vadd.f32 0.0, %v4096
  %v4098 = vpop.f32.mrb[0].mxu0
  %v4099 = vadd.f32 0.0, %v4098
  %v4100 = vpop.f32.mrb[0].mxu0
  %v4101 = vpop.f32.mrb[0].mxu0
  %4102 = vdwg.mxu0
  %4103 = vmatprep.subr.bf16.mxu0 %v3356
  %4104 = vmatpush1.bf16.msra.mxu0 %v3355
  %4105 = vmatprep.subr.bf16.mxu0 %v3364
  %4106 = vmatpush1.bf16.msra.mxu0 %v3363
  %4107 = vmatprep.subr.bf16.mxu0 %v3372
  %4108 = vmatpush1.bf16.msra.mxu0 %v3371
  %4109 = vmatprep.subr.bf16.mxu0 %v3380
  %4110 = vmatpush1.bf16.msra.mxu0 %v3379
  %4111 = vmatprep.subr.bf16.mxu0 %v3388
  %4112 = vmatpush1.bf16.msra.mxu0 %v3387
  %4113 = vmatprep.subr.bf16.mxu0 %v3396
  %4114 = vmatpush1.bf16.msra.mxu0 %v3395
  %4115 = vmatprep.subr.bf16.mxu0 %v3404
  %4116 = vmatpush1.bf16.msra.mxu0 %v3403
  %4117 = vmatprep.subr.bf16.mxu0 %v3412
  %4118 = vmatpush1.bf16.msra.mxu0 %v3411
  %4119 = vmatprep.subr.bf16.mxu0 %v3420
  %4120 = vmatpush1.bf16.msra.mxu0 %v3419
  %4121 = vmatprep.subr.bf16.mxu0 %v3428
  %4122 = vmatpush1.bf16.msra.mxu0 %v3427
  %4123 = vmatprep.subr.bf16.mxu0 %v3436
  %4124 = vmatpush1.bf16.msra.mxu0 %v3435
  %4125 = vmatprep.subr.bf16.mxu0 %v3444
  %4126 = vmatpush1.bf16.msra.mxu0 %v3443
  %4127 = vmatprep.subr.bf16.mxu0 %v3452
  %4128 = vmatpush1.bf16.msra.mxu0 %v3451
  %4129 = vmatprep.subr.bf16.mxu0 %v3460
  %4130 = vmatpush1.bf16.msra.mxu0 %v3459
  %4131 = vmatprep.subr.bf16.mxu0 %v3468
  %4132 = vmatpush1.bf16.msra.mxu0 %v3467
  %4133 = vmatprep.subr.bf16.mxu0 %v3476
  %4134 = vmatpush1.bf16.msra.mxu0 %v3475
  %4135 = vmatprep.mubr.bf16.mxu0 %v3893
  %4136 = vmatmul.mubr.bf16.gmra.mrb[0].mxu0 %v3892
  %v4137 = vpop.f32.mrb[0].mxu0
  %v4138 = vadd.f32 %v4097, %v4137
  %v4139 = vpop.f32.mrb[0].mxu0
  %v4140 = vadd.f32 %v4099, %v4139
  %v4141 = vpop.f32.mrb[0].mxu0
  %v4142 = vpop.f32.mrb[0].mxu0
  %4143 = vdwg.mxu0
  %4144 = vmatprep.subr.bf16.mxu0 %v3484
  %4145 = vmatpush1.bf16.msra.mxu0 %v3483
  %4146 = vmatprep.subr.bf16.mxu0 %v3492
  %4147 = vmatpush1.bf16.msra.mxu0 %v3491
  %4148 = vmatprep.subr.bf16.mxu0 %v3500
  %4149 = vmatpush1.bf16.msra.mxu0 %v3499
  %4150 = vmatprep.subr.bf16.mxu0 %v3508
  %4151 = vmatpush1.bf16.msra.mxu0 %v3507
  %4152 = vmatprep.subr.bf16.mxu0 %v3516
  %4153 = vmatpush1.bf16.msra.mxu0 %v3515
  %4154 = vmatprep.subr.bf16.mxu0 %v3524
  %4155 = vmatpush1.bf16.msra.mxu0 %v3523
  %4156 = vmatprep.subr.bf16.mxu0 %v3532
  %4157 = vmatpush1.bf16.msra.mxu0 %v3531
  %4158 = vmatprep.subr.bf16.mxu0 %v3540
  %4159 = vmatpush1.bf16.msra.mxu0 %v3539
  %4160 = vmatprep.subr.bf16.mxu0 %v3548
  %4161 = vmatpush1.bf16.msra.mxu0 %v3547
  %4162 = vmatprep.subr.bf16.mxu0 %v3556
  %4163 = vmatpush1.bf16.msra.mxu0 %v3555
  %4164 = vmatprep.subr.bf16.mxu0 %v3564
  %4165 = vmatpush1.bf16.msra.mxu0 %v3563
  %4166 = vmatprep.subr.bf16.mxu0 %v3572
  %4167 = vmatpush1.bf16.msra.mxu0 %v3571
  %4168 = vmatprep.subr.bf16.mxu0 %v3580
  %4169 = vmatpush1.bf16.msra.mxu0 %v3579
  %4170 = vmatprep.subr.bf16.mxu0 %v3588
  %4171 = vmatpush1.bf16.msra.mxu0 %v3587
  %4172 = vmatprep.subr.bf16.mxu0 %v3596
  %4173 = vmatpush1.bf16.msra.mxu0 %v3595
  %4174 = vmatprep.subr.bf16.mxu0 %v3604
  %4175 = vmatpush1.bf16.msra.mxu0 %v3603
  %4176 = vmatprep.mubr.bf16.mxu0 %v3895
  %4177 = vmatmul.mubr.bf16.gmra.mrb[0].mxu0 %v3894
  %v4178 = vpop.f32.mrb[0].mxu0
  %v4179 = vadd.f32 %v4138, %v4178
  %v4180 = vpop.f32.mrb[0].mxu0
  %v4181 = vadd.f32 %v4140, %v4180
  %v4182 = vpop.f32.mrb[0].mxu0
  %v4183 = vpop.f32.mrb[0].mxu0
  %4184 = vdwg.mxu0
  %4185 = vmatprep.subr.bf16.mxu0 %v3612
  %4186 = vmatpush1.bf16.msra.mxu0 %v3611
  %4187 = vmatprep.subr.bf16.mxu0 %v3620
  %4188 = vmatpush1.bf16.msra.mxu0 %v3619
  %4189 = vmatprep.subr.bf16.mxu0 %v3628
  %4190 = vmatpush1.bf16.msra.mxu0 %v3627
  %4191 = vmatprep.subr.bf16.mxu0 %v3636
  %4192 = vmatpush1.bf16.msra.mxu0 %v3635
  %4193 = vmatprep.subr.bf16.mxu0 %v3644
  %4194 = vmatpush1.bf16.msra.mxu0 %v3643
  %4195 = vmatprep.subr.bf16.mxu0 %v3652
  %4196 = vmatpush1.bf16.msra.mxu0 %v3651
  %4197 = vmatprep.subr.bf16.mxu0 %v3660
  %4198 = vmatpush1.bf16.msra.mxu0 %v3659
  %4199 = vmatprep.subr.bf16.mxu0 %v3668
  %4200 = vmatpush1.bf16.msra.mxu0 %v3667
  %4201 = vmatprep.subr.bf16.mxu0 %v3676
  %4202 = vmatpush1.bf16.msra.mxu0 %v3675
  %4203 = vmatprep.subr.bf16.mxu0 %v3684
  %4204 = vmatpush1.bf16.msra.mxu0 %v3683
  %4205 = vmatprep.subr.bf16.mxu0 %v3692
  %4206 = vmatpush1.bf16.msra.mxu0 %v3691
  %4207 = vmatprep.subr.bf16.mxu0 %v3700
  %4208 = vmatpush1.bf16.msra.mxu0 %v3699
  %4209 = vmatprep.subr.bf16.mxu0 %v3708
  %4210 = vmatpush1.bf16.msra.mxu0 %v3707
  %4211 = vmatprep.subr.bf16.mxu0 %v3716
  %4212 = vmatpush1.bf16.msra.mxu0 %v3715
  %4213 = vmatprep.subr.bf16.mxu0 %v3724
  %4214 = vmatpush1.bf16.msra.mxu0 %v3723
  %4215 = vmatprep.subr.bf16.mxu0 %v3732
  %4216 = vmatpush1.bf16.msra.mxu0 %v3731
  %4217 = vmatprep.mubr.bf16.mxu0 %v3897
  %4218 = vmatmul.mubr.bf16.gmra.mrb[0].mxu0 %v3896
  %v4219 = vpop.f32.mrb[0].mxu0
  %v4220 = vadd.f32 %v4179, %v4219
  %v4221 = vpop.f32.mrb[0].mxu0
  %v4222 = vadd.f32 %v4181, %v4221
  %v4223 = vpop.f32.mrb[0].mxu0
  %v4224 = vpop.f32.mrb[0].mxu0
  %4225 = vdwg.mxu0
  %4226 = vmatprep.subr.bf16.mxu0 %v3230
  %4227 = vmatpush1.bf16.msra.mxu0 %v3229
  %4228 = vmatprep.subr.bf16.mxu0 %v3238
  %4229 = vmatpush1.bf16.msra.mxu0 %v3237
  %4230 = vmatprep.subr.bf16.mxu0 %v3246
  %4231 = vmatpush1.bf16.msra.mxu0 %v3245
  %4232 = vmatprep.subr.bf16.mxu0 %v3254
  %4233 = vmatpush1.bf16.msra.mxu0 %v3253
  %4234 = vmatprep.subr.bf16.mxu0 %v3262
  %4235 = vmatpush1.bf16.msra.mxu0 %v3261
  %4236 = vmatprep.subr.bf16.mxu0 %v3270
  %4237 = vmatpush1.bf16.msra.mxu0 %v3269
  %4238 = vmatprep.subr.bf16.mxu0 %v3278
  %4239 = vmatpush1.bf16.msra.mxu0 %v3277
  %4240 = vmatprep.subr.bf16.mxu0 %v3286
  %4241 = vmatpush1.bf16.msra.mxu0 %v3285
  %4242 = vmatprep.subr.bf16.mxu0 %v3294
  %4243 = vmatpush1.bf16.msra.mxu0 %v3293
  %4244 = vmatprep.subr.bf16.mxu0 %v3302
  %4245 = vmatpush1.bf16.msra.mxu0 %v3301
  %4246 = vmatprep.subr.bf16.mxu0 %v3310
  %4247 = vmatpush1.bf16.msra.mxu0 %v3309
  %4248 = vmatprep.subr.bf16.mxu0 %v3318
  %4249 = vmatpush1.bf16.msra.mxu0 %v3317
  %4250 = vmatprep.subr.bf16.mxu0 %v3326
  %4251 = vmatpush1.bf16.msra.mxu0 %v3325
  %4252 = vmatprep.subr.bf16.mxu0 %v3334
  %4253 = vmatpush1.bf16.msra.mxu0 %v3333
  %4254 = vmatprep.subr.bf16.mxu0 %v3342
  %4255 = vmatpush1.bf16.msra.mxu0 %v3341
  %4256 = vmatprep.subr.bf16.mxu0 %v3350
  %4257 = vmatpush1.bf16.msra.mxu0 %v3349
  %4258 = vmatprep.mubr.bf16.mxu0 %v3891
  %4259 = vmatmul.mubr.bf16.gmra.mrb[0].mxu0 %v3890
  %v4260 = vpop.f32.mrb[0].mxu0
  %v4261 = vadd.f32 0.0, %v4260
  %v4262 = vpop.f32.mrb[0].mxu0
  %v4263 = vadd.f32 0.0, %v4262
  %v4264 = vpop.f32.mrb[0].mxu0
  %v4265 = vpop.f32.mrb[0].mxu0
  %4266 = vdwg.mxu0
  %4267 = vmatprep.subr.bf16.mxu0 %v3358
  %4268 = vmatpush1.bf16.msra.mxu0 %v3357
  %4269 = vmatprep.subr.bf16.mxu0 %v3366
  %4270 = vmatpush1.bf16.msra.mxu0 %v3365
  %4271 = vmatprep.subr.bf16.mxu0 %v3374
  %4272 = vmatpush1.bf16.msra.mxu0 %v3373
  %4273 = vmatprep.subr.bf16.mxu0 %v3382
  %4274 = vmatpush1.bf16.msra.mxu0 %v3381
  %4275 = vmatprep.subr.bf16.mxu0 %v3390
  %4276 = vmatpush1.bf16.msra.mxu0 %v3389
  %4277 = vmatprep.subr.bf16.mxu0 %v3398
  %4278 = vmatpush1.bf16.msra.mxu0 %v3397
  %4279 = vmatprep.subr.bf16.mxu0 %v3406
  %4280 = vmatpush1.bf16.msra.mxu0 %v3405
  %4281 = vmatprep.subr.bf16.mxu0 %v3414
  %4282 = vmatpush1.bf16.msra.mxu0 %v3413
  %4283 = vmatprep.subr.bf16.mxu0 %v3422
  %4284 = vmatpush1.bf16.msra.mxu0 %v3421
  %4285 = vmatprep.subr.bf16.mxu0 %v3430
  %4286 = vmatpush1.bf16.msra.mxu0 %v3429
  %4287 = vmatprep.subr.bf16.mxu0 %v3438
  %4288 = vmatpush1.bf16.msra.mxu0 %v3437
  %4289 = vmatprep.subr.bf16.mxu0 %v3446
  %4290 = vmatpush1.bf16.msra.mxu0 %v3445
  %4291 = vmatprep.subr.bf16.mxu0 %v3454
  %4292 = vmatpush1.bf16.msra.mxu0 %v3453
  %4293 = vmatprep.subr.bf16.mxu0 %v3462
  %4294 = vmatpush1.bf16.msra.mxu0 %v3461
  %4295 = vmatprep.subr.bf16.mxu0 %v3470
  %4296 = vmatpush1.bf16.msra.mxu0 %v3469
  %4297 = vmatprep.subr.bf16.mxu0 %v3478
  %4298 = vmatpush1.bf16.msra.mxu0 %v3477
  %4299 = vmatprep.mubr.bf16.mxu0 %v3893
  %4300 = vmatmul.mubr.bf16.gmra.mrb[0].mxu0 %v3892
  %v4301 = vpop.f32.mrb[0].mxu0
  %v4302 = vadd.f32 %v4261, %v4301
  %v4303 = vpop.f32.mrb[0].mxu0
  %v4304 = vadd.f32 %v4263, %v4303
  %v4305 = vpop.f32.mrb[0].mxu0
  %v4306 = vpop.f32.mrb[0].mxu0
  %4307 = vdwg.mxu0
  %4308 = vmatprep.subr.bf16.mxu0 %v3486
  %4309 = vmatpush1.bf16.msra.mxu0 %v3485
  %4310 = vmatprep.subr.bf16.mxu0 %v3494
  %4311 = vmatpush1.bf16.msra.mxu0 %v3493
  %4312 = vmatprep.subr.bf16.mxu0 %v3502
  %4313 = vmatpush1.bf16.msra.mxu0 %v3501
  %4314 = vmatprep.subr.bf16.mxu0 %v3510
  %4315 = vmatpush1.bf16.msra.mxu0 %v3509
  %4316 = vmatprep.subr.bf16.mxu0 %v3518
  %4317 = vmatpush1.bf16.msra.mxu0 %v3517
  %4318 = vmatprep.subr.bf16.mxu0 %v3526
  %4319 = vmatpush1.bf16.msra.mxu0 %v3525
  %4320 = vmatprep.subr.bf16.mxu0 %v3534
  %4321 = vmatpush1.bf16.msra.mxu0 %v3533
  %4322 = vmatprep.subr.bf16.mxu0 %v3542
  %4323 = vmatpush1.bf16.msra.mxu0 %v3541
  %4324 = vmatprep.subr.bf16.mxu0 %v3550
  %4325 = vmatpush1.bf16.msra.mxu0 %v3549
  %4326 = vmatprep.subr.bf16.mxu0 %v3558
  %4327 = vmatpush1.bf16.msra.mxu0 %v3557
  %4328 = vmatprep.subr.bf16.mxu0 %v3566
  %4329 = vmatpush1.bf16.msra.mxu0 %v3565
  %4330 = vmatprep.subr.bf16.mxu0 %v3574
  %4331 = vmatpush1.bf16.msra.mxu0 %v3573
  %4332 = vmatprep.subr.bf16.mxu0 %v3582
  %4333 = vmatpush1.bf16.msra.mxu0 %v3581
  %4334 = vmatprep.subr.bf16.mxu0 %v3590
  %4335 = vmatpush1.bf16.msra.mxu0 %v3589
  %4336 = vmatprep.subr.bf16.mxu0 %v3598
  %4337 = vmatpush1.bf16.msra.mxu0 %v3597
  %4338 = vmatprep.subr.bf16.mxu0 %v3606
  %4339 = vmatpush1.bf16.msra.mxu0 %v3605
  %4340 = vmatprep.mubr.bf16.mxu0 %v3895
  %4341 = vmatmul.mubr.bf16.gmra.mrb[0].mxu0 %v3894
  %v4342 = vpop.f32.mrb[0].mxu0
  %v4343 = vadd.f32 %v4302, %v4342
  %v4344 = vpop.f32.mrb[0].mxu0
  %v4345 = vadd.f32 %v4304, %v4344
  %v4346 = vpop.f32.mrb[0].mxu0
  %v4347 = vpop.f32.mrb[0].mxu0
  %4348 = vdwg.mxu0
  %4349 = vmatprep.subr.bf16.mxu0 %v3614
  %4350 = vmatpush1.bf16.msra.mxu0 %v3613
  %4351 = vmatprep.subr.bf16.mxu0 %v3622
  %4352 = vmatpush1.bf16.msra.mxu0 %v3621
  %4353 = vmatprep.subr.bf16.mxu0 %v3630
  %4354 = vmatpush1.bf16.msra.mxu0 %v3629
  %4355 = vmatprep.subr.bf16.mxu0 %v3638
  %4356 = vmatpush1.bf16.msra.mxu0 %v3637
  %4357 = vmatprep.subr.bf16.mxu0 %v3646
  %4358 = vmatpush1.bf16.msra.mxu0 %v3645
  %4359 = vmatprep.subr.bf16.mxu0 %v3654
  %4360 = vmatpush1.bf16.msra.mxu0 %v3653
  %4361 = vmatprep.subr.bf16.mxu0 %v3662
  %4362 = vmatpush1.bf16.msra.mxu0 %v3661
  %4363 = vmatprep.subr.bf16.mxu0 %v3670
  %4364 = vmatpush1.bf16.msra.mxu0 %v3669
  %4365 = vmatprep.subr.bf16.mxu0 %v3678
  %4366 = vmatpush1.bf16.msra.mxu0 %v3677
  %4367 = vmatprep.subr.bf16.mxu0 %v3686
  %4368 = vmatpush1.bf16.msra.mxu0 %v3685
  %4369 = vmatprep.subr.bf16.mxu0 %v3694
  %4370 = vmatpush1.bf16.msra.mxu0 %v3693
  %4371 = vmatprep.subr.bf16.mxu0 %v3702
  %4372 = vmatpush1.bf16.msra.mxu0 %v3701
  %4373 = vmatprep.subr.bf16.mxu0 %v3710
  %4374 = vmatpush1.bf16.msra.mxu0 %v3709
  %4375 = vmatprep.subr.bf16.mxu0 %v3718
  %4376 = vmatpush1.bf16.msra.mxu0 %v3717
  %4377 = vmatprep.subr.bf16.mxu0 %v3726
  %4378 = vmatpush1.bf16.msra.mxu0 %v3725
  %4379 = vmatprep.subr.bf16.mxu0 %v3734
  %4380 = vmatpush1.bf16.msra.mxu0 %v3733
  %4381 = vmatprep.mubr.bf16.mxu0 %v3897
  %4382 = vmatmul.mubr.bf16.gmra.mrb[0].mxu0 %v3896
  %v4383 = vpop.f32.mrb[0].mxu0
  %v4384 = vadd.f32 %v4343, %v4383
  %v4385 = vpop.f32.mrb[0].mxu0
  %v4386 = vadd.f32 %v4345, %v4385
  %v4387 = vpop.f32.mrb[0].mxu0
  %v4388 = vpop.f32.mrb[0].mxu0
  %4389 = vdwg.mxu0
  %4390 = vmatprep.subr.bf16.mxu0 %v3232
  %4391 = vmatpush1.bf16.msra.mxu0 %v3231
  %4392 = vmatprep.subr.bf16.mxu0 %v3240
  %4393 = vmatpush1.bf16.msra.mxu0 %v3239
  %4394 = vmatprep.subr.bf16.mxu0 %v3248
  %4395 = vmatpush1.bf16.msra.mxu0 %v3247
  %4396 = vmatprep.subr.bf16.mxu0 %v3256
  %4397 = vmatpush1.bf16.msra.mxu0 %v3255
  %4398 = vmatprep.subr.bf16.mxu0 %v3264
  %4399 = vmatpush1.bf16.msra.mxu0 %v3263
  %4400 = vmatprep.subr.bf16.mxu0 %v3272
  %4401 = vmatpush1.bf16.msra.mxu0 %v3271
  %4402 = vmatprep.subr.bf16.mxu0 %v3280
  %4403 = vmatpush1.bf16.msra.mxu0 %v3279
  %4404 = vmatprep.subr.bf16.mxu0 %v3288
  %4405 = vmatpush1.bf16.msra.mxu0 %v3287
  %4406 = vmatprep.subr.bf16.mxu0 %v3296
  %4407 = vmatpush1.bf16.msra.mxu0 %v3295
  %4408 = vmatprep.subr.bf16.mxu0 %v3304
  %4409 = vmatpush1.bf16.msra.mxu0 %v3303
  %4410 = vmatprep.subr.bf16.mxu0 %v3312
  %4411 = vmatpush1.bf16.msra.mxu0 %v3311
  %4412 = vmatprep.subr.bf16.mxu0 %v3320
  %4413 = vmatpush1.bf16.msra.mxu0 %v3319
  %4414 = vmatprep.subr.bf16.mxu0 %v3328
  %4415 = vmatpush1.bf16.msra.mxu0 %v3327
  %4416 = vmatprep.subr.bf16.mxu0 %v3336
  %4417 = vmatpush1.bf16.msra.mxu0 %v3335
  %4418 = vmatprep.subr.bf16.mxu0 %v3344
  %4419 = vmatpush1.bf16.msra.mxu0 %v3343
  %4420 = vmatprep.subr.bf16.mxu0 %v3352
  %4421 = vmatpush1.bf16.msra.mxu0 %v3351
  %4422 = vmatprep.mubr.bf16.mxu0 %v3891
  %4423 = vmatmul.mubr.bf16.gmra.mrb[0].mxu0 %v3890
  %v4424 = vpop.f32.mrb[0].mxu0
  %v4425 = vadd.f32 0.0, %v4424
  %v4426 = vpop.f32.mrb[0].mxu0
  %v4427 = vadd.f32 0.0, %v4426
  %v4428 = vpop.f32.mrb[0].mxu0
  %v4429 = vpop.f32.mrb[0].mxu0
  %4430 = vdwg.mxu0
  %4431 = vmatprep.subr.bf16.mxu0 %v3360
  %4432 = vmatpush1.bf16.msra.mxu0 %v3359
  %4433 = vmatprep.subr.bf16.mxu0 %v3368
  %4434 = vmatpush1.bf16.msra.mxu0 %v3367
  %4435 = vmatprep.subr.bf16.mxu0 %v3376
  %4436 = vmatpush1.bf16.msra.mxu0 %v3375
  %4437 = vmatprep.subr.bf16.mxu0 %v3384
  %4438 = vmatpush1.bf16.msra.mxu0 %v3383
  %4439 = vmatprep.subr.bf16.mxu0 %v3392
  %4440 = vmatpush1.bf16.msra.mxu0 %v3391
  %4441 = vmatprep.subr.bf16.mxu0 %v3400
  %4442 = vmatpush1.bf16.msra.mxu0 %v3399
  %4443 = vmatprep.subr.bf16.mxu0 %v3408
  %4444 = vmatpush1.bf16.msra.mxu0 %v3407
  %4445 = vmatprep.subr.bf16.mxu0 %v3416
  %4446 = vmatpush1.bf16.msra.mxu0 %v3415
  %4447 = vmatprep.subr.bf16.mxu0 %v3424
  %4448 = vmatpush1.bf16.msra.mxu0 %v3423
  %4449 = vmatprep.subr.bf16.mxu0 %v3432
  %4450 = vmatpush1.bf16.msra.mxu0 %v3431
  %4451 = vmatprep.subr.bf16.mxu0 %v3440
  %4452 = vmatpush1.bf16.msra.mxu0 %v3439
  %4453 = vmatprep.subr.bf16.mxu0 %v3448
  %4454 = vmatpush1.bf16.msra.mxu0 %v3447
  %4455 = vmatprep.subr.bf16.mxu0 %v3456
  %4456 = vmatpush1.bf16.msra.mxu0 %v3455
  %4457 = vmatprep.subr.bf16.mxu0 %v3464
  %4458 = vmatpush1.bf16.msra.mxu0 %v3463
  %4459 = vmatprep.subr.bf16.mxu0 %v3472
  %4460 = vmatpush1.bf16.msra.mxu0 %v3471
  %4461 = vmatprep.subr.bf16.mxu0 %v3480
  %4462 = vmatpush1.bf16.msra.mxu0 %v3479
  %4463 = vmatprep.mubr.bf16.mxu0 %v3893
  %4464 = vmatmul.mubr.bf16.gmra.mrb[0].mxu0 %v3892
  %v4465 = vpop.f32.mrb[0].mxu0
  %v4466 = vadd.f32 %v4425, %v4465
  %v4467 = vpop.f32.mrb[0].mxu0
  %v4468 = vadd.f32 %v4427, %v4467
  %v4469 = vpop.f32.mrb[0].mxu0
  %v4470 = vpop.f32.mrb[0].mxu0
  %4471 = vdwg.mxu0
  %4472 = vmatprep.subr.bf16.mxu0 %v3488
  %4473 = vmatpush1.bf16.msra.mxu0 %v3487
  %4474 = vmatprep.subr.bf16.mxu0 %v3496
  %4475 = vmatpush1.bf16.msra.mxu0 %v3495
  %4476 = vmatprep.subr.bf16.mxu0 %v3504
  %4477 = vmatpush1.bf16.msra.mxu0 %v3503
  %4478 = vmatprep.subr.bf16.mxu0 %v3512
  %4479 = vmatpush1.bf16.msra.mxu0 %v3511
  %4480 = vmatprep.subr.bf16.mxu0 %v3520
  %4481 = vmatpush1.bf16.msra.mxu0 %v3519
  %4482 = vmatprep.subr.bf16.mxu0 %v3528
  %4483 = vmatpush1.bf16.msra.mxu0 %v3527
  %4484 = vmatprep.subr.bf16.mxu0 %v3536
  %4485 = vmatpush1.bf16.msra.mxu0 %v3535
  %4486 = vmatprep.subr.bf16.mxu0 %v3544
  %4487 = vmatpush1.bf16.msra.mxu0 %v3543
  %4488 = vmatprep.subr.bf16.mxu0 %v3552
  %4489 = vmatpush1.bf16.msra.mxu0 %v3551
  %4490 = vmatprep.subr.bf16.mxu0 %v3560
  %4491 = vmatpush1.bf16.msra.mxu0 %v3559
  %4492 = vmatprep.subr.bf16.mxu0 %v3568
  %4493 = vmatpush1.bf16.msra.mxu0 %v3567
  %4494 = vmatprep.subr.bf16.mxu0 %v3576
  %4495 = vmatpush1.bf16.msra.mxu0 %v3575
  %4496 = vmatprep.subr.bf16.mxu0 %v3584
  %4497 = vmatpush1.bf16.msra.mxu0 %v3583
  %4498 = vmatprep.subr.bf16.mxu0 %v3592
  %4499 = vmatpush1.bf16.msra.mxu0 %v3591
  %4500 = vmatprep.subr.bf16.mxu0 %v3600
  %4501 = vmatpush1.bf16.msra.mxu0 %v3599
  %4502 = vmatprep.subr.bf16.mxu0 %v3608
  %4503 = vmatpush1.bf16.msra.mxu0 %v3607
  %4504 = vmatprep.mubr.bf16.mxu0 %v3895
  %4505 = vmatmul.mubr.bf16.gmra.mrb[0].mxu0 %v3894
  %v4506 = vpop.f32.mrb[0].mxu0
  %v4507 = vadd.f32 %v4466, %v4506
  %v4508 = vpop.f32.mrb[0].mxu0
  %v4509 = vadd.f32 %v4468, %v4508
  %v4510 = vpop.f32.mrb[0].mxu0
  %v4511 = vpop.f32.mrb[0].mxu0
  %4512 = vdwg.mxu0
  %4513 = vmatprep.subr.bf16.mxu0 %v3616
  %4514 = vmatpush1.bf16.msra.mxu0 %v3615
  %4515 = vmatprep.subr.bf16.mxu0 %v3624
  %4516 = vmatpush1.bf16.msra.mxu0 %v3623
  %4517 = vmatprep.subr.bf16.mxu0 %v3632
  %4518 = vmatpush1.bf16.msra.mxu0 %v3631
  %4519 = vmatprep.subr.bf16.mxu0 %v3640
  %4520 = vmatpush1.bf16.msra.mxu0 %v3639
  %4521 = vmatprep.subr.bf16.mxu0 %v3648
  %4522 = vmatpush1.bf16.msra.mxu0 %v3647
  %4523 = vmatprep.subr.bf16.mxu0 %v3656
  %4524 = vmatpush1.bf16.msra.mxu0 %v3655
  %4525 = vmatprep.subr.bf16.mxu0 %v3664
  %4526 = vmatpush1.bf16.msra.mxu0 %v3663
  %4527 = vmatprep.subr.bf16.mxu0 %v3672
  %4528 = vmatpush1.bf16.msra.mxu0 %v3671
  %4529 = vmatprep.subr.bf16.mxu0 %v3680
  %4530 = vmatpush1.bf16.msra.mxu0 %v3679
  %4531 = vmatprep.subr.bf16.mxu0 %v3688
  %4532 = vmatpush1.bf16.msra.mxu0 %v3687
  %4533 = vmatprep.subr.bf16.mxu0 %v3696
  %4534 = vmatpush1.bf16.msra.mxu0 %v3695
  %4535 = vmatprep.subr.bf16.mxu0 %v3704
  %4536 = vmatpush1.bf16.msra.mxu0 %v3703
  %4537 = vmatprep.subr.bf16.mxu0 %v3712
  %4538 = vmatpush1.bf16.msra.mxu0 %v3711
  %4539 = vmatprep.subr.bf16.mxu0 %v3720
  %4540 = vmatpush1.bf16.msra.mxu0 %v3719
  %4541 = vmatprep.subr.bf16.mxu0 %v3728
  %4542 = vmatpush1.bf16.msra.mxu0 %v3727
  %4543 = vmatprep.subr.bf16.mxu0 %v3736
  %4544 = vmatpush1.bf16.msra.mxu0 %v3735
  %4545 = vmatprep.mubr.bf16.mxu0 %v3897
  %4546 = vmatmul.mubr.bf16.gmra.mrb[0].mxu0 %v3896
  %v4547 = vpop.f32.mrb[0].mxu0
  %v4548 = vadd.f32 %v4507, %v4547
  %v4549 = vpop.f32.mrb[0].mxu0
  %v4550 = vadd.f32 %v4509, %v4549
  %v4551 = vpop.f32.mrb[0].mxu0
  %v4552 = vpop.f32.mrb[0].mxu0
  %4553 = vdwg.mxu0
  %v4562 = vrot.slane %v4056, 4
  %v4563 = vrot.slane %v4058, 4
  %v4564 = vrot.slane %v4220, 4
  %v4565 = vrot.slane %v4222, 4
  %v4566 = vrot.slane %v4384, 4
  %v4567 = vrot.slane %v4386, 4
  %v4568 = vrot.slane %v4548, 4
  %v4569 = vrot.slane %v4550, 4
  %v4578 = vsel %vm3751, %v4056, 0.0
  %v4579 = vsel %vm3751, %v4058, 0.0
  %v4580 = vadd.f32 %v4578, %v4579
  %v4581 = vsel %vm3751, %v4220, 0.0
  %v4582 = vadd.f32 %v4580, %v4581
  %v4583 = vsel %vm3751, %v4222, 0.0
  %v4584 = vadd.f32 %v4582, %v4583
  %v4585 = vsel %vm3751, %v4384, 0.0
  %v4586 = vadd.f32 %v4584, %v4585
  %v4587 = vsel %vm3751, %v4386, 0.0
  %v4588 = vadd.f32 %v4586, %v4587
  %v4589 = vsel %vm3751, %v4548, 0.0
  %v4590 = vadd.f32 %v4588, %v4589
  %v4591 = vsel %vm3751, %v4550, 0.0
  %v4592 = vadd.f32 %v4590, %v4591
  %v4593 = vsel %vm3751, %v4562, 0.0
  %v4594 = vadd.f32 %v4592, %v4593
  %v4595 = vsel %vm3751, %v4563, 0.0
  %v4596 = vadd.f32 %v4594, %v4595
  %v4597 = vsel %vm3751, %v4564, 0.0
  %v4598 = vadd.f32 %v4596, %v4597
  %v4599 = vsel %vm3751, %v4565, 0.0
  %v4600 = vadd.f32 %v4598, %v4599
  %v4601 = vsel %vm3751, %v4566, 0.0
  %v4602 = vadd.f32 %v4600, %v4601
  %v4603 = vsel %vm3751, %v4567, 0.0
  %v4604 = vadd.f32 %v4602, %v4603
  %v4605 = vsel %vm3751, %v4568, 0.0
  %v4606 = vadd.f32 %v4604, %v4605
  %v4607 = vsel %vm3751, %v4569, 0.0
  %v4608 = vadd.f32 %v4606, %v4607
  %4609 = vadd.xlane.f32.xlu0 %v4608
  %v4610 = vpop.xlane.xlu0 %4609
  %v4611 = vmul.f32 %v4056, %v4056
  %v4612 = vmul.f32 %v4058, %v4058
  %v4613 = vmul.f32 %v4220, %v4220
  %v4614 = vmul.f32 %v4222, %v4222
  %v4615 = vmul.f32 %v4384, %v4384
  %v4616 = vmul.f32 %v4386, %v4386
  %v4617 = vmul.f32 %v4548, %v4548
  %v4618 = vmul.f32 %v4550, %v4550
  %v4619 = vmul.f32 %v4562, %v4562
  %v4620 = vmul.f32 %v4563, %v4563
  %v4621 = vmul.f32 %v4564, %v4564
  %v4622 = vmul.f32 %v4565, %v4565
  %v4623 = vmul.f32 %v4566, %v4566
  %v4624 = vmul.f32 %v4567, %v4567
  %v4625 = vmul.f32 %v4568, %v4568
  %v4626 = vmul.f32 %v4569, %v4569
  %v4627 = vsel %vm3751, %v4611, 0.0
  %v4628 = vsel %vm3751, %v4612, 0.0
  %v4629 = vadd.f32 %v4627, %v4628
  %v4630 = vsel %vm3751, %v4613, 0.0
  %v4631 = vadd.f32 %v4629, %v4630
  %v4632 = vsel %vm3751, %v4614, 0.0
  %v4633 = vadd.f32 %v4631, %v4632
  %v4634 = vsel %vm3751, %v4615, 0.0
  %v4635 = vadd.f32 %v4633, %v4634
  %v4636 = vsel %vm3751, %v4616, 0.0
  %v4637 = vadd.f32 %v4635, %v4636
  %v4638 = vsel %vm3751, %v4617, 0.0
  %v4639 = vadd.f32 %v4637, %v4638
  %v4640 = vsel %vm3751, %v4618, 0.0
  %v4641 = vadd.f32 %v4639, %v4640
  %v4642 = vsel %vm3751, %v4619, 0.0
  %v4643 = vadd.f32 %v4641, %v4642
  %v4644 = vsel %vm3751, %v4620, 0.0
  %v4645 = vadd.f32 %v4643, %v4644
  %v4646 = vsel %vm3751, %v4621, 0.0
  %v4647 = vadd.f32 %v4645, %v4646
  %v4648 = vsel %vm3751, %v4622, 0.0
  %v4649 = vadd.f32 %v4647, %v4648
  %v4650 = vsel %vm3751, %v4623, 0.0
  %v4651 = vadd.f32 %v4649, %v4650
  %v4652 = vsel %vm3751, %v4624, 0.0
  %v4653 = vadd.f32 %v4651, %v4652
  %v4654 = vsel %vm3751, %v4625, 0.0
  %v4655 = vadd.f32 %v4653, %v4654
  %v4656 = vsel %vm3751, %v4626, 0.0
  %v4657 = vadd.f32 %v4655, %v4656
  %4658 = vadd.xlane.f32.xlu0 %v4657
  %v4659 = vpop.xlane.xlu0 %4658
  %v4660 = vmul.f32 %v4610, 0.00055555557
  %v4661 = vmul.f32 %v4659, 0.00055555557
  %v4662 = vmul.f32 %v4660, %v4660
  %v4663 = vsub.f32 %v4661, %v4662
  %v4664 = vmax.f32 %v4663, 0.0
  %v4665 = vsub.f32 %v4056, %v4660
  %v4666 = vsub.f32 %v4058, %v4660
  %v4667 = vsub.f32 %v4220, %v4660
  %v4668 = vsub.f32 %v4222, %v4660
  %v4669 = vsub.f32 %v4384, %v4660
  %v4670 = vsub.f32 %v4386, %v4660
  %v4671 = vsub.f32 %v4548, %v4660
  %v4672 = vsub.f32 %v4562, %v4660
  %v4673 = vsub.f32 %v4563, %v4660
  %v4674 = vsub.f32 %v4564, %v4660
  %v4675 = vsub.f32 %v4565, %v4660
  %v4676 = vsub.f32 %v4566, %v4660
  %v4677 = vsub.f32 %v4567, %v4660
  %v4678 = vsub.f32 %v4568, %v4660
  %v4679 = vadd.f32 %v4664, 1e-05
  %v4680 = vrsqrt.pop %v4679
  %v4681 = vmul.f32 %v4665, %v4680
  %v4682 = vmul.f32 %v4666, %v4680
  %v4683 = vmul.f32 %v4667, %v4680
  %v4684 = vmul.f32 %v4668, %v4680
  %v4685 = vmul.f32 %v4669, %v4680
  %v4686 = vmul.f32 %v4670, %v4680
  %v4687 = vmul.f32 %v4671, %v4680
  %v4688 = vmul.f32 %v4672, %v4680
  %v4689 = vmul.f32 %v4673, %v4680
  %v4690 = vmul.f32 %v4674, %v4680
  %v4691 = vmul.f32 %v4675, %v4680
  %v4692 = vmul.f32 %v4676, %v4680
  %v4693 = vmul.f32 %v4677, %v4680
  %v4694 = vmul.f32 %v4678, %v4680
  %v4695 = vld [vmem:[%s12] sm:$0xf]
  %4697 = vset.pattern.permute.xlu0 0
  %4698 = vperm.xlu0 %4697, %v4695
  %v4699 = vpop.permute.xlu0 %4698
  %v4701 = vmul.f32 %v4681, %v4699
  %v4702 = vmul.f32 %v4682, %v4699
  %v4703 = vmul.f32 %v4683, %v4699
  %v4704 = vmul.f32 %v4684, %v4699
  %v4705 = vmul.f32 %v4685, %v4699
  %v4706 = vmul.f32 %v4686, %v4699
  %v4707 = vmul.f32 %v4687, %v4699
  %v4708 = vmul.f32 %v4688, %v4699
  %v4709 = vmul.f32 %v4689, %v4699
  %v4710 = vmul.f32 %v4690, %v4699
  %v4711 = vmul.f32 %v4691, %v4699
  %v4712 = vmul.f32 %v4692, %v4699
  %v4713 = vmul.f32 %v4693, %v4699
  %v4714 = vmul.f32 %v4694, %v4699
  %v4715 = vld [vmem:[%s13] sm:$0xf]
  %4717 = vset.pattern.permute.xlu0 0
  %4718 = vperm.xlu0 %4717, %v4715
  %v4719 = vpop.permute.xlu0 %4718
  %v4721 = vadd.f32 %v4701, %v4719
  %v4722 = vadd.f32 %v4702, %v4719
  %v4723 = vadd.f32 %v4703, %v4719
  %v4724 = vadd.f32 %v4704, %v4719
  %v4725 = vadd.f32 %v4705, %v4719
  %v4726 = vadd.f32 %v4706, %v4719
  %v4727 = vadd.f32 %v4707, %v4719
  %v4728 = vadd.f32 %v4708, %v4719
  %v4729 = vadd.f32 %v4709, %v4719
  %v4730 = vadd.f32 %v4710, %v4719
  %v4731 = vadd.f32 %v4711, %v4719
  %v4732 = vadd.f32 %v4712, %v4719
  %v4733 = vadd.f32 %v4713, %v4719
  %v4734 = vadd.f32 %v4714, %v4719
  %v4735 = vmax.f32 %v4721, 0.0
  %v4736 = vmax.f32 %v4722, 0.0
  %v4737 = vmax.f32 %v4723, 0.0
  %v4738 = vmax.f32 %v4724, 0.0
  %v4739 = vmax.f32 %v4725, 0.0
  %v4740 = vmax.f32 %v4726, 0.0
  %v4741 = vmax.f32 %v4727, 0.0
  %v4742 = vmax.f32 %v4728, 0.0
  %v4743 = vmax.f32 %v4729, 0.0
  %v4744 = vmax.f32 %v4730, 0.0
  %v4745 = vmax.f32 %v4731, 0.0
  %v4746 = vmax.f32 %v4732, 0.0
  %v4747 = vmax.f32 %v4733, 0.0
  %v4748 = vmax.f32 %v4734, 0.0
  %4756 = vrot.lane.b32.xlu0 %v4742, 16
  %v4757 = vpop.permute.xlu0 %4756
  %4758 = vrot.lane.b32.xlu0 %v4743, 16
  %v4759 = vpop.permute.xlu0 %4758
  %4760 = vrot.lane.b32.xlu0 %v4744, 16
  %v4761 = vpop.permute.xlu0 %4760
  %4762 = vrot.lane.b32.xlu0 %v4745, 16
  %v4763 = vpop.permute.xlu0 %4762
  %4764 = vrot.lane.b32.xlu0 %v4746, 16
  %v4765 = vpop.permute.xlu0 %4764
  %4766 = vrot.lane.b32.xlu0 %v4747, 16
  %v4767 = vpop.permute.xlu0 %4766
  %4768 = vrot.lane.b32.xlu0 %v4748, 16
  %v4769 = vpop.permute.xlu0 %4768
  %v4770 = vsel %vm460, %v4757, %v4759
  %v4771 = vsel %vm460, %v4759, %v4761
  %v4772 = vsel %vm460, %v4761, %v4763
  %v4773 = vsel %vm460, %v4763, %v4765
  %v4774 = vsel %vm460, %v4765, %v4767
  %v4775 = vsel %vm460, %v4767, %v4769
  %v4783 = vsel %vm460, %v4741, %v4757
  %v4784 = vld [vmem:[%s5] sm:$0x1]
  %v4785 = vpack.c.bf16 %v4735, %v4735
  %v4786 = vpack.c.bf16 %v4736, %v4736
  %v4787 = vpack.c.bf16 %v4737, %v4737
  %v4788 = vpack.c.bf16 %v4738, %v4738
  %v4789 = vpack.c.bf16 %v4739, %v4739
  %v4790 = vpack.c.bf16 %v4740, %v4740
  %v4791 = vpack.c.bf16 %v4783, %v4783
  %v4792 = vpack.c.bf16 %v4770, %v4770
  %v4793 = vpack.c.bf16 %v4771, %v4771
  %v4794 = vpack.c.bf16 %v4772, %v4772
  %v4795 = vpack.c.bf16 %v4773, %v4773
  %v4796 = vpack.c.bf16 %v4774, %v4774
  %v4797 = vpack.c.bf16 %v4775, %v4775
  %v4799 = vsel %vm1101, %v4784, 0
  %vm4801 = vcmask 1041408
  %v4803 = vsel %vm4801, %v4785, 0
  %v4806 = vsel %vm4801, %v4786, 0
  %v4809 = vsel %vm4801, %v4787, 0
  %v4812 = vsel %vm4801, %v4788, 0
  %v4815 = vsel %vm4801, %v4789, 0
  %v4818 = vsel %vm4801, %v4790, 0
  %v4821 = vsel %vm4801, %v4791, 0
  %v4824 = vsel %vm4801, %v4792, 0
  %v4827 = vsel %vm4801, %v4793, 0
  %v4830 = vsel %vm4801, %v4794, 0
  %v4833 = vsel %vm4801, %v4795, 0
  %v4836 = vsel %vm4801, %v4796, 0
  %v4839 = vsel %vm4801, %v4797, 0
  %4841 = vmatprep.subr.bf16.mxu0 %v4806
  %4842 = vmatpush1.bf16.msra.mxu0 %v4803
  %4843 = vmatprep.subr.bf16.mxu0 0
  %4844 = vmatpush1.bf16.msra.mxu0 0
  %4845 = vmatprep.subr.bf16.mxu0 0
  %4846 = vmatpush1.bf16.msra.mxu0 0
  %4847 = vmatprep.subr.bf16.mxu0 0
  %4848 = vmatpush1.bf16.msra.mxu0 0
  %4849 = vmatprep.subr.bf16.mxu0 0
  %4850 = vmatpush1.bf16.msra.mxu0 0
  %4851 = vmatprep.subr.bf16.mxu0 0
  %4852 = vmatpush1.bf16.msra.mxu0 0
  %4853 = vmatprep.subr.bf16.mxu0 0
  %4854 = vmatpush1.bf16.msra.mxu0 0
  %4855 = vmatprep.subr.bf16.mxu0 0
  %4856 = vmatpush1.bf16.msra.mxu0 0
  %4857 = vmatprep.subr.bf16.mxu0 0
  %4858 = vmatpush1.bf16.msra.mxu0 0
  %4859 = vmatprep.subr.bf16.mxu0 0
  %4860 = vmatpush1.bf16.msra.mxu0 0
  %4861 = vmatprep.subr.bf16.mxu0 0
  %4862 = vmatpush1.bf16.msra.mxu0 0
  %4863 = vmatprep.subr.bf16.mxu0 0
  %4864 = vmatpush1.bf16.msra.mxu0 0
  %4865 = vmatprep.subr.bf16.mxu0 0
  %4866 = vmatpush1.bf16.msra.mxu0 0
  %4867 = vmatprep.subr.bf16.mxu0 0
  %4868 = vmatpush1.bf16.msra.mxu0 0
  %4869 = vmatprep.subr.bf16.mxu0 0
  %4870 = vmatpush1.bf16.msra.mxu0 0
  %4871 = vmatprep.subr.bf16.mxu0 0
  %4872 = vmatpush1.bf16.msra.mxu0 0
  %4873 = vmatprep.mubr.bf16.mxu0 0
  %4874 = vmatmul.mubr.bf16.gmra.mrb[0].mxu0 %v4799
  %v4875 = vpop.f32.mrb[0].mxu0
  %v4876 = vadd.f32 0.0, %v4875
  %v4877 = vpop.f32.mrb[0].mxu0
  %v4878 = vadd.f32 0.0, %v4877
  %v4879 = vpop.f32.mrb[0].mxu0
  %v4880 = vpop.f32.mrb[0].mxu0
  %4881 = vdwg.mxu0
  %4882 = vmatprep.subr.bf16.mxu0 %v4812
  %4883 = vmatpush1.bf16.msra.mxu0 %v4809
  %4884 = vmatprep.subr.bf16.mxu0 0
  %4885 = vmatpush1.bf16.msra.mxu0 0
  %4886 = vmatprep.subr.bf16.mxu0 0
  %4887 = vmatpush1.bf16.msra.mxu0 0
  %4888 = vmatprep.subr.bf16.mxu0 0
  %4889 = vmatpush1.bf16.msra.mxu0 0
  %4890 = vmatprep.subr.bf16.mxu0 0
  %4891 = vmatpush1.bf16.msra.mxu0 0
  %4892 = vmatprep.subr.bf16.mxu0 0
  %4893 = vmatpush1.bf16.msra.mxu0 0
  %4894 = vmatprep.subr.bf16.mxu0 0
  %4895 = vmatpush1.bf16.msra.mxu0 0
  %4896 = vmatprep.subr.bf16.mxu0 0
  %4897 = vmatpush1.bf16.msra.mxu0 0
  %4898 = vmatprep.subr.bf16.mxu0 0
  %4899 = vmatpush1.bf16.msra.mxu0 0
  %4900 = vmatprep.subr.bf16.mxu0 0
  %4901 = vmatpush1.bf16.msra.mxu0 0
  %4902 = vmatprep.subr.bf16.mxu0 0
  %4903 = vmatpush1.bf16.msra.mxu0 0
  %4904 = vmatprep.subr.bf16.mxu0 0
  %4905 = vmatpush1.bf16.msra.mxu0 0
  %4906 = vmatprep.subr.bf16.mxu0 0
  %4907 = vmatpush1.bf16.msra.mxu0 0
  %4908 = vmatprep.subr.bf16.mxu0 0
  %4909 = vmatpush1.bf16.msra.mxu0 0
  %4910 = vmatprep.subr.bf16.mxu0 0
  %4911 = vmatpush1.bf16.msra.mxu0 0
  %4912 = vmatprep.subr.bf16.mxu0 0
  %4913 = vmatpush1.bf16.msra.mxu0 0
  %4914 = vmatprep.mubr.bf16.mxu0 0
  %4915 = vmatmul.mubr.bf16.gmra.mrb[0].mxu0 %v4799
  %v4916 = vpop.f32.mrb[0].mxu0
  %v4917 = vadd.f32 0.0, %v4916
  %v4918 = vpop.f32.mrb[0].mxu0
  %v4919 = vadd.f32 0.0, %v4918
  %v4920 = vpop.f32.mrb[0].mxu0
  %v4921 = vpop.f32.mrb[0].mxu0
  %4922 = vdwg.mxu0
  %4923 = vmatprep.subr.bf16.mxu0 %v4818
  %4924 = vmatpush1.bf16.msra.mxu0 %v4815
  %4925 = vmatprep.subr.bf16.mxu0 0
  %4926 = vmatpush1.bf16.msra.mxu0 0
  %4927 = vmatprep.subr.bf16.mxu0 0
  %4928 = vmatpush1.bf16.msra.mxu0 0
  %4929 = vmatprep.subr.bf16.mxu0 0
  %4930 = vmatpush1.bf16.msra.mxu0 0
  %4931 = vmatprep.subr.bf16.mxu0 0
  %4932 = vmatpush1.bf16.msra.mxu0 0
  %4933 = vmatprep.subr.bf16.mxu0 0
  %4934 = vmatpush1.bf16.msra.mxu0 0
  %4935 = vmatprep.subr.bf16.mxu0 0
  %4936 = vmatpush1.bf16.msra.mxu0 0
  %4937 = vmatprep.subr.bf16.mxu0 0
  %4938 = vmatpush1.bf16.msra.mxu0 0
  %4939 = vmatprep.subr.bf16.mxu0 0
  %4940 = vmatpush1.bf16.msra.mxu0 0
  %4941 = vmatprep.subr.bf16.mxu0 0
  %4942 = vmatpush1.bf16.msra.mxu0 0
  %4943 = vmatprep.subr.bf16.mxu0 0
  %4944 = vmatpush1.bf16.msra.mxu0 0
  %4945 = vmatprep.subr.bf16.mxu0 0
  %4946 = vmatpush1.bf16.msra.mxu0 0
  %4947 = vmatprep.subr.bf16.mxu0 0
  %4948 = vmatpush1.bf16.msra.mxu0 0
  %4949 = vmatprep.subr.bf16.mxu0 0
  %4950 = vmatpush1.bf16.msra.mxu0 0
  %4951 = vmatprep.subr.bf16.mxu0 0
  %4952 = vmatpush1.bf16.msra.mxu0 0
  %4953 = vmatprep.subr.bf16.mxu0 0
  %4954 = vmatpush1.bf16.msra.mxu0 0
  %4955 = vmatprep.mubr.bf16.mxu0 0
  %4956 = vmatmul.mubr.bf16.gmra.mrb[0].mxu0 %v4799
  %v4957 = vpop.f32.mrb[0].mxu0
  %v4958 = vadd.f32 0.0, %v4957
  %v4959 = vpop.f32.mrb[0].mxu0
  %v4960 = vadd.f32 0.0, %v4959
  %v4961 = vpop.f32.mrb[0].mxu0
  %v4962 = vpop.f32.mrb[0].mxu0
  %4963 = vdwg.mxu0
  %4964 = vmatprep.subr.bf16.mxu0 %v4824
  %4965 = vmatpush1.bf16.msra.mxu0 %v4821
  %4966 = vmatprep.subr.bf16.mxu0 0
  %4967 = vmatpush1.bf16.msra.mxu0 0
  %4968 = vmatprep.subr.bf16.mxu0 0
  %4969 = vmatpush1.bf16.msra.mxu0 0
  %4970 = vmatprep.subr.bf16.mxu0 0
  %4971 = vmatpush1.bf16.msra.mxu0 0
  %4972 = vmatprep.subr.bf16.mxu0 0
  %4973 = vmatpush1.bf16.msra.mxu0 0
  %4974 = vmatprep.subr.bf16.mxu0 0
  %4975 = vmatpush1.bf16.msra.mxu0 0
  %4976 = vmatprep.subr.bf16.mxu0 0
  %4977 = vmatpush1.bf16.msra.mxu0 0
  %4978 = vmatprep.subr.bf16.mxu0 0
  %4979 = vmatpush1.bf16.msra.mxu0 0
  %4980 = vmatprep.subr.bf16.mxu0 0
  %4981 = vmatpush1.bf16.msra.mxu0 0
  %4982 = vmatprep.subr.bf16.mxu0 0
  %4983 = vmatpush1.bf16.msra.mxu0 0
  %4984 = vmatprep.subr.bf16.mxu0 0
  %4985 = vmatpush1.bf16.msra.mxu0 0
  %4986 = vmatprep.subr.bf16.mxu0 0
  %4987 = vmatpush1.bf16.msra.mxu0 0
  %4988 = vmatprep.subr.bf16.mxu0 0
  %4989 = vmatpush1.bf16.msra.mxu0 0
  %4990 = vmatprep.subr.bf16.mxu0 0
  %4991 = vmatpush1.bf16.msra.mxu0 0
  %4992 = vmatprep.subr.bf16.mxu0 0
  %4993 = vmatpush1.bf16.msra.mxu0 0
  %4994 = vmatprep.subr.bf16.mxu0 0
  %4995 = vmatpush1.bf16.msra.mxu0 0
  %4996 = vmatprep.mubr.bf16.mxu0 0
  %4997 = vmatmul.mubr.bf16.gmra.mrb[0].mxu0 %v4799
  %v4998 = vpop.f32.mrb[0].mxu0
  %v4999 = vadd.f32 0.0, %v4998
  %v5000 = vpop.f32.mrb[0].mxu0
  %v5001 = vadd.f32 0.0, %v5000
  %v5002 = vpop.f32.mrb[0].mxu0
  %v5003 = vpop.f32.mrb[0].mxu0
  %5004 = vdwg.mxu0
  %5005 = vmatprep.subr.bf16.mxu0 %v4830
  %5006 = vmatpush1.bf16.msra.mxu0 %v4827
  %5007 = vmatprep.subr.bf16.mxu0 0
  %5008 = vmatpush1.bf16.msra.mxu0 0
  %5009 = vmatprep.subr.bf16.mxu0 0
  %5010 = vmatpush1.bf16.msra.mxu0 0
  %5011 = vmatprep.subr.bf16.mxu0 0
  %5012 = vmatpush1.bf16.msra.mxu0 0
  %5013 = vmatprep.subr.bf16.mxu0 0
  %5014 = vmatpush1.bf16.msra.mxu0 0
  %5015 = vmatprep.subr.bf16.mxu0 0
  %5016 = vmatpush1.bf16.msra.mxu0 0
  %5017 = vmatprep.subr.bf16.mxu0 0
  %5018 = vmatpush1.bf16.msra.mxu0 0
  %5019 = vmatprep.subr.bf16.mxu0 0
  %5020 = vmatpush1.bf16.msra.mxu0 0
  %5021 = vmatprep.subr.bf16.mxu0 0
  %5022 = vmatpush1.bf16.msra.mxu0 0
  %5023 = vmatprep.subr.bf16.mxu0 0
  %5024 = vmatpush1.bf16.msra.mxu0 0
  %5025 = vmatprep.subr.bf16.mxu0 0
  %5026 = vmatpush1.bf16.msra.mxu0 0
  %5027 = vmatprep.subr.bf16.mxu0 0
  %5028 = vmatpush1.bf16.msra.mxu0 0
  %5029 = vmatprep.subr.bf16.mxu0 0
  %5030 = vmatpush1.bf16.msra.mxu0 0
  %5031 = vmatprep.subr.bf16.mxu0 0
  %5032 = vmatpush1.bf16.msra.mxu0 0
  %5033 = vmatprep.subr.bf16.mxu0 0
  %5034 = vmatpush1.bf16.msra.mxu0 0
  %5035 = vmatprep.subr.bf16.mxu0 0
  %5036 = vmatpush1.bf16.msra.mxu0 0
  %5037 = vmatprep.mubr.bf16.mxu0 0
  %5038 = vmatmul.mubr.bf16.gmra.mrb[0].mxu0 %v4799
  %v5039 = vpop.f32.mrb[0].mxu0
  %v5040 = vadd.f32 0.0, %v5039
  %v5041 = vpop.f32.mrb[0].mxu0
  %v5042 = vadd.f32 0.0, %v5041
  %v5043 = vpop.f32.mrb[0].mxu0
  %v5044 = vpop.f32.mrb[0].mxu0
  %5045 = vdwg.mxu0
  %5046 = vmatprep.subr.bf16.mxu0 %v4836
  %5047 = vmatpush1.bf16.msra.mxu0 %v4833
  %5048 = vmatprep.subr.bf16.mxu0 0
  %5049 = vmatpush1.bf16.msra.mxu0 0
  %5050 = vmatprep.subr.bf16.mxu0 0
  %5051 = vmatpush1.bf16.msra.mxu0 0
  %5052 = vmatprep.subr.bf16.mxu0 0
  %5053 = vmatpush1.bf16.msra.mxu0 0
  %5054 = vmatprep.subr.bf16.mxu0 0
  %5055 = vmatpush1.bf16.msra.mxu0 0
  %5056 = vmatprep.subr.bf16.mxu0 0
  %5057 = vmatpush1.bf16.msra.mxu0 0
  %5058 = vmatprep.subr.bf16.mxu0 0
  %5059 = vmatpush1.bf16.msra.mxu0 0
  %5060 = vmatprep.subr.bf16.mxu0 0
  %5061 = vmatpush1.bf16.msra.mxu0 0
  %5062 = vmatprep.subr.bf16.mxu0 0
  %5063 = vmatpush1.bf16.msra.mxu0 0
  %5064 = vmatprep.subr.bf16.mxu0 0
  %5065 = vmatpush1.bf16.msra.mxu0 0
  %5066 = vmatprep.subr.bf16.mxu0 0
  %5067 = vmatpush1.bf16.msra.mxu0 0
  %5068 = vmatprep.subr.bf16.mxu0 0
  %5069 = vmatpush1.bf16.msra.mxu0 0
  %5070 = vmatprep.subr.bf16.mxu0 0
  %5071 = vmatpush1.bf16.msra.mxu0 0
  %5072 = vmatprep.subr.bf16.mxu0 0
  %5073 = vmatpush1.bf16.msra.mxu0 0
  %5074 = vmatprep.subr.bf16.mxu0 0
  %5075 = vmatpush1.bf16.msra.mxu0 0
  %5076 = vmatprep.subr.bf16.mxu0 0
  %5077 = vmatpush1.bf16.msra.mxu0 0
  %5078 = vmatprep.mubr.bf16.mxu0 0
  %5079 = vmatmul.mubr.bf16.gmra.mrb[0].mxu0 %v4799
  %v5080 = vpop.f32.mrb[0].mxu0
  %v5081 = vadd.f32 0.0, %v5080
  %v5082 = vpop.f32.mrb[0].mxu0
  %v5083 = vadd.f32 0.0, %v5082
  %v5084 = vpop.f32.mrb[0].mxu0
  %v5085 = vpop.f32.mrb[0].mxu0
  %5086 = vdwg.mxu0
  %5087 = vmatprep.subr.bf16.mxu0 0
  %5088 = vmatpush1.bf16.msra.mxu0 %v4839
  %5089 = vmatprep.subr.bf16.mxu0 0
  %5090 = vmatpush1.bf16.msra.mxu0 0
  %5091 = vmatprep.subr.bf16.mxu0 0
  %5092 = vmatpush1.bf16.msra.mxu0 0
  %5093 = vmatprep.subr.bf16.mxu0 0
  %5094 = vmatpush1.bf16.msra.mxu0 0
  %5095 = vmatprep.subr.bf16.mxu0 0
  %5096 = vmatpush1.bf16.msra.mxu0 0
  %5097 = vmatprep.subr.bf16.mxu0 0
  %5098 = vmatpush1.bf16.msra.mxu0 0
  %5099 = vmatprep.subr.bf16.mxu0 0
  %5100 = vmatpush1.bf16.msra.mxu0 0
  %5101 = vmatprep.subr.bf16.mxu0 0
  %5102 = vmatpush1.bf16.msra.mxu0 0
  %5103 = vmatprep.subr.bf16.mxu0 0
  %5104 = vmatpush1.bf16.msra.mxu0 0
  %5105 = vmatprep.subr.bf16.mxu0 0
  %5106 = vmatpush1.bf16.msra.mxu0 0
  %5107 = vmatprep.subr.bf16.mxu0 0
  %5108 = vmatpush1.bf16.msra.mxu0 0
  %5109 = vmatprep.subr.bf16.mxu0 0
  %5110 = vmatpush1.bf16.msra.mxu0 0
  %5111 = vmatprep.subr.bf16.mxu0 0
  %5112 = vmatpush1.bf16.msra.mxu0 0
  %5113 = vmatprep.subr.bf16.mxu0 0
  %5114 = vmatpush1.bf16.msra.mxu0 0
  %5115 = vmatprep.subr.bf16.mxu0 0
  %5116 = vmatpush1.bf16.msra.mxu0 0
  %5117 = vmatprep.subr.bf16.mxu0 0
  %5118 = vmatpush1.bf16.msra.mxu0 0
  %5119 = vmatprep.mubr.bf16.mxu0 0
  %5120 = vmatmul.mubr.bf16.gmra.mrb[0].mxu0 %v4799
  %v5121 = vpop.f32.mrb[0].mxu0
  %v5122 = vadd.f32 0.0, %v5121
  %v5123 = vpop.f32.mrb[0].mxu0
  %v5124 = vpop.f32.mrb[0].mxu0
  %v5125 = vpop.f32.mrb[0].mxu0
  %5126 = vdwg.mxu0
  %v5127 = vtanh.pop %v4876
  %v5128 = vtanh.pop %v4878
  %v5129 = vtanh.pop %v4917
  %v5130 = vtanh.pop %v4919
  %v5131 = vtanh.pop %v4958
  %v5132 = vtanh.pop %v4960
  %v5133 = vtanh.pop %v4999
  %v5134 = vtanh.pop %v5001
  %v5135 = vtanh.pop %v5040
  %v5136 = vtanh.pop %v5042
  %v5137 = vtanh.pop %v5081
  %v5138 = vtanh.pop %v5083
  %v5139 = vtanh.pop %v5122
  %v5153 = vcombine.low %v5127, %v5128
  %v5154 = vcombine.low %v5129, %v5130
  %v5155 = vcombine.low %v5131, %v5132
  %v5156 = vcombine.low %v5133, %v5134
  %v5158 = vunpack.c.l.s4 1966171168
  %v5159 = vunpack.c.0.s8 %v5158
  %v5160 = vlaneseq
  %v5161 = vshrl.u32 %v5160, 7
  %v5162 = vsub.s32 %v5159, %v5161
  %v5163 = vrot.slane %v5153, %v5162
  %v5165 = vunpack.c.l.s4 1966171168
  %v5166 = vunpack.c.0.s8 %v5165
  %v5167 = vlaneseq
  %v5168 = vshrl.u32 %v5167, 7
  %v5169 = vsub.s32 %v5166, %v5168
  %v5170 = vrot.slane %v5154, %v5169
  %v5172 = vunpack.c.l.s4 1966171168
  %v5173 = vunpack.c.0.s8 %v5172
  %v5174 = vlaneseq
  %v5175 = vshrl.u32 %v5174, 7
  %v5176 = vsub.s32 %v5173, %v5175
  %v5177 = vrot.slane %v5155, %v5176
  %v5179 = vunpack.c.l.s4 1966171168
  %v5180 = vunpack.c.0.s8 %v5179
  %v5181 = vlaneseq
  %v5182 = vshrl.u32 %v5181, 7
  %v5183 = vsub.s32 %v5180, %v5182
  %v5184 = vrot.slane %v5156, %v5183
  %v5185 = vcombine.low %v5163, %v5170
  %v5186 = vcombine.low %v5177, %v5184
  %v5188 = vunpack.c.l.s4 1966171168
  %v5189 = vunpack.c.0.s8 %v5188
  %v5190 = vlaneseq
  %v5191 = vshrl.u32 %v5190, 7
  %v5192 = vsub.s32 %v5189, %v5191
  %v5193 = vrot.slane %v5185, %v5192
  %v5195 = vunpack.c.l.s4 1966171168
  %v5196 = vunpack.c.0.s8 %v5195
  %v5197 = vlaneseq
  %v5198 = vshrl.u32 %v5197, 7
  %v5199 = vsub.s32 %v5196, %v5198
  %v5200 = vrot.slane %v5186, %v5199
  %v5201 = vcombine.low %v5193, %v5200
  %v5202 = vcombine.low %v5135, %v5136
  %v5203 = vcombine.low %v5137, %v5138
  %v5205 = vunpack.c.l.s4 1966171168
  %v5206 = vunpack.c.0.s8 %v5205
  %v5207 = vlaneseq
  %v5208 = vshrl.u32 %v5207, 7
  %v5209 = vsub.s32 %v5206, %v5208
  %v5210 = vrot.slane %v5202, %v5209
  %v5212 = vunpack.c.l.s4 1966171168
  %v5213 = vunpack.c.0.s8 %v5212
  %v5214 = vlaneseq
  %v5215 = vshrl.u32 %v5214, 7
  %v5216 = vsub.s32 %v5213, %v5215
  %v5217 = vrot.slane %v5203, %v5216
  %v5219 = vunpack.c.l.s4 1966171168
  %v5220 = vunpack.c.0.s8 %v5219
  %v5221 = vlaneseq
  %v5222 = vshrl.u32 %v5221, 7
  %v5223 = vsub.s32 %v5220, %v5222
  %v5224 = vrot.slane %v5139, %v5223
  %v5225 = vcombine.low %v5210, %v5217
  %v5227 = vunpack.c.l.s4 1966171168
  %v5228 = vunpack.c.0.s8 %v5227
  %v5229 = vlaneseq
  %v5230 = vshrl.u32 %v5229, 7
  %v5231 = vsub.s32 %v5228, %v5230
  %v5232 = vrot.slane %v5225, %v5231
  %v5234 = vunpack.c.l.s4 1966171168
  %v5235 = vunpack.c.0.s8 %v5234
  %v5236 = vlaneseq
  %v5237 = vshrl.u32 %v5236, 7
  %v5238 = vsub.s32 %v5235, %v5237
  %v5239 = vrot.slane %v5224, %v5238
  %v5240 = vcombine.low %v5232, %v5239
  %5243 = vst [vmem:[%s17] sm:$0xff] %v5201
  %v5244 = vlaneseq
  %vm5245 = vcmp.ge.s32.totalorder %v5244, 0
  %vm5246 = vcmp.lt.s32.totalorder %v5244, 544
  %vm5247 = vmand %vm5245, %vm5246
  %5248 = vst.msk [vmem:[%s17 + $0x8] sm:$0x1f] %vm5247, %v5240
  // Predicated region
  $region100: #{generator_forward.1} parent=0 // pred_check
    _
  $region101: #{generator_forward.1} parent=0 // pred_check_branch
    %5250 = sbr.rel (0) target = $region103
  $region102: #{generator_forward.1} parent=0 // pred_region
    _
  $region103: #{generator_forward.1} parent=0 // pred_fallthru
    _
  // Predicated region
  $region104: #{generator_forward.1} parent=0 // pred_check
    _
  $region105: #{generator_forward.1} parent=0 // pred_check_branch
    %5252 = sbr.rel (0) target = $region107
  $region106: #{generator_forward.1} parent=0 // pred_region
    _
  $region107: #{generator_forward.1} parent=0 // pred_fallthru
    _
  %5253 = vsyncmov [#allocation4]
  %s5254 = vpop.sfrf %5253
  %p5255 = scmp.eq.s32.totalorder %s5254, 0
  %p5256 = pneg %p5255
  %5258 = shalt.err (%p5256)
  %s5259 = scalar_lea.sflag [#allocation4], 1
  %5260 = vsyncmov %s5259
  %s5261 = vpop.sfrf %5260
  %p5262 = scmp.eq.s32.totalorder %s5261, 0
  %p5263 = pneg %p5262
  %5265 = shalt.err (%p5263)

</llo_original>
